<compile_context>
chip_gen: v7x
topology: tpu7x:2x2x1
jax: 0.10.0
libtpu: 0.0.40
codegen_flags: <defaults>
</compile_context>

<pallas_src>
import functools
import math

import jax
import jax.numpy as jnp
import numpy as np
from jax import lax
from jax.experimental import pallas as pl
from jax.experimental.pallas import tpu as pltpu


def _round_up(x, m):
    return (x + m - 1) // m * m


# ----------------------------------------------------------------------------
# Kernel: whole building block, single invocation, everything in VMEM.
# ----------------------------------------------------------------------------
def _building_block_kernel(
    x_ref,                # (R, Ep)       R = B*S, f32, padded lanes zero
    mask_ref,             # (H*R, H*R)    f32 additive block-diag mask (0 / -1e30)
    a1_ref, g1_ref,       # Norm1 alpha / bias   (1, Ep)  f32
    wqkv_ref, bqkv_ref,   # fused QKV            (Ep, 3Ep), (1, 3Ep)
    wo_ref, bo_ref,       # attn out projection  (Ep, Ep), (1, Ep)
    a2_ref, g2_ref,       # Norm2 alpha / bias   (1, Ep)
    w1_ref, c1_ref,       # FFN linear_1         (Ep, Fp), (1, Fp)
    w2_ref, c2_ref,       # FFN linear_2         (Fp, Ep), (1, Ep)
    out_ref,              # (R, Ep) f32
    *,
    num_heads: int,
    d_model: int,         # true embed dim (100)
    d_k: int,             # true head dim (25)
    d_k_pad: int,         # padded head dim (32)
    eps: float,
    approx_recip: bool,   # EUP approx reciprocal (default path) vs exact divide
):
    f32 = jnp.float32
    x = x_ref[...].astype(f32)                       # (R, Ep)
    R, Ep = x.shape
    cd = wqkv_ref.dtype                              # MXU operand dtype (bf16 default)

    def recip(v):
        if approx_recip:
            return pl.reciprocal(v, approx=True)     # single EUP op, free slot
        return 1.0 / v

    # ---- layer norm over the TRUE d_model features (padded lanes are zero) ---
    col = lax.broadcasted_iota(jnp.int32, (1, Ep), 1)
    feat_mask = (col < d_model).astype(f32)          # (1, Ep)
    inv_n = 1.0 / d_model
    inv_nm1 = 1.0 / (d_model - 1)

    def layer_norm(v, alpha, bias):
        # matches torch Norm: alpha*(v-mean)/(std+eps)+bias, unbiased std (ddof=1)
        mean = jnp.sum(v, axis=-1, keepdims=True) * inv_n        # padded lanes zero
        diff = (v - mean) * feat_mask
        var = jnp.sum(diff * diff, axis=-1, keepdims=True) * inv_nm1
        inv_std = recip(jnp.sqrt(var) + eps)
        return alpha * diff * inv_std + bias                     # padded lanes -> 0

    # ---- x2 = norm_1(x); fused QKV projection --------------------------------
    x2 = layer_norm(x, a1_ref[...], g1_ref[...])
    qkv = jnp.dot(x2.astype(cd), wqkv_ref[...],
                  preferred_element_type=f32) + bqkv_ref[...]    # (R, 3Ep)
    q = qkv[:, 0 * Ep:1 * Ep]
    k = qkv[:, 1 * Ep:2 * Ep]
    v = qkv[:, 2 * Ep:3 * Ep]

    # ---- all-heads attention as ONE masked matmul -----------------------------
    # stack heads along sublanes: row index = h*R + (b*S + s)  -> (H*R, d_k_pad)
    def stack_heads(t):
        return jnp.concatenate(
            [t[:, h * d_k_pad:(h + 1) * d_k_pad] for h in range(num_heads)],
            axis=0)

    q3 = stack_heads(q)
    k3 = stack_heads(k)
    v3 = stack_heads(v)

    # contract last dims directly (no explicit .T / XLU transpose)
    scores = lax.dot_general(
        q3.astype(cd), k3.astype(cd),
        dimension_numbers=(((1,), (1,)), ((), ())),
        preferred_element_type=f32) * (1.0 / math.sqrt(d_k))     # (H*R, H*R)

    # precomputed additive block-diag mask keeps attention within (head, batch)
    scores = scores + mask_ref[...]
    # NOTE: this single (H*R)x(H*R) masked matmul is fine at H*R=64 but grows
    # quadratically in B*S; switch to batched/per-(head,batch) dots at scale.

    scores = scores - jnp.max(scores, axis=-1, keepdims=True)
    p = jnp.exp(scores)
    p = p * recip(jnp.sum(p, axis=-1, keepdims=True))            # one recip per row

    ctx = jnp.dot(p.astype(cd), v3.astype(cd),
                  preferred_element_type=f32)                    # (H*R, d_k_pad)

    # un-stack heads back to lanes -> (R, H*d_k_pad) == (R, Ep)
    concat = jnp.concatenate(
        [ctx[h * R:(h + 1) * R, :] for h in range(num_heads)], axis=1)

    attn_out = jnp.dot(concat.astype(cd), wo_ref[...],
                       preferred_element_type=f32) + bo_ref[...]

    new_x = x + attn_out                                          # residual 1 (dropout = id)

    # ---- norm_2 + FFN + residual 2 --------------------------------------------
    x2b = layer_norm(new_x, a2_ref[...], g2_ref[...])
    h1 = jnp.dot(x2b.astype(cd), w1_ref[...],
                 preferred_element_type=f32) + c1_ref[...]
    h1 = jnp.maximum(h1, 0.0)                                     # ReLU
    ffn = jnp.dot(h1.astype(cd), w2_ref[...],
                  preferred_element_type=f32) + c2_ref[...]

    out_ref[...] = (new_x + ffn).astype(out_ref.dtype)


# ----------------------------------------------------------------------------
# Wrapper-side parameter packing (one-time layout plumbing):
#   - pad E (100) -> Ep (128), F (2048) -> Fp, head dims 25 -> 32
#   - fuse wq|wk|wv into one (Ep, 3Ep) weight
#   - matmul weights default to bf16 (biases / norm params stay f32)
# ----------------------------------------------------------------------------
PACKED_ORDER = ("a1", "g1", "wqkv", "bqkv", "wo", "bo",
                "a2", "g2", "w1", "b1", "w2", "b2")


def pack_params(params, *, embed_dim, num_heads, d_ff, matmul_dtype=jnp.bfloat16):
    E, H = embed_dim, num_heads
    d_k = E // H
    Ep = _round_up(E, 128)
    assert Ep % H == 0, "padded embed dim must divide evenly across heads"
    dkp = Ep // H
    Fp = _round_up(d_ff, 128)
    f32 = jnp.float32

    def pad_cols(a, n):
        return jnp.zeros((a.shape[0], n), a.dtype).at[:, :a.shape[1]].set(a)

    def pad_rows(a, n):
        return jnp.zeros((n, a.shape[1]), a.dtype).at[:a.shape[0], :].set(a)

    def relayout_head_cols(w):   # (in, E) -> (in, Ep): head h cols -> lanes [h*dkp, h*dkp+d_k)
        out = jnp.zeros((w.shape[0], Ep), w.dtype)
        for h in range(H):
            out = out.at[:, h * dkp:h * dkp + d_k].set(w[:, h * d_k:(h + 1) * d_k])
        return out

    def relayout_head_rows(w):   # (E, out) -> (Ep, out): head h rows -> [h*dkp, h*dkp+d_k)
        out = jnp.zeros((Ep, w.shape[1]), w.dtype)
        for h in range(H):
            out = out.at[h * dkp:h * dkp + d_k, :].set(w[h * d_k:(h + 1) * d_k, :])
        return out

    wq = pad_rows(relayout_head_cols(params["wq"].astype(f32)), Ep)
    wk = pad_rows(relayout_head_cols(params["wk"].astype(f32)), Ep)
    wv = pad_rows(relayout_head_cols(params["wv"].astype(f32)), Ep)
    wqkv = jnp.concatenate([wq, wk, wv], axis=1)                       # (Ep, 3Ep)
    bqkv = jnp.concatenate(
        [relayout_head_cols(params[b].astype(f32)) for b in ("bq", "bk", "bv")],
        axis=1)                                                        # (1, 3Ep)

    wo = pad_cols(relayout_head_rows(params["wo"].astype(f32)), Ep)    # (Ep, Ep)
    bo = pad_cols(params["bo"].astype(f32), Ep)

    w1 = pad_rows(pad_cols(params["w1"].astype(f32), Fp), Ep)          # (Ep, Fp)
    b1 = pad_cols(params["b1"].astype(f32), Fp)
    w2 = pad_cols(pad_rows(params["w2"].astype(f32), Fp), Ep)          # (Fp, Ep)
    b2 = pad_cols(params["b2"].astype(f32), Ep)

    packed = dict(
        a1=pad_cols(params["n1_alpha"].astype(f32), Ep),
        g1=pad_cols(params["n1_bias"].astype(f32), Ep),
        wqkv=wqkv.astype(matmul_dtype), bqkv=bqkv,
        wo=wo.astype(matmul_dtype), bo=bo,
        a2=pad_cols(params["n2_alpha"].astype(f32), Ep),
        g2=pad_cols(params["n2_bias"].astype(f32), Ep),
        w1=w1.astype(matmul_dtype), b1=b1,
        w2=w2.astype(matmul_dtype), b2=b2,
    )
    meta = dict(E=E, Ep=Ep, H=H, d_k=d_k, dkp=dkp, F=d_ff, Fp=Fp)
    return packed, meta


def building_block(x, packed, meta, *, num_heads, eps=1e-6, approx_recip=True):
    B, S, E = x.shape
    assert E == meta["E"]
    Ep = meta["Ep"]
    H = num_heads
    R = B * S
    R3 = H * R

    # flatten (B, S) -> rows, zero-pad features E -> Ep (lane-dense layout)
    x_flat = jnp.zeros((R, Ep), jnp.float32).at[:, :E].set(
        x.reshape(R, E).astype(jnp.float32))

    # precomputed additive block-diagonal mask: stacked row index = h*R + b*S + s,
    # block id = row // S; row attends to col iff same (head, batch) block.
    blk = jnp.arange(R3, dtype=jnp.int32) // S
    mask = jnp.where(blk[:, None] == blk[None, :],
                     jnp.float32(0.0), jnp.float32(-1e30))

    kernel = functools.partial(
        _building_block_kernel,
        num_heads=H, d_model=E, d_k=meta["d_k"], d_k_pad=meta["dkp"],
        eps=eps, approx_recip=approx_recip)

    args = [x_flat, mask] + [packed[name] for name in PACKED_ORDER]
    vmem = pltpu.MemorySpace.VMEM
    # Single invocation (no grid): no per-step overhead, no double-buffering of
    # invariant weights; everything (~1.3 MB bf16 / ~2.4 MB f32) fits in VMEM.
    out = pl.pallas_call(
        kernel,
        out_shape=jax.ShapeDtypeStruct((R, Ep), jnp.float32),
        in_specs=[pl.BlockSpec(memory_space=vmem) for _ in args],
        out_specs=pl.BlockSpec(memory_space=vmem),
        compiler_params=pltpu.CompilerParams(
            vmem_limit_bytes=32 * 1024 * 1024),
    )(*args)

    return out[:, :E].reshape(B, S, E).astype(x.dtype)


# ----------------------------------------------------------------------------
# Pure-JAX reference (unpadded params, for verification)
# ----------------------------------------------------------------------------
def building_block_ref(x, params, *, num_heads, eps=1e-6):
    B, S, E = x.shape
    d_k = E // num_heads
    x = x.astype(jnp.float32)

    def norm(v, alpha, bias):
        mean = jnp.mean(v, axis=-1, keepdims=True)
        var = jnp.sum((v - mean) ** 2, axis=-1, keepdims=True) / (E - 1)
        return alpha * (v - mean) / (jnp.sqrt(var) + eps) + bias

    x2 = norm(x, params["n1_alpha"], params["n1_bias"])
    q = x2 @ params["wq"] + params["bq"]
    k = x2 @ params["wk"] + params["bk"]
    v = x2 @ params["wv"] + params["bv"]
    q = q.reshape(B, S, num_heads, d_k).transpose(0, 2, 1, 3)
    k = k.reshape(B, S, num_heads, d_k).transpose(0, 2, 1, 3)
    v = v.reshape(B, S, num_heads, d_k).transpose(0, 2, 1, 3)
    scores = jnp.einsum("bhqd,bhkd->bhqk", q, k) / math.sqrt(d_k)
    p = jax.nn.softmax(scores, axis=-1)
    attn = jnp.einsum("bhqk,bhkd->bhqd", p, v).transpose(0, 2, 1, 3).reshape(B, S, E)
    attn = attn @ params["wo"] + params["bo"]
    new_x = x + attn
    x2b = norm(new_x, params["n2_alpha"], params["n2_bias"])
    h1 = jax.nn.relu(x2b @ params["w1"] + params["b1"])
    return new_x + (h1 @ params["w2"] + params["b2"])


# ----------------------------------------------------------------------------
# Deterministic parameter construction
# ----------------------------------------------------------------------------
def init_params(key, embed_dim, d_ff):
    keys = jax.random.split(key, 8)
    E, F = embed_dim, d_ff
    s = 0.05
    return {
        "n1_alpha": jnp.ones((1, E), jnp.float32),
        "n1_bias": jnp.zeros((1, E), jnp.float32),
        "wq": s * jax.random.normal(keys[0], (E, E), jnp.float32),
        "bq": 0.01 * jnp.ones((1, E), jnp.float32),
        "wk": s * jax.random.normal(keys[1], (E, E), jnp.float32),
        "bk": 0.01 * jnp.ones((1, E), jnp.float32),
        "wv": s * jax.random.normal(keys[2], (E, E), jnp.float32),
        "bv": 0.01 * jnp.ones((1, E), jnp.float32),
        "wo": s * jax.random.normal(keys[3], (E, E), jnp.float32),
        "bo": 0.01 * jnp.ones((1, E), jnp.float32),
        "n2_alpha": jnp.ones((1, E), jnp.float32),
        "n2_bias": jnp.zeros((1, E), jnp.float32),
        "w1": s * jax.random.normal(keys[4], (E, F), jnp.float32),
        "b1": 0.01 * jnp.ones((1, F), jnp.float32),
        "w2": s * jax.random.normal(keys[5], (F, E), jnp.float32),
        "b2": 0.01 * jnp.ones((1, E), jnp.float32),
    }


if __name__ == "__main__":
    # Module config: hidden_features=1 -> embed_dim = 100, num_heads=4 (d_k=25),
    # FeedForward default d_ff = 2048, dropout -> identity at inference.
    hidden_features = 1
    embed_dim = 100 * hidden_features
    num_heads = 4
    d_ff = 2048
    B, S = 2, 8

    key = jax.random.PRNGKey(0)
    kx, kp = jax.random.split(key)
    x = jax.random.normal(kx, (B, S, embed_dim), jnp.float32)
    params = init_params(kp, embed_dim, d_ff)

    ref = building_block_ref(x, params, num_heads=num_heads)

    # Default / production path: bf16 MXU operands (halves the dominant weight
    # DMA, 3x fewer MXU passes), approx EUP reciprocals, f32 accumulation.
    packed16, meta = pack_params(params, embed_dim=embed_dim, num_heads=num_heads,
                                 d_ff=d_ff)  # matmul_dtype defaults to bf16
    out16 = jax.block_until_ready(
        building_block(x, packed16, meta, num_heads=num_heads))
    np.testing.assert_allclose(np.asarray(out16), np.asarray(ref),
                               rtol=5e-2, atol=5e-2)

    # Exact verification path: f32 MXU operands, exact divides.
    packed32, meta32 = pack_params(params, embed_dim=embed_dim, num_heads=num_heads,
                                   d_ff=d_ff, matmul_dtype=jnp.float32)
    out32 = jax.block_until_ready(
        building_block(x, packed32, meta32, num_heads=num_heads,
                       approx_recip=False))
    np.testing.assert_allclose(np.asarray(out32), np.asarray(ref),
                               rtol=2e-4, atol=2e-4)

    print("KERNEL_OK")
</pallas_src>

<mosaic_0001>
module attributes {stable_mosaic.version = 11 : i64} {
  func.func @_building_block_kernel(%arg0: memref<16x128xf32, #tpu.memory_space<vmem>>, %arg1: memref<64x64xf32, #tpu.memory_space<vmem>>, %arg2: memref<1x128xf32, #tpu.memory_space<vmem>>, %arg3: memref<1x128xf32, #tpu.memory_space<vmem>>, %arg4: memref<128x384xbf16, #tpu.memory_space<vmem>>, %arg5: memref<1x384xf32, #tpu.memory_space<vmem>>, %arg6: memref<128x128xbf16, #tpu.memory_space<vmem>>, %arg7: memref<1x128xf32, #tpu.memory_space<vmem>>, %arg8: memref<1x128xf32, #tpu.memory_space<vmem>>, %arg9: memref<1x128xf32, #tpu.memory_space<vmem>>, %arg10: memref<128x2048xbf16, #tpu.memory_space<vmem>>, %arg11: memref<1x2048xf32, #tpu.memory_space<vmem>>, %arg12: memref<2048x128xbf16, #tpu.memory_space<vmem>>, %arg13: memref<1x128xf32, #tpu.memory_space<vmem>>, %arg14: memref<16x128xf32, #tpu.memory_space<vmem>>) attributes {dimension_semantics = [], scalar_prefetch = 0 : i64, scratch_operands = 0 : i64, tpu.core_type = #tpu.core_type<tc>} {
    %c0 = arith.constant 0 : index
    %c0_0 = arith.constant 0 : index
    %0 = vector.load %arg0[%c0, %c0_0] : memref<16x128xf32, #tpu.memory_space<vmem>>, vector<16x128xf32>
    %1 = tpu.iota {dimensions = array<i32: 1>} : vector<1x128xi32>
    %c100_i32 = arith.constant 100 : i32
    %2 = vector.broadcast %c100_i32 : i32 to vector<1x128xi32>
    %3 = arith.cmpi slt, %1, %2 : vector<1x128xi32>
    %4 = arith.extui %3 : vector<1x128xi1> to vector<1x128xi32>
    %5 = arith.sitofp %4 : vector<1x128xi32> to vector<1x128xf32>
    %c0_1 = arith.constant 0 : index
    %c0_2 = arith.constant 0 : index
    %6 = vector.load %arg2[%c0_1, %c0_2] : memref<1x128xf32, #tpu.memory_space<vmem>>, vector<1x128xf32>
    %c0_3 = arith.constant 0 : index
    %c0_4 = arith.constant 0 : index
    %7 = vector.load %arg3[%c0_3, %c0_4] : memref<1x128xf32, #tpu.memory_space<vmem>>, vector<1x128xf32>
    %cst = arith.constant dense<0.000000e+00> : vector<16xf32>
    %8 = vector.multi_reduction <add>, %0, %cst [1] : vector<16x128xf32> to vector<16xf32>
    %9 = vector.shape_cast %8 : vector<16xf32> to vector<16x1xf32>
    %cst_5 = arith.constant 0.00999999977 : f32
    %10 = vector.broadcast %cst_5 : f32 to vector<16x1xf32>
    %11 = arith.mulf %9, %10 : vector<16x1xf32>
    %12 = vector.broadcast %11 : vector<16x1xf32> to vector<16x128xf32>
    %13 = arith.subf %0, %12 : vector<16x128xf32>
    %14 = vector.broadcast %5 : vector<1x128xf32> to vector<16x128xf32>
    %15 = arith.mulf %13, %14 : vector<16x128xf32>
    %16 = arith.mulf %15, %15 : vector<16x128xf32>
    %cst_6 = arith.constant dense<0.000000e+00> : vector<16xf32>
    %17 = vector.multi_reduction <add>, %16, %cst_6 [1] : vector<16x128xf32> to vector<16xf32>
    %18 = vector.shape_cast %17 : vector<16xf32> to vector<16x1xf32>
    %cst_7 = arith.constant 0.0101010101 : f32
    %19 = vector.broadcast %cst_7 : f32 to vector<16x1xf32>
    %20 = arith.mulf %18, %19 : vector<16x1xf32>
    %21 = math.sqrt %20 : vector<16x1xf32>
    %cst_8 = arith.constant 9.99999997E-7 : f32
    %22 = vector.broadcast %cst_8 : f32 to vector<16x1xf32>
    %23 = arith.addf %21, %22 : vector<16x1xf32>
    %24 = tpu.reciprocal %23 {approx = true} : vector<16x1xf32> -> vector<16x1xf32>
    %25 = vector.broadcast %6 : vector<1x128xf32> to vector<16x128xf32>
    %26 = arith.mulf %25, %15 : vector<16x128xf32>
    %27 = vector.broadcast %24 : vector<16x1xf32> to vector<16x128xf32>
    %28 = arith.mulf %26, %27 : vector<16x128xf32>
    %29 = vector.broadcast %7 : vector<1x128xf32> to vector<16x128xf32>
    %30 = arith.addf %28, %29 : vector<16x128xf32>
    %31 = arith.truncf %30 : vector<16x128xf32> to vector<16x128xbf16>
    %c0_9 = arith.constant 0 : index
    %c0_10 = arith.constant 0 : index
    %32 = vector.load %arg4[%c0_9, %c0_10] : memref<128x384xbf16, #tpu.memory_space<vmem>>, vector<128x384xbf16>
    %cst_11 = arith.constant dense<0.000000e+00> : vector<16x384xf32>
    %33 = tpu.matmul %31, %32, %cst_11 {dimension_numbers = #tpu.dot_dimension_numbers<[1], [0], [0], [1], [0, 0, 1, 1], [], []>} : vector<16x128xbf16>, vector<128x384xbf16>, vector<16x384xf32> -> vector<16x384xf32>
    %c0_12 = arith.constant 0 : index
    %c0_13 = arith.constant 0 : index
    %34 = vector.load %arg5[%c0_12, %c0_13] : memref<1x384xf32, #tpu.memory_space<vmem>>, vector<1x384xf32>
    %35 = vector.broadcast %34 : vector<1x384xf32> to vector<16x384xf32>
    %36 = arith.addf %33, %35 : vector<16x384xf32>
    %37 = vector.extract_strided_slice %36 {offsets = [0, 0], sizes = [16, 128], strides = [1, 1]} : vector<16x384xf32> to vector<16x128xf32>
    %38 = vector.extract_strided_slice %36 {offsets = [0, 128], sizes = [16, 128], strides = [1, 1]} : vector<16x384xf32> to vector<16x128xf32>
    %39 = vector.extract_strided_slice %36 {offsets = [0, 256], sizes = [16, 128], strides = [1, 1]} : vector<16x384xf32> to vector<16x128xf32>
    %40 = vector.extract_strided_slice %37 {offsets = [0, 0], sizes = [16, 32], strides = [1, 1]} : vector<16x128xf32> to vector<16x32xf32>
    %41 = vector.extract_strided_slice %37 {offsets = [0, 32], sizes = [16, 32], strides = [1, 1]} : vector<16x128xf32> to vector<16x32xf32>
    %42 = vector.extract_strided_slice %37 {offsets = [0, 64], sizes = [16, 32], strides = [1, 1]} : vector<16x128xf32> to vector<16x32xf32>
    %43 = vector.extract_strided_slice %37 {offsets = [0, 96], sizes = [16, 32], strides = [1, 1]} : vector<16x128xf32> to vector<16x32xf32>
    %44 = tpu.concatenate %40, %41, %42, %43 in 0 : vector<16x32xf32>, vector<16x32xf32>, vector<16x32xf32>, vector<16x32xf32> -> vector<64x32xf32>
    %45 = vector.extract_strided_slice %38 {offsets = [0, 0], sizes = [16, 32], strides = [1, 1]} : vector<16x128xf32> to vector<16x32xf32>
    %46 = vector.extract_strided_slice %38 {offsets = [0, 32], sizes = [16, 32], strides = [1, 1]} : vector<16x128xf32> to vector<16x32xf32>
    %47 = vector.extract_strided_slice %38 {offsets = [0, 64], sizes = [16, 32], strides = [1, 1]} : vector<16x128xf32> to vector<16x32xf32>
    %48 = vector.extract_strided_slice %38 {offsets = [0, 96], sizes = [16, 32], strides = [1, 1]} : vector<16x128xf32> to vector<16x32xf32>
    %49 = tpu.concatenate %45, %46, %47, %48 in 0 : vector<16x32xf32>, vector<16x32xf32>, vector<16x32xf32>, vector<16x32xf32> -> vector<64x32xf32>
    %50 = vector.extract_strided_slice %39 {offsets = [0, 0], sizes = [16, 32], strides = [1, 1]} : vector<16x128xf32> to vector<16x32xf32>
    %51 = vector.extract_strided_slice %39 {offsets = [0, 32], sizes = [16, 32], strides = [1, 1]} : vector<16x128xf32> to vector<16x32xf32>
    %52 = vector.extract_strided_slice %39 {offsets = [0, 64], sizes = [16, 32], strides = [1, 1]} : vector<16x128xf32> to vector<16x32xf32>
    %53 = vector.extract_strided_slice %39 {offsets = [0, 96], sizes = [16, 32], strides = [1, 1]} : vector<16x128xf32> to vector<16x32xf32>
    %54 = tpu.concatenate %50, %51, %52, %53 in 0 : vector<16x32xf32>, vector<16x32xf32>, vector<16x32xf32>, vector<16x32xf32> -> vector<64x32xf32>
    %55 = arith.truncf %44 : vector<64x32xf32> to vector<64x32xbf16>
    %56 = arith.truncf %49 : vector<64x32xf32> to vector<64x32xbf16>
    %cst_14 = arith.constant dense<0.000000e+00> : vector<64x64xf32>
    %57 = tpu.matmul %55, %56, %cst_14 {dimension_numbers = #tpu.dot_dimension_numbers<[1], [1], [0], [0], [0, 0, 1, 0], [], []>} : vector<64x32xbf16>, vector<64x32xbf16>, vector<64x64xf32> -> vector<64x64xf32>
    %cst_15 = arith.constant 2.000000e-01 : f32
    %58 = vector.broadcast %cst_15 : f32 to vector<64x64xf32>
    %59 = arith.mulf %57, %58 : vector<64x64xf32>
    %c0_16 = arith.constant 0 : index
    %c0_17 = arith.constant 0 : index
    %60 = vector.load %arg1[%c0_16, %c0_17] : memref<64x64xf32, #tpu.memory_space<vmem>>, vector<64x64xf32>
    %61 = arith.addf %59, %60 : vector<64x64xf32>
    %cst_18 = arith.constant dense<0xFF800000> : vector<64xf32>
    %62 = vector.multi_reduction <maximumf>, %61, %cst_18 [1] : vector<64x64xf32> to vector<64xf32>
    %63 = vector.shape_cast %62 : vector<64xf32> to vector<64x1xf32>
    %64 = vector.broadcast %63 : vector<64x1xf32> to vector<64x64xf32>
    %65 = arith.subf %61, %64 : vector<64x64xf32>
    %66 = math.exp %65 : vector<64x64xf32>
    %cst_19 = arith.constant dense<0.000000e+00> : vector<64xf32>
    %67 = vector.multi_reduction <add>, %66, %cst_19 [1] : vector<64x64xf32> to vector<64xf32>
    %68 = vector.shape_cast %67 : vector<64xf32> to vector<64x1xf32>
    %69 = tpu.reciprocal %68 {approx = true} : vector<64x1xf32> -> vector<64x1xf32>
    %70 = vector.broadcast %69 : vector<64x1xf32> to vector<64x64xf32>
    %71 = arith.mulf %66, %70 : vector<64x64xf32>
    %72 = arith.truncf %71 : vector<64x64xf32> to vector<64x64xbf16>
    %73 = arith.truncf %54 : vector<64x32xf32> to vector<64x32xbf16>
    %cst_20 = arith.constant dense<0.000000e+00> : vector<64x32xf32>
    %74 = tpu.matmul %72, %73, %cst_20 {dimension_numbers = #tpu.dot_dimension_numbers<[1], [0], [0], [1], [0, 0, 1, 1], [], []>} : vector<64x64xbf16>, vector<64x32xbf16>, vector<64x32xf32> -> vector<64x32xf32>
    %75 = vector.extract_strided_slice %74 {offsets = [0, 0], sizes = [16, 32], strides = [1, 1]} : vector<64x32xf32> to vector<16x32xf32>
    %76 = vector.extract_strided_slice %74 {offsets = [16, 0], sizes = [16, 32], strides = [1, 1]} : vector<64x32xf32> to vector<16x32xf32>
    %77 = vector.extract_strided_slice %74 {offsets = [32, 0], sizes = [16, 32], strides = [1, 1]} : vector<64x32xf32> to vector<16x32xf32>
    %78 = vector.extract_strided_slice %74 {offsets = [48, 0], sizes = [16, 32], strides = [1, 1]} : vector<64x32xf32> to vector<16x32xf32>
    %79 = tpu.concatenate %75, %76, %77, %78 in 1 : vector<16x32xf32>, vector<16x32xf32>, vector<16x32xf32>, vector<16x32xf32> -> vector<16x128xf32>
    %80 = arith.truncf %79 : vector<16x128xf32> to vector<16x128xbf16>
    %c0_21 = arith.constant 0 : index
    %c0_22 = arith.constant 0 : index
    %81 = vector.load %arg6[%c0_21, %c0_22] : memref<128x128xbf16, #tpu.memory_space<vmem>>, vector<128x128xbf16>
    %cst_23 = arith.constant dense<0.000000e+00> : vector<16x128xf32>
    %82 = tpu.matmul %80, %81, %cst_23 {dimension_numbers = #tpu.dot_dimension_numbers<[1], [0], [0], [1], [0, 0, 1, 1], [], []>} : vector<16x128xbf16>, vector<128x128xbf16>, vector<16x128xf32> -> vector<16x128xf32>
    %c0_24 = arith.constant 0 : index
    %c0_25 = arith.constant 0 : index
    %83 = vector.load %arg7[%c0_24, %c0_25] : memref<1x128xf32, #tpu.memory_space<vmem>>, vector<1x128xf32>
    %84 = vector.broadcast %83 : vector<1x128xf32> to vector<16x128xf32>
    %85 = arith.addf %82, %84 : vector<16x128xf32>
    %86 = arith.addf %0, %85 : vector<16x128xf32>
    %c0_26 = arith.constant 0 : index
    %c0_27 = arith.constant 0 : index
    %87 = vector.load %arg8[%c0_26, %c0_27] : memref<1x128xf32, #tpu.memory_space<vmem>>, vector<1x128xf32>
    %c0_28 = arith.constant 0 : index
    %c0_29 = arith.constant 0 : index
    %88 = vector.load %arg9[%c0_28, %c0_29] : memref<1x128xf32, #tpu.memory_space<vmem>>, vector<1x128xf32>
    %cst_30 = arith.constant dense<0.000000e+00> : vector<16xf32>
    %89 = vector.multi_reduction <add>, %86, %cst_30 [1] : vector<16x128xf32> to vector<16xf32>
    %90 = vector.shape_cast %89 : vector<16xf32> to vector<16x1xf32>
    %cst_31 = arith.constant 0.00999999977 : f32
    %91 = vector.broadcast %cst_31 : f32 to vector<16x1xf32>
    %92 = arith.mulf %90, %91 : vector<16x1xf32>
    %93 = vector.broadcast %92 : vector<16x1xf32> to vector<16x128xf32>
    %94 = arith.subf %86, %93 : vector<16x128xf32>
    %95 = vector.broadcast %5 : vector<1x128xf32> to vector<16x128xf32>
    %96 = arith.mulf %94, %95 : vector<16x128xf32>
    %97 = arith.mulf %96, %96 : vector<16x128xf32>
    %cst_32 = arith.constant dense<0.000000e+00> : vector<16xf32>
    %98 = vector.multi_reduction <add>, %97, %cst_32 [1] : vector<16x128xf32> to vector<16xf32>
    %99 = vector.shape_cast %98 : vector<16xf32> to vector<16x1xf32>
    %cst_33 = arith.constant 0.0101010101 : f32
    %100 = vector.broadcast %cst_33 : f32 to vector<16x1xf32>
    %101 = arith.mulf %99, %100 : vector<16x1xf32>
    %102 = math.sqrt %101 : vector<16x1xf32>
    %cst_34 = arith.constant 9.99999997E-7 : f32
    %103 = vector.broadcast %cst_34 : f32 to vector<16x1xf32>
    %104 = arith.addf %102, %103 : vector<16x1xf32>
    %105 = tpu.reciprocal %104 {approx = true} : vector<16x1xf32> -> vector<16x1xf32>
    %106 = vector.broadcast %87 : vector<1x128xf32> to vector<16x128xf32>
    %107 = arith.mulf %106, %96 : vector<16x128xf32>
    %108 = vector.broadcast %105 : vector<16x1xf32> to vector<16x128xf32>
    %109 = arith.mulf %107, %108 : vector<16x128xf32>
    %110 = vector.broadcast %88 : vector<1x128xf32> to vector<16x128xf32>
    %111 = arith.addf %109, %110 : vector<16x128xf32>
    %112 = arith.truncf %111 : vector<16x128xf32> to vector<16x128xbf16>
    %c0_35 = arith.constant 0 : index
    %c0_36 = arith.constant 0 : index
    %113 = vector.load %arg10[%c0_35, %c0_36] : memref<128x2048xbf16, #tpu.memory_space<vmem>>, vector<128x2048xbf16>
    %cst_37 = arith.constant dense<0.000000e+00> : vector<16x2048xf32>
    %114 = tpu.matmul %112, %113, %cst_37 {dimension_numbers = #tpu.dot_dimension_numbers<[1], [0], [0], [1], [0, 0, 1, 1], [], []>} : vector<16x128xbf16>, vector<128x2048xbf16>, vector<16x2048xf32> -> vector<16x2048xf32>
    %c0_38 = arith.constant 0 : index
    %c0_39 = arith.constant 0 : index
    %115 = vector.load %arg11[%c0_38, %c0_39] : memref<1x2048xf32, #tpu.memory_space<vmem>>, vector<1x2048xf32>
    %116 = vector.broadcast %115 : vector<1x2048xf32> to vector<16x2048xf32>
    %117 = arith.addf %114, %116 : vector<16x2048xf32>
    %cst_40 = arith.constant 0.000000e+00 : f32
    %118 = vector.broadcast %cst_40 : f32 to vector<16x2048xf32>
    %119 = arith.maximumf %117, %118 : vector<16x2048xf32>
    %120 = arith.truncf %119 : vector<16x2048xf32> to vector<16x2048xbf16>
    %c0_41 = arith.constant 0 : index
    %c0_42 = arith.constant 0 : index
    %121 = vector.load %arg12[%c0_41, %c0_42] : memref<2048x128xbf16, #tpu.memory_space<vmem>>, vector<2048x128xbf16>
    %cst_43 = arith.constant dense<0.000000e+00> : vector<16x128xf32>
    %122 = tpu.matmul %120, %121, %cst_43 {dimension_numbers = #tpu.dot_dimension_numbers<[1], [0], [0], [1], [0, 0, 1, 1], [], []>} : vector<16x2048xbf16>, vector<2048x128xbf16>, vector<16x128xf32> -> vector<16x128xf32>
    %c0_44 = arith.constant 0 : index
    %c0_45 = arith.constant 0 : index
    %123 = vector.load %arg13[%c0_44, %c0_45] : memref<1x128xf32, #tpu.memory_space<vmem>>, vector<1x128xf32>
    %124 = vector.broadcast %123 : vector<1x128xf32> to vector<16x128xf32>
    %125 = arith.addf %122, %124 : vector<16x128xf32>
    %126 = arith.addf %86, %125 : vector<16x128xf32>
    %c0_46 = arith.constant 0 : index
    %c0_47 = arith.constant 0 : index
    %127 = vector.load %arg14[%c0_46, %c0_47] : memref<16x128xf32, #tpu.memory_space<vmem>>, vector<16x128xf32>
    tpu.vector_store %arg14[%c0_46, %c0_47], %126 {strides = array<i32>} : memref<16x128xf32, #tpu.memory_space<vmem>>, vector<16x128xf32>,
    return
  }
}

</mosaic_0001>

<llo_original>
// kernel: tpu_custom_call.1
$region0: #{tpu_custom_call.1}
  #allocation0 [shape = 'u32[]', space=smem, size = 0x4, offset = 0x4, fixed_abs, tag = 'smem constant byte address 0x4 - core index']
  #allocation1 [shape = 'u32[144,128]{1,0:T(1,128)}', space=vmem, size = 0x12000, scoped, tag = 'internal scratch']
  %s0 = inlined_call_operand.hbm [shape: f32[16,128], index: 0, kind: input, shape index: {}]
  %s1 = inlined_call_operand.hbm [shape: f32[64,64], index: 1, kind: input, shape index: {}]
  %s2 = inlined_call_operand.vmem [shape: f32[1,128], index: 2, kind: input, shape index: {}]
  %s3 = inlined_call_operand.vmem [shape: f32[1,128], index: 3, kind: input, shape index: {}]
  %s4 = inlined_call_operand.hbm [shape: bf16[128,384], index: 4, kind: input, shape index: {}]
  %s5 = inlined_call_operand.vmem [shape: f32[1,384], index: 5, kind: input, shape index: {}]
  %s6 = inlined_call_operand.hbm [shape: bf16[128,128], index: 6, kind: input, shape index: {}]
  %s7 = inlined_call_operand.vmem [shape: f32[1,128], index: 7, kind: input, shape index: {}]
  %s8 = inlined_call_operand.vmem [shape: f32[1,128], index: 8, kind: input, shape index: {}]
  %s9 = inlined_call_operand.vmem [shape: f32[1,128], index: 9, kind: input, shape index: {}]
  %s10 = inlined_call_operand.hbm [shape: bf16[128,2048], index: 10, kind: input, shape index: {}]
  %s11 = inlined_call_operand.vmem [shape: f32[1,2048], index: 11, kind: input, shape index: {}]
  %s12 = inlined_call_operand.hbm [shape: bf16[2048,128], index: 12, kind: input, shape index: {}]
  %s13 = inlined_call_operand.vmem [shape: f32[1,128], index: 13, kind: input, shape index: {}]
  %s14 = inlined_call_operand.hbm [shape: f32[16,128], index: 14, kind: output, shape index: {}]
  %s15 = sld [smem:[#allocation0]]
  $region90: #{tpu_custom_call.1} parent=0
    _
  %s17 = ssub.s32 1, %s15
  %s18 = scalar_select 0, %s17, %s15
  $region1: #{tpu_custom_call.1} parent=0
    #allocation2 [shape = 'u8[8192]{0}', space=vmem, size = 0x2000, scoped, tag = 'input window, operand 0, single buffered']
    #allocation3 [shape = 's32[1]{0}', space=sflag, size = 0x4, scoped, tag = 'scoped memory for tpu_custom_call.1']
    #allocation4 [shape = 's32[1]{0}', space=sflag, size = 0x4, scoped, tag = 'scoped memory for tpu_custom_call.1']
    #allocation5 [shape = 'u8[32768]{0}', space=vmem, size = 0x8000, scoped, tag = 'input window, operand 1, single buffered']
    #allocation6 [shape = 's32[1]{0}', space=sflag, size = 0x4, scoped, tag = 'scoped memory for tpu_custom_call.1']
    #allocation7 [shape = 'u8[98304]{0}', space=vmem, size = 0x18000, scoped, tag = 'input window, operand 4, single buffered']
    #allocation8 [shape = 'u8[32768]{0}', space=vmem, size = 0x8000, scoped, tag = 'input window, operand 6, single buffered']
    #allocation9 [shape = 's32[1]{0}', space=sflag, size = 0x4, scoped, tag = 'scoped memory for tpu_custom_call.1']
    #allocation10 [shape = 'u8[524288]{0}', space=vmem, size = 0x80000, scoped, tag = 'input window, operand 10, single buffered']
    #allocation11 [shape = 'u8[524288]{0}', space=vmem, size = 0x80000, scoped, tag = 'input window, operand 12, single buffered']
    #allocation12 [shape = 's32[1]{0}', space=sflag, size = 0x4, scoped, tag = 'scoped memory for tpu_custom_call.1']
    #allocation13 [shape = 'u8[8192]{0}', space=vmem, size = 0x2000, scoped, tag = 'output window, operand 0, single buffered']
    %19 = vsyncpa [#allocation3], 0
    %20 = vsyncpa [#allocation6], 0
    %21 = vsyncpa [#allocation9], 0
    %22 = vsyncpa [#allocation12], 0
    %23 = vsyncpa [#allocation4], 0
    // Predicated region
    $region2: #{tpu_custom_call.1} parent=1 // pred_check
      _
    $region3: #{tpu_custom_call.1} parent=1 // pred_check_branch
      %25 = sbr.rel (0) target = $region5
    $region4: #{tpu_custom_call.1} parent=1 // pred_region
      %s27 = ssub.s32 256, 256
      %28 = vsyncadd [#allocation3], %s27
      %s29 = sshll.u32 [#allocation2], 4
      %s30 = int_to_ptr.vmem [resolvable:$true] %s29
      %35 = dma.hbm_to_vmem [thread:$0]  %s0, 256, %s30, [#allocation3], 128, 128, 8
    $region5: #{tpu_custom_call.1} parent=1 // pred_fallthru
      _
    // Predicated region
    $region6: #{tpu_custom_call.1} parent=1 // pred_check
      _
    $region7: #{tpu_custom_call.1} parent=1 // pred_check_branch
      %37 = sbr.rel (0) target = $region9
    $region8: #{tpu_custom_call.1} parent=1 // pred_region
      %s39 = ssub.s32 1024, 1024
      %40 = vsyncadd [#allocation6], %s39
      %s41 = sshll.u32 [#allocation5], 4
      %s42 = int_to_ptr.vmem [resolvable:$true] %s41
      %47 = dma.hbm_to_vmem [thread:$0]  %s1, 1024, %s42, [#allocation6], 128, 128, 8
    $region9: #{tpu_custom_call.1} parent=1 // pred_fallthru
      _
    // Predicated region
    $region10: #{tpu_custom_call.1} parent=1 // pred_check
      _
    $region11: #{tpu_custom_call.1} parent=1 // pred_check_branch
      %49 = sbr.rel (0) target = $region13
    $region12: #{tpu_custom_call.1} parent=1 // pred_region
      _
    $region13: #{tpu_custom_call.1} parent=1 // pred_fallthru
      _
    // Predicated region
    $region14: #{tpu_custom_call.1} parent=1 // pred_check
      _
    $region15: #{tpu_custom_call.1} parent=1 // pred_check_branch
      %51 = sbr.rel (0) target = $region17
    $region16: #{tpu_custom_call.1} parent=1 // pred_region
      _
    $region17: #{tpu_custom_call.1} parent=1 // pred_fallthru
      _
    // Predicated region
    $region18: #{tpu_custom_call.1} parent=1 // pred_check
      _
    $region19: #{tpu_custom_call.1} parent=1 // pred_check_branch
      %53 = sbr.rel (0) target = $region21
    $region20: #{tpu_custom_call.1} parent=1 // pred_region
      %s55 = ssub.s32 3072, 3072
      %56 = vsyncadd [#allocation6], %s55
      %s57 = sshll.u32 [#allocation7], 4
      %s58 = int_to_ptr.vmem [resolvable:$true] %s57
      %63 = dma.hbm_to_vmem [thread:$0]  %s4, 3072, %s58, [#allocation6], 192, 192, 12
    $region21: #{tpu_custom_call.1} parent=1 // pred_fallthru
      _
    // Predicated region
    $region22: #{tpu_custom_call.1} parent=1 // pred_check
      _
    $region23: #{tpu_custom_call.1} parent=1 // pred_check_branch
      %65 = sbr.rel (0) target = $region25
    $region24: #{tpu_custom_call.1} parent=1 // pred_region
      _
    $region25: #{tpu_custom_call.1} parent=1 // pred_fallthru
      _
    // Predicated region
    $region26: #{tpu_custom_call.1} parent=1 // pred_check
      _
    $region27: #{tpu_custom_call.1} parent=1 // pred_check_branch
      %67 = sbr.rel (0) target = $region29
    $region28: #{tpu_custom_call.1} parent=1 // pred_region
      %s69 = ssub.s32 1024, 1024
      %70 = vsyncadd [#allocation9], %s69
      %s71 = sshll.u32 [#allocation8], 4
      %s72 = int_to_ptr.vmem [resolvable:$true] %s71
      %77 = dma.hbm_to_vmem [thread:$0]  %s6, 1024, %s72, [#allocation9], 64, 64, 4
    $region29: #{tpu_custom_call.1} parent=1 // pred_fallthru
      _
    // Predicated region
    $region30: #{tpu_custom_call.1} parent=1 // pred_check
      _
    $region31: #{tpu_custom_call.1} parent=1 // pred_check_branch
      %79 = sbr.rel (0) target = $region33
    $region32: #{tpu_custom_call.1} parent=1 // pred_region
      _
    $region33: #{tpu_custom_call.1} parent=1 // pred_fallthru
      _
    // Predicated region
    $region34: #{tpu_custom_call.1} parent=1 // pred_check
      _
    $region35: #{tpu_custom_call.1} parent=1 // pred_check_branch
      %81 = sbr.rel (0) target = $region37
    $region36: #{tpu_custom_call.1} parent=1 // pred_region
      _
    $region37: #{tpu_custom_call.1} parent=1 // pred_fallthru
      _
    // Predicated region
    $region38: #{tpu_custom_call.1} parent=1 // pred_check
      _
    $region39: #{tpu_custom_call.1} parent=1 // pred_check_branch
      %83 = sbr.rel (0) target = $region41
    $region40: #{tpu_custom_call.1} parent=1 // pred_region
      _
    $region41: #{tpu_custom_call.1} parent=1 // pred_fallthru
      _
    // Predicated region
    $region42: #{tpu_custom_call.1} parent=1 // pred_check
      _
    $region43: #{tpu_custom_call.1} parent=1 // pred_check_branch
      %85 = sbr.rel (0) target = $region45
    $region44: #{tpu_custom_call.1} parent=1 // pred_region
      %s87 = ssub.s32 16384, 16384
      %88 = vsyncadd [#allocation9], %s87
      %s89 = sshll.u32 [#allocation10], 4
      %s90 = int_to_ptr.vmem [resolvable:$true] %s89
      %95 = dma.hbm_to_vmem [thread:$0]  %s10, 16384, %s90, [#allocation9], 1024, 1024, 64
    $region45: #{tpu_custom_call.1} parent=1 // pred_fallthru
      _
    // Predicated region
    $region46: #{tpu_custom_call.1} parent=1 // pred_check
      _
    $region47: #{tpu_custom_call.1} parent=1 // pred_check_branch
      %97 = sbr.rel (0) target = $region49
    $region48: #{tpu_custom_call.1} parent=1 // pred_region
      _
    $region49: #{tpu_custom_call.1} parent=1 // pred_fallthru
      _
    // Predicated region
    $region50: #{tpu_custom_call.1} parent=1 // pred_check
      _
    $region51: #{tpu_custom_call.1} parent=1 // pred_check_branch
      %99 = sbr.rel (0) target = $region53
    $region52: #{tpu_custom_call.1} parent=1 // pred_region
      %s101 = ssub.s32 16384, 16384
      %102 = vsyncadd [#allocation12], %s101
      %s103 = sshll.u32 [#allocation11], 4
      %s104 = int_to_ptr.vmem [resolvable:$true] %s103
      %109 = dma.hbm_to_vmem [thread:$0]  %s12, 16384, %s104, [#allocation12], 64, 64, 4
    $region53: #{tpu_custom_call.1} parent=1 // pred_fallthru
      _
    // Predicated region
    $region54: #{tpu_custom_call.1} parent=1 // pred_check
      _
    $region55: #{tpu_custom_call.1} parent=1 // pred_check_branch
      %111 = sbr.rel (0) target = $region57
    $region56: #{tpu_custom_call.1} parent=1 // pred_region
      _
    $region57: #{tpu_custom_call.1} parent=1 // pred_fallthru
      _
    // Predicated region
    $region58: #{tpu_custom_call.1} parent=1 // pred_check
      _
    $region59: #{tpu_custom_call.1} parent=1 // pred_check_branch
      %113 = sbr.rel (0) target = $region61
    $region60: #{tpu_custom_call.1} parent=1 // pred_region
      %114 = dma.done [#allocation3], 256
    $region61: #{tpu_custom_call.1} parent=1 // pred_fallthru
      _
    // Predicated region
    $region62: #{tpu_custom_call.1} parent=1 // pred_check
      _
    $region63: #{tpu_custom_call.1} parent=1 // pred_check_branch
      %116 = sbr.rel (0) target = $region65
    $region64: #{tpu_custom_call.1} parent=1 // pred_region
      %117 = dma.done [#allocation6], 1024
    $region65: #{tpu_custom_call.1} parent=1 // pred_fallthru
      _
    // Predicated region
    $region66: #{tpu_custom_call.1} parent=1 // pred_check
      _
    $region67: #{tpu_custom_call.1} parent=1 // pred_check_branch
      %119 = sbr.rel (0) target = $region69
    $region68: #{tpu_custom_call.1} parent=1 // pred_region
      %120 = dma.done [#allocation6], 3072
    $region69: #{tpu_custom_call.1} parent=1 // pred_fallthru
      _
    // Predicated region
    $region70: #{tpu_custom_call.1} parent=1 // pred_check
      _
    $region71: #{tpu_custom_call.1} parent=1 // pred_check_branch
      %122 = sbr.rel (0) target = $region73
    $region72: #{tpu_custom_call.1} parent=1 // pred_region
      %123 = dma.done [#allocation9], 1024
    $region73: #{tpu_custom_call.1} parent=1 // pred_fallthru
      _
    // Predicated region
    $region74: #{tpu_custom_call.1} parent=1 // pred_check
      _
    $region75: #{tpu_custom_call.1} parent=1 // pred_check_branch
      %125 = sbr.rel (0) target = $region77
    $region76: #{tpu_custom_call.1} parent=1 // pred_region
      %126 = dma.done [#allocation9], 16384
    $region77: #{tpu_custom_call.1} parent=1 // pred_fallthru
      _
    // Predicated region
    $region78: #{tpu_custom_call.1} parent=1 // pred_check
      _
    $region79: #{tpu_custom_call.1} parent=1 // pred_check_branch
      %128 = sbr.rel (0) target = $region81
    $region80: #{tpu_custom_call.1} parent=1 // pred_region
      %129 = dma.done [#allocation12], 16384
    $region81: #{tpu_custom_call.1} parent=1 // pred_fallthru
      _
    %v131 = vld [vmem:[#allocation2] sm:$0xff]
    %v132 = vld [vmem:[#allocation2 + $0x8] sm:$0xff]
    %v133 = vlaneseq
    %v134 = vand.u32 %v133, 127
    %vm135 = vcmp.lt.s32.totalorder %v134, 100
    %v136 = vsel %vm135, 1, 0
    %v137 = vcvt.s32.f32 %v136
    %v138 = vld [vmem:[%s2] sm:$0x1]
    %v139 = vld [vmem:[%s3] sm:$0x1]
    %140 = vadd.xlane.f32.xlu0 %v131
    %v141 = vpop.xlane.xlu0 %140
    %142 = vadd.xlane.f32.xlu0 %v132
    %v143 = vpop.xlane.xlu0 %142
    %v144 = vmul.f32 %v141, 0.01
    %v145 = vmul.f32 %v143, 0.01
    %v146 = vsub.f32 %v131, %v144
    %v147 = vsub.f32 %v132, %v145
    %v148 = vmul.f32 %v146, %v137
    %v149 = vmul.f32 %v147, %v137
    %v150 = vmul.f32 %v148, %v148
    %v151 = vmul.f32 %v149, %v149
    %152 = vadd.xlane.f32.xlu0 %v150
    %v153 = vpop.xlane.xlu0 %152
    %154 = vadd.xlane.f32.xlu0 %v151
    %v155 = vpop.xlane.xlu0 %154
    %v156 = vmul.f32 %v153, 0.01010101
    %v157 = vmul.f32 %v155, 0.01010101
    %v158 = vrsqrt.pop %v156
    %v159 = vmul.f32 %v156, %v158
    %vm160 = vcmp.eq.f32.partialorder %v156, inf
    %v161 = vsel %vm160, %v156, %v159
    %vm162 = vcmp.eq.f32.partialorder %v156, 0.0
    %v163 = vand.u32 %v156, 2147483648
    %v164 = vsel %vm162, %v163, %v161
    %v165 = vrsqrt.pop %v157
    %v166 = vmul.f32 %v157, %v165
    %vm167 = vcmp.eq.f32.partialorder %v157, inf
    %v168 = vsel %vm167, %v157, %v166
    %vm169 = vcmp.eq.f32.partialorder %v157, 0.0
    %v170 = vand.u32 %v157, 2147483648
    %v171 = vsel %vm169, %v170, %v168
    %v172 = vadd.f32 %v164, 1e-06
    %v173 = vadd.f32 %v171, 1e-06
    %v174 = vrcp.pop %v172
    %v175 = vrcp.pop %v173
    %v177 = vlaneseq
    %v178 = vshrl.u32 %v177, 7
    %v179 = vsub.s32 0, %v178
    %v180 = vrot.slane %v138, %v179
    %v182 = vmul.f32 %v180, %v148
    %v183 = vmul.f32 %v180, %v149
    %v184 = vmul.f32 %v182, %v174
    %v185 = vmul.f32 %v183, %v175
    %v187 = vlaneseq
    %v188 = vshrl.u32 %v187, 7
    %v189 = vsub.s32 0, %v188
    %v190 = vrot.slane %v139, %v189
    %v192 = vadd.f32 %v184, %v190
    %v193 = vadd.f32 %v185, %v190
    %v194 = vpack.c.bf16 %v193, %v192
    %v195 = vld [vmem:[#allocation7] sm:$0xff]
    %v196 = vld [vmem:[#allocation7 + $0x8] sm:$0xf]
    %v197 = vld [vmem:[#allocation7 + $0xc] sm:$0xff]
    %v198 = vld [vmem:[#allocation7 + $0x14] sm:$0xf]
    %v199 = vld [vmem:[#allocation7 + $0x18] sm:$0xff]
    %v200 = vld [vmem:[#allocation7 + $0x20] sm:$0xf]
    %v201 = vld [vmem:[#allocation7 + $0x24] sm:$0xff]
    %v202 = vld [vmem:[#allocation7 + $0x2c] sm:$0xf]
    %v203 = vld [vmem:[#allocation7 + $0x30] sm:$0xff]
    %v204 = vld [vmem:[#allocation7 + $0x38] sm:$0xf]
    %v205 = vld [vmem:[#allocation7 + $0x3c] sm:$0xff]
    %v206 = vld [vmem:[#allocation7 + $0x44] sm:$0xf]
    %v207 = vld [vmem:[#allocation7 + $0x48] sm:$0xff]
    %v208 = vld [vmem:[#allocation7 + $0x50] sm:$0xf]
    %v209 = vld [vmem:[#allocation7 + $0x54] sm:$0xff]
    %v210 = vld [vmem:[#allocation7 + $0x5c] sm:$0xf]
    %v211 = vld [vmem:[#allocation7 + $0x60] sm:$0xff]
    %v212 = vld [vmem:[#allocation7 + $0x68] sm:$0xf]
    %v213 = vld [vmem:[#allocation7 + $0x6c] sm:$0xff]
    %v214 = vld [vmem:[#allocation7 + $0x74] sm:$0xf]
    %v215 = vld [vmem:[#allocation7 + $0x78] sm:$0xff]
    %v216 = vld [vmem:[#allocation7 + $0x80] sm:$0xf]
    %v217 = vld [vmem:[#allocation7 + $0x84] sm:$0xff]
    %v218 = vld [vmem:[#allocation7 + $0x8c] sm:$0xf]
    %v219 = vld [vmem:[#allocation7 + $0x90] sm:$0xff]
    %v220 = vld [vmem:[#allocation7 + $0x98] sm:$0xf]
    %v221 = vld [vmem:[#allocation7 + $0x9c] sm:$0xff]
    %v222 = vld [vmem:[#allocation7 + $0xa4] sm:$0xf]
    %v223 = vld [vmem:[#allocation7 + $0xa8] sm:$0xff]
    %v224 = vld [vmem:[#allocation7 + $0xb0] sm:$0xf]
    %v225 = vld [vmem:[#allocation7 + $0xb4] sm:$0xff]
    %v226 = vld [vmem:[#allocation7 + $0xbc] sm:$0xf]
    %v227 = vld [vmem:[%s5] sm:$0x7]
    %v229 = vlaneseq
    %v230 = vshrl.u32 %v229, 7
    %v231 = vsub.s32 0, %v230
    %v232 = vrot.slane %v227, %v231
    %v233 = vlaneseq
    %v234 = vshrl.u32 %v233, 7
    %v235 = vsub.s32 1, %v234
    %v236 = vrot.slane %v227, %v235
    %v237 = vlaneseq
    %v238 = vshrl.u32 %v237, 7
    %v239 = vsub.s32 2, %v238
    %v240 = vrot.slane %v227, %v239
    %v276 = vunpack.c.l.b16 %v195
    %v277 = vunpack.c.h.b16 %v195
    %v278 = vunpack.c.l.b16 %v196
    %v279 = vunpack.c.l.b16 %v197
    %v280 = vunpack.c.h.b16 %v197
    %v281 = vunpack.c.l.b16 %v198
    %v282 = vunpack.c.l.b16 %v199
    %v283 = vunpack.c.h.b16 %v199
    %v284 = vunpack.c.l.b16 %v200
    %v285 = vunpack.c.l.b16 %v201
    %v286 = vunpack.c.h.b16 %v201
    %v287 = vunpack.c.l.b16 %v202
    %v288 = vunpack.c.l.b16 %v203
    %v289 = vunpack.c.h.b16 %v203
    %v290 = vunpack.c.l.b16 %v204
    %v291 = vunpack.c.l.b16 %v205
    %v292 = vunpack.c.h.b16 %v205
    %v293 = vunpack.c.l.b16 %v206
    %v294 = vunpack.c.l.b16 %v207
    %v295 = vunpack.c.h.b16 %v207
    %v296 = vunpack.c.l.b16 %v208
    %v297 = vunpack.c.l.b16 %v209
    %v298 = vunpack.c.h.b16 %v209
    %v299 = vunpack.c.l.b16 %v210
    %v300 = vunpack.c.l.b16 %v211
    %v301 = vunpack.c.h.b16 %v211
    %v302 = vunpack.c.l.b16 %v212
    %v303 = vunpack.c.l.b16 %v213
    %v304 = vunpack.c.h.b16 %v213
    %v305 = vunpack.c.l.b16 %v214
    %v306 = vunpack.c.l.b16 %v215
    %v307 = vunpack.c.h.b16 %v215
    %v308 = vunpack.c.l.b16 %v216
    %v309 = vunpack.c.l.b16 %v217
    %v310 = vunpack.c.h.b16 %v217
    %v311 = vunpack.c.l.b16 %v218
    %v312 = vunpack.c.l.b16 %v219
    %v313 = vunpack.c.h.b16 %v219
    %v314 = vunpack.c.l.b16 %v220
    %v315 = vunpack.c.l.b16 %v221
    %v316 = vunpack.c.h.b16 %v221
    %v317 = vunpack.c.l.b16 %v222
    %v318 = vunpack.c.l.b16 %v223
    %v319 = vunpack.c.h.b16 %v223
    %v320 = vunpack.c.l.b16 %v224
    %v321 = vunpack.c.l.b16 %v225
    %v322 = vunpack.c.h.b16 %v225
    %v323 = vunpack.c.l.b16 %v226
    %v324 = vpack.c.b16 %v279, %v276
    %v325 = vpack.c.b16 %v280, %v277
    %v326 = vpack.c.b16 %v281, %v278
    %v327 = vpack.c.b16 %v285, %v282
    %v328 = vpack.c.b16 %v286, %v283
    %v329 = vpack.c.b16 %v287, %v284
    %v330 = vpack.c.b16 %v291, %v288
    %v331 = vpack.c.b16 %v292, %v289
    %v332 = vpack.c.b16 %v293, %v290
    %v333 = vpack.c.b16 %v297, %v294
    %v334 = vpack.c.b16 %v298, %v295
    %v335 = vpack.c.b16 %v299, %v296
    %v336 = vpack.c.b16 %v303, %v300
    %v337 = vpack.c.b16 %v304, %v301
    %v338 = vpack.c.b16 %v305, %v302
    %v339 = vpack.c.b16 %v309, %v306
    %v340 = vpack.c.b16 %v310, %v307
    %v341 = vpack.c.b16 %v311, %v308
    %v342 = vpack.c.b16 %v315, %v312
    %v343 = vpack.c.b16 %v316, %v313
    %v344 = vpack.c.b16 %v317, %v314
    %v345 = vpack.c.b16 %v321, %v318
    %v346 = vpack.c.b16 %v322, %v319
    %v347 = vpack.c.b16 %v323, %v320
    %372 = vmatprep.subr.bf16.mxu0 %v325
    %373 = vmatpush1.bf16.msra.mxu0 %v324
    %374 = vmatprep.subr.bf16.mxu0 %v328
    %375 = vmatpush1.bf16.msra.mxu0 %v327
    %376 = vmatprep.subr.bf16.mxu0 %v331
    %377 = vmatpush1.bf16.msra.mxu0 %v330
    %378 = vmatprep.subr.bf16.mxu0 %v334
    %379 = vmatpush1.bf16.msra.mxu0 %v333
    %380 = vmatprep.subr.bf16.mxu0 %v337
    %381 = vmatpush1.bf16.msra.mxu0 %v336
    %382 = vmatprep.subr.bf16.mxu0 %v340
    %383 = vmatpush1.bf16.msra.mxu0 %v339
    %384 = vmatprep.subr.bf16.mxu0 %v343
    %385 = vmatpush1.bf16.msra.mxu0 %v342
    %386 = vmatprep.subr.bf16.mxu0 %v346
    %387 = vmatpush1.bf16.msra.mxu0 %v345
    %388 = vmatprep.subr.bf16.mxu0 0
    %389 = vmatpush1.bf16.msra.mxu0 0
    %390 = vmatprep.subr.bf16.mxu0 0
    %391 = vmatpush1.bf16.msra.mxu0 0
    %392 = vmatprep.subr.bf16.mxu0 0
    %393 = vmatpush1.bf16.msra.mxu0 0
    %394 = vmatprep.subr.bf16.mxu0 0
    %395 = vmatpush1.bf16.msra.mxu0 0
    %396 = vmatprep.subr.bf16.mxu0 0
    %397 = vmatpush1.bf16.msra.mxu0 0
    %398 = vmatprep.subr.bf16.mxu0 0
    %399 = vmatpush1.bf16.msra.mxu0 0
    %400 = vmatprep.subr.bf16.mxu0 0
    %401 = vmatpush1.bf16.msra.mxu0 0
    %402 = vmatprep.subr.bf16.mxu0 0
    %403 = vmatpush1.bf16.msra.mxu0 0
    %404 = vmatprep.mubr.bf16.mxu0 0
    %405 = vmatmul.mubr.bf16.gmra.mrb[0].mxu0 %v194
    %v406 = vpop.f32.mrb[0].mxu0
    %v407 = vadd.f32 %v232, %v406
    %v408 = vpop.f32.mrb[0].mxu0
    %v409 = vadd.f32 %v236, %v408
    %v410 = vpop.f32.mrb[0].mxu0
    %v411 = vadd.f32 %v232, %v410
    %v412 = vpop.f32.mrb[0].mxu0
    %v413 = vadd.f32 %v236, %v412
    %414 = vdwg.mxu0
    %415 = vmatprep.subr.bf16.mxu0 0
    %416 = vmatpush1.bf16.msra.mxu0 %v326
    %417 = vmatprep.subr.bf16.mxu0 0
    %418 = vmatpush1.bf16.msra.mxu0 %v329
    %419 = vmatprep.subr.bf16.mxu0 0
    %420 = vmatpush1.bf16.msra.mxu0 %v332
    %421 = vmatprep.subr.bf16.mxu0 0
    %422 = vmatpush1.bf16.msra.mxu0 %v335
    %423 = vmatprep.subr.bf16.mxu0 0
    %424 = vmatpush1.bf16.msra.mxu0 %v338
    %425 = vmatprep.subr.bf16.mxu0 0
    %426 = vmatpush1.bf16.msra.mxu0 %v341
    %427 = vmatprep.subr.bf16.mxu0 0
    %428 = vmatpush1.bf16.msra.mxu0 %v344
    %429 = vmatprep.subr.bf16.mxu0 0
    %430 = vmatpush1.bf16.msra.mxu0 %v347
    %431 = vmatprep.subr.bf16.mxu0 0
    %432 = vmatpush1.bf16.msra.mxu0 0
    %433 = vmatprep.subr.bf16.mxu0 0
    %434 = vmatpush1.bf16.msra.mxu0 0
    %435 = vmatprep.subr.bf16.mxu0 0
    %436 = vmatpush1.bf16.msra.mxu0 0
    %437 = vmatprep.subr.bf16.mxu0 0
    %438 = vmatpush1.bf16.msra.mxu0 0
    %439 = vmatprep.subr.bf16.mxu0 0
    %440 = vmatpush1.bf16.msra.mxu0 0
    %441 = vmatprep.subr.bf16.mxu0 0
    %442 = vmatpush1.bf16.msra.mxu0 0
    %443 = vmatprep.subr.bf16.mxu0 0
    %444 = vmatpush1.bf16.msra.mxu0 0
    %445 = vmatprep.subr.bf16.mxu0 0
    %446 = vmatpush1.bf16.msra.mxu0 0
    %447 = vmatprep.mubr.bf16.mxu0 0
    %448 = vmatmul.mubr.bf16.gmra.mrb[0].mxu0 %v194
    %v449 = vpop.f32.mrb[0].mxu0
    %v450 = vadd.f32 %v240, %v449
    %v451 = vpop.f32.mrb[0].mxu0
    %v452 = vpop.f32.mrb[0].mxu0
    %v453 = vadd.f32 %v240, %v452
    %v454 = vpop.f32.mrb[0].mxu0
    %455 = vdwg.mxu0
    %458 = vrot.lane.b32.xlu0 %v407, 96
    %v459 = vpop.permute.xlu0 %458
    %460 = vrot.lane.b32.xlu0 %v411, 96
    %v461 = vpop.permute.xlu0 %460
    %464 = vrot.lane.b32.xlu0 %v407, 64
    %v465 = vpop.permute.xlu0 %464
    %466 = vrot.lane.b32.xlu0 %v411, 64
    %v467 = vpop.permute.xlu0 %466
    %470 = vrot.lane.b32.xlu0 %v407, 32
    %v471 = vpop.permute.xlu0 %470
    %472 = vrot.lane.b32.xlu0 %v411, 32
    %v473 = vpop.permute.xlu0 %472
    %478 = vrot.lane.b32.xlu0 %v409, 96
    %v479 = vpop.permute.xlu0 %478
    %480 = vrot.lane.b32.xlu0 %v413, 96
    %v481 = vpop.permute.xlu0 %480
    %484 = vrot.lane.b32.xlu0 %v409, 64
    %v485 = vpop.permute.xlu0 %484
    %486 = vrot.lane.b32.xlu0 %v413, 64
    %v487 = vpop.permute.xlu0 %486
    %490 = vrot.lane.b32.xlu0 %v409, 32
    %v491 = vpop.permute.xlu0 %490
    %492 = vrot.lane.b32.xlu0 %v413, 32
    %v493 = vpop.permute.xlu0 %492
    %498 = vrot.lane.b32.xlu0 %v450, 96
    %v499 = vpop.permute.xlu0 %498
    %500 = vrot.lane.b32.xlu0 %v453, 96
    %v501 = vpop.permute.xlu0 %500
    %504 = vrot.lane.b32.xlu0 %v450, 64
    %v505 = vpop.permute.xlu0 %504
    %506 = vrot.lane.b32.xlu0 %v453, 64
    %v507 = vpop.permute.xlu0 %506
    %510 = vrot.lane.b32.xlu0 %v450, 32
    %v511 = vpop.permute.xlu0 %510
    %512 = vrot.lane.b32.xlu0 %v453, 32
    %v513 = vpop.permute.xlu0 %512
    %v516 = vpack.c.bf16 %v411, %v407
    %v517 = vpack.c.bf16 %v461, %v459
    %v518 = vpack.c.bf16 %v467, %v465
    %v519 = vpack.c.bf16 %v473, %v471
    %v520 = vpack.c.bf16 %v413, %v409
    %v521 = vpack.c.bf16 %v481, %v479
    %v522 = vpack.c.bf16 %v487, %v485
    %v523 = vpack.c.bf16 %v493, %v491
    %vm524 = vcmask 261120
    %v526 = vsel %vm524, %v516, 0
    %v529 = vsel %vm524, %v517, 0
    %v532 = vsel %vm524, %v518, 0
    %v535 = vsel %vm524, %v519, 0
    %v538 = vsel %vm524, %v520, 0
    %v541 = vsel %vm524, %v521, 0
    %v544 = vsel %vm524, %v522, 0
    %v547 = vsel %vm524, %v523, 0
    %549 = vmatprep.subr.bf16.mxu0 0
    %550 = vmatpush1.bf16.xpose.msra.mxu0 %v538
    %551 = vmatprep.subr.bf16.mxu0 0
    %552 = vmatpush1.bf16.xpose.msra.mxu0 %v541
    %553 = vmatprep.subr.bf16.mxu0 0
    %554 = vmatpush1.bf16.xpose.msra.mxu0 %v544
    %555 = vmatprep.subr.bf16.mxu0 0
    %556 = vmatpush1.bf16.xpose.msra.mxu0 %v547
    %557 = vmatprep.subr.bf16.mxu0 0
    %558 = vmatpush1.bf16.xpose.msra.mxu0 0
    %559 = vmatprep.subr.bf16.mxu0 0
    %560 = vmatpush1.bf16.xpose.msra.mxu0 0
    %561 = vmatprep.subr.bf16.mxu0 0
    %562 = vmatpush1.bf16.xpose.msra.mxu0 0
    %563 = vmatprep.subr.bf16.mxu0 0
    %564 = vmatpush1.bf16.xpose.msra.mxu0 0
    %565 = vmatprep.subr.bf16.mxu0 0
    %566 = vmatpush1.bf16.xpose.msra.mxu0 0
    %567 = vmatprep.subr.bf16.mxu0 0
    %568 = vmatpush1.bf16.xpose.msra.mxu0 0
    %569 = vmatprep.subr.bf16.mxu0 0
    %570 = vmatpush1.bf16.xpose.msra.mxu0 0
    %571 = vmatprep.subr.bf16.mxu0 0
    %572 = vmatpush1.bf16.xpose.msra.mxu0 0
    %573 = vmatprep.subr.bf16.mxu0 0
    %574 = vmatpush1.bf16.xpose.msra.mxu0 0
    %575 = vmatprep.subr.bf16.mxu0 0
    %576 = vmatpush1.bf16.xpose.msra.mxu0 0
    %577 = vmatprep.subr.bf16.mxu0 0
    %578 = vmatpush1.bf16.xpose.msra.mxu0 0
    %579 = vmatprep.subr.bf16.mxu0 0
    %580 = vmatpush1.bf16.xpose.msra.mxu0 0
    %581 = vmatprep.mubr.bf16.mxu0 0
    %582 = vmatmul.mubr.bf16.gmra.mrb[0].mxu0 %v526
    %v583 = vpop.f32.mrb[0].mxu0
    %v584 = vadd.f32 0.0, %v583
    %v585 = vpop.f32.mrb[0].mxu0
    %v586 = vpop.f32.mrb[0].mxu0
    %v587 = vadd.f32 0.0, %v586
    %v588 = vpop.f32.mrb[0].mxu0
    %589 = vmatprep.mubr.bf16.mxu0 0
    %590 = vmatmul.mubr.bf16.gmra.mrb[0].mxu0 %v529
    %v591 = vpop.f32.mrb[0].mxu0
    %v592 = vadd.f32 0.0, %v591
    %v593 = vpop.f32.mrb[0].mxu0
    %v594 = vpop.f32.mrb[0].mxu0
    %v595 = vadd.f32 0.0, %v594
    %v596 = vpop.f32.mrb[0].mxu0
    %597 = vmatprep.mubr.bf16.mxu0 0
    %598 = vmatmul.mubr.bf16.gmra.mrb[0].mxu0 %v532
    %v599 = vpop.f32.mrb[0].mxu0
    %v600 = vadd.f32 0.0, %v599
    %v601 = vpop.f32.mrb[0].mxu0
    %v602 = vpop.f32.mrb[0].mxu0
    %v603 = vadd.f32 0.0, %v602
    %v604 = vpop.f32.mrb[0].mxu0
    %605 = vmatprep.mubr.bf16.mxu0 0
    %606 = vmatmul.mubr.bf16.gmra.mrb[0].mxu0 %v535
    %v607 = vpop.f32.mrb[0].mxu0
    %v608 = vadd.f32 0.0, %v607
    %v609 = vpop.f32.mrb[0].mxu0
    %v610 = vpop.f32.mrb[0].mxu0
    %v611 = vadd.f32 0.0, %v610
    %v612 = vpop.f32.mrb[0].mxu0
    %613 = vdwg.mxu0
    %v614 = vmul.f32 %v584, 0.2
    %v615 = vmul.f32 %v587, 0.2
    %v616 = vmul.f32 %v592, 0.2
    %v617 = vmul.f32 %v595, 0.2
    %v618 = vmul.f32 %v600, 0.2
    %v619 = vmul.f32 %v603, 0.2
    %v620 = vmul.f32 %v608, 0.2
    %v621 = vmul.f32 %v611, 0.2
    %v622 = vld [vmem:[#allocation5] sm:$0xff]
    %v623 = vld [vmem:[#allocation5 + $0x8] sm:$0xff]
    %v624 = vld [vmem:[#allocation5 + $0x10] sm:$0xff]
    %v625 = vld [vmem:[#allocation5 + $0x18] sm:$0xff]
    %v626 = vld [vmem:[#allocation5 + $0x20] sm:$0xff]
    %v627 = vld [vmem:[#allocation5 + $0x28] sm:$0xff]
    %v628 = vld [vmem:[#allocation5 + $0x30] sm:$0xff]
    %v629 = vld [vmem:[#allocation5 + $0x38] sm:$0xff]
    %v630 = vadd.f32 %v614, %v622
    %v631 = vadd.f32 %v615, %v623
    %v632 = vadd.f32 %v616, %v624
    %v633 = vadd.f32 %v617, %v625
    %v634 = vadd.f32 %v618, %v626
    %v635 = vadd.f32 %v619, %v627
    %v636 = vadd.f32 %v620, %v628
    %v637 = vadd.f32 %v621, %v629
    %vm638 = vcmask 523264
    %v639 = vsel %vm638, %v630, -inf
    %640 = vmax.xlane.f32.xlu0 %v639
    %v641 = vpop.xlane.xlu0 %640
    %v642 = vsel %vm638, %v631, -inf
    %643 = vmax.xlane.f32.xlu0 %v642
    %v644 = vpop.xlane.xlu0 %643
    %v645 = vsel %vm638, %v632, -inf
    %646 = vmax.xlane.f32.xlu0 %v645
    %v647 = vpop.xlane.xlu0 %646
    %v648 = vsel %vm638, %v633, -inf
    %649 = vmax.xlane.f32.xlu0 %v648
    %v650 = vpop.xlane.xlu0 %649
    %v651 = vsel %vm638, %v634, -inf
    %652 = vmax.xlane.f32.xlu0 %v651
    %v653 = vpop.xlane.xlu0 %652
    %v654 = vsel %vm638, %v635, -inf
    %655 = vmax.xlane.f32.xlu0 %v654
    %v656 = vpop.xlane.xlu0 %655
    %v657 = vsel %vm638, %v636, -inf
    %658 = vmax.xlane.f32.xlu0 %v657
    %v659 = vpop.xlane.xlu0 %658
    %v660 = vsel %vm638, %v637, -inf
    %661 = vmax.xlane.f32.xlu0 %v660
    %v662 = vpop.xlane.xlu0 %661
    %v663 = vsub.f32 %v630, %v641
    %v664 = vsub.f32 %v631, %v644
    %v665 = vsub.f32 %v632, %v647
    %v666 = vsub.f32 %v633, %v650
    %v667 = vsub.f32 %v634, %v653
    %v668 = vsub.f32 %v635, %v656
    %v669 = vsub.f32 %v636, %v659
    %v670 = vsub.f32 %v637, %v662
    %v671 = vmul.f32 %v663, 1.442695
    %v672 = vpow.pop %v671
    %v673 = vmul.f32 %v664, 1.442695
    %v674 = vpow.pop %v673
    %v675 = vmul.f32 %v665, 1.442695
    %v676 = vpow.pop %v675
    %v677 = vmul.f32 %v666, 1.442695
    %v678 = vpow.pop %v677
    %v679 = vmul.f32 %v667, 1.442695
    %v680 = vpow.pop %v679
    %v681 = vmul.f32 %v668, 1.442695
    %v682 = vpow.pop %v681
    %v683 = vmul.f32 %v669, 1.442695
    %v684 = vpow.pop %v683
    %v685 = vmul.f32 %v670, 1.442695
    %v686 = vpow.pop %v685
    %v687 = vsel %vm638, %v672, 0.0
    %688 = vadd.xlane.f32.xlu0 %v687
    %v689 = vpop.xlane.xlu0 %688
    %v690 = vsel %vm638, %v674, 0.0
    %691 = vadd.xlane.f32.xlu0 %v690
    %v692 = vpop.xlane.xlu0 %691
    %v693 = vsel %vm638, %v676, 0.0
    %694 = vadd.xlane.f32.xlu0 %v693
    %v695 = vpop.xlane.xlu0 %694
    %v696 = vsel %vm638, %v678, 0.0
    %697 = vadd.xlane.f32.xlu0 %v696
    %v698 = vpop.xlane.xlu0 %697
    %v699 = vsel %vm638, %v680, 0.0
    %700 = vadd.xlane.f32.xlu0 %v699
    %v701 = vpop.xlane.xlu0 %700
    %v702 = vsel %vm638, %v682, 0.0
    %703 = vadd.xlane.f32.xlu0 %v702
    %v704 = vpop.xlane.xlu0 %703
    %v705 = vsel %vm638, %v684, 0.0
    %706 = vadd.xlane.f32.xlu0 %v705
    %v707 = vpop.xlane.xlu0 %706
    %v708 = vsel %vm638, %v686, 0.0
    %709 = vadd.xlane.f32.xlu0 %v708
    %v710 = vpop.xlane.xlu0 %709
    %v711 = vrcp.pop %v689
    %v712 = vrcp.pop %v692
    %v713 = vrcp.pop %v695
    %v714 = vrcp.pop %v698
    %v715 = vrcp.pop %v701
    %v716 = vrcp.pop %v704
    %v717 = vrcp.pop %v707
    %v718 = vrcp.pop %v710
    %v719 = vmul.f32 %v672, %v711
    %v720 = vmul.f32 %v674, %v712
    %v721 = vmul.f32 %v676, %v713
    %v722 = vmul.f32 %v678, %v714
    %v723 = vmul.f32 %v680, %v715
    %v724 = vmul.f32 %v682, %v716
    %v725 = vmul.f32 %v684, %v717
    %v726 = vmul.f32 %v686, %v718
    %v727 = vpack.c.bf16 %v720, %v719
    %v728 = vpack.c.bf16 %v722, %v721
    %v729 = vpack.c.bf16 %v724, %v723
    %v730 = vpack.c.bf16 %v726, %v725
    %v731 = vpack.c.bf16 %v453, %v450
    %v732 = vpack.c.bf16 %v501, %v499
    %v733 = vpack.c.bf16 %v507, %v505
    %v734 = vpack.c.bf16 %v513, %v511
    %v736 = vsel %vm638, %v727, 0
    %v739 = vsel %vm638, %v728, 0
    %v742 = vsel %vm638, %v729, 0
    %v745 = vsel %vm638, %v730, 0
    %747 = vmatprep.subr.bf16.mxu0 0
    %748 = vmatpush1.bf16.msra.mxu0 %v731
    %749 = vmatprep.subr.bf16.mxu0 0
    %750 = vmatpush1.bf16.msra.mxu0 %v732
    %751 = vmatprep.subr.bf16.mxu0 0
    %752 = vmatpush1.bf16.msra.mxu0 %v733
    %753 = vmatprep.subr.bf16.mxu0 0
    %754 = vmatpush1.bf16.msra.mxu0 %v734
    %755 = vmatprep.subr.bf16.mxu0 0
    %756 = vmatpush1.bf16.msra.mxu0 0
    %757 = vmatprep.subr.bf16.mxu0 0
    %758 = vmatpush1.bf16.msra.mxu0 0
    %759 = vmatprep.subr.bf16.mxu0 0
    %760 = vmatpush1.bf16.msra.mxu0 0
    %761 = vmatprep.subr.bf16.mxu0 0
    %762 = vmatpush1.bf16.msra.mxu0 0
    %763 = vmatprep.subr.bf16.mxu0 0
    %764 = vmatpush1.bf16.msra.mxu0 0
    %765 = vmatprep.subr.bf16.mxu0 0
    %766 = vmatpush1.bf16.msra.mxu0 0
    %767 = vmatprep.subr.bf16.mxu0 0
    %768 = vmatpush1.bf16.msra.mxu0 0
    %769 = vmatprep.subr.bf16.mxu0 0
    %770 = vmatpush1.bf16.msra.mxu0 0
    %771 = vmatprep.subr.bf16.mxu0 0
    %772 = vmatpush1.bf16.msra.mxu0 0
    %773 = vmatprep.subr.bf16.mxu0 0
    %774 = vmatpush1.bf16.msra.mxu0 0
    %775 = vmatprep.subr.bf16.mxu0 0
    %776 = vmatpush1.bf16.msra.mxu0 0
    %777 = vmatprep.subr.bf16.mxu0 0
    %778 = vmatpush1.bf16.msra.mxu0 0
    %779 = vmatprep.mubr.bf16.mxu0 0
    %780 = vmatmul.mubr.bf16.gmra.mrb[0].mxu0 %v736
    %v781 = vpop.f32.mrb[0].mxu0
    %v782 = vadd.f32 0.0, %v781
    %v783 = vpop.f32.mrb[0].mxu0
    %v784 = vpop.f32.mrb[0].mxu0
    %v785 = vadd.f32 0.0, %v784
    %v786 = vpop.f32.mrb[0].mxu0
    %787 = vmatprep.mubr.bf16.mxu0 0
    %788 = vmatmul.mubr.bf16.gmra.mrb[0].mxu0 %v739
    %v789 = vpop.f32.mrb[0].mxu0
    %v790 = vadd.f32 0.0, %v789
    %v791 = vpop.f32.mrb[0].mxu0
    %v792 = vpop.f32.mrb[0].mxu0
    %v793 = vadd.f32 0.0, %v792
    %v794 = vpop.f32.mrb[0].mxu0
    %795 = vmatprep.mubr.bf16.mxu0 0
    %796 = vmatmul.mubr.bf16.gmra.mrb[0].mxu0 %v742
    %v797 = vpop.f32.mrb[0].mxu0
    %v798 = vadd.f32 0.0, %v797
    %v799 = vpop.f32.mrb[0].mxu0
    %v800 = vpop.f32.mrb[0].mxu0
    %v801 = vadd.f32 0.0, %v800
    %v802 = vpop.f32.mrb[0].mxu0
    %803 = vmatprep.mubr.bf16.mxu0 0
    %804 = vmatmul.mubr.bf16.gmra.mrb[0].mxu0 %v745
    %v805 = vpop.f32.mrb[0].mxu0
    %v806 = vadd.f32 0.0, %v805
    %v807 = vpop.f32.mrb[0].mxu0
    %v808 = vpop.f32.mrb[0].mxu0
    %v809 = vadd.f32 0.0, %v808
    %v810 = vpop.f32.mrb[0].mxu0
    %811 = vdwg.mxu0
    %814 = vrot.lane.b32.xlu0 %v790, 32
    %v815 = vpop.permute.xlu0 %814
    %816 = vrot.lane.b32.xlu0 %v793, 32
    %v817 = vpop.permute.xlu0 %816
    %822 = vrot.lane.b32.xlu0 %v798, 64
    %v823 = vpop.permute.xlu0 %822
    %824 = vrot.lane.b32.xlu0 %v801, 64
    %v825 = vpop.permute.xlu0 %824
    %830 = vrot.lane.b32.xlu0 %v806, 96
    %v831 = vpop.permute.xlu0 %830
    %832 = vrot.lane.b32.xlu0 %v809, 96
    %v833 = vpop.permute.xlu0 %832
    %v836 = vsel %vm524, %v782, %v815
    %v837 = vsel %vm524, %v785, %v817
    %v838 = vsel %vm638, %v836, %v823
    %v839 = vsel %vm638, %v837, %v825
    %vm840 = vcmask 785408
    %v841 = vsel %vm840, %v838, %v831
    %v842 = vsel %vm840, %v839, %v833
    %v843 = vpack.c.bf16 %v842, %v841
    %v844 = vld [vmem:[#allocation8] sm:$0xf]
    %v845 = vld [vmem:[#allocation8 + $0x4] sm:$0xf]
    %v846 = vld [vmem:[#allocation8 + $0x8] sm:$0xf]
    %v847 = vld [vmem:[#allocation8 + $0xc] sm:$0xf]
    %v848 = vld [vmem:[#allocation8 + $0x10] sm:$0xf]
    %v849 = vld [vmem:[#allocation8 + $0x14] sm:$0xf]
    %v850 = vld [vmem:[#allocation8 + $0x18] sm:$0xf]
    %v851 = vld [vmem:[#allocation8 + $0x1c] sm:$0xf]
    %v852 = vld [vmem:[#allocation8 + $0x20] sm:$0xf]
    %v853 = vld [vmem:[#allocation8 + $0x24] sm:$0xf]
    %v854 = vld [vmem:[#allocation8 + $0x28] sm:$0xf]
    %v855 = vld [vmem:[#allocation8 + $0x2c] sm:$0xf]
    %v856 = vld [vmem:[#allocation8 + $0x30] sm:$0xf]
    %v857 = vld [vmem:[#allocation8 + $0x34] sm:$0xf]
    %v858 = vld [vmem:[#allocation8 + $0x38] sm:$0xf]
    %v859 = vld [vmem:[#allocation8 + $0x3c] sm:$0xf]
    %v860 = vld [vmem:[%s7] sm:$0x1]
    %v862 = vlaneseq
    %v863 = vshrl.u32 %v862, 7
    %v864 = vsub.s32 0, %v863
    %v865 = vrot.slane %v860, %v864
    %v883 = vunpack.c.l.b16 %v844
    %v884 = vunpack.c.l.b16 %v845
    %v885 = vunpack.c.l.b16 %v846
    %v886 = vunpack.c.l.b16 %v847
    %v887 = vunpack.c.l.b16 %v848
    %v888 = vunpack.c.l.b16 %v849
    %v889 = vunpack.c.l.b16 %v850
    %v890 = vunpack.c.l.b16 %v851
    %v891 = vunpack.c.l.b16 %v852
    %v892 = vunpack.c.l.b16 %v853
    %v893 = vunpack.c.l.b16 %v854
    %v894 = vunpack.c.l.b16 %v855
    %v895 = vunpack.c.l.b16 %v856
    %v896 = vunpack.c.l.b16 %v857
    %v897 = vunpack.c.l.b16 %v858
    %v898 = vunpack.c.l.b16 %v859
    %v899 = vpack.c.b16 %v884, %v883
    %v900 = vpack.c.b16 %v886, %v885
    %v901 = vpack.c.b16 %v888, %v887
    %v902 = vpack.c.b16 %v890, %v889
    %v903 = vpack.c.b16 %v892, %v891
    %v904 = vpack.c.b16 %v894, %v893
    %v905 = vpack.c.b16 %v896, %v895
    %v906 = vpack.c.b16 %v898, %v897
    %915 = vmatprep.subr.bf16.mxu0 0
    %916 = vmatpush1.bf16.msra.mxu0 %v899
    %917 = vmatprep.subr.bf16.mxu0 0
    %918 = vmatpush1.bf16.msra.mxu0 %v900
    %919 = vmatprep.subr.bf16.mxu0 0
    %920 = vmatpush1.bf16.msra.mxu0 %v901
    %921 = vmatprep.subr.bf16.mxu0 0
    %922 = vmatpush1.bf16.msra.mxu0 %v902
    %923 = vmatprep.subr.bf16.mxu0 0
    %924 = vmatpush1.bf16.msra.mxu0 %v903
    %925 = vmatprep.subr.bf16.mxu0 0
    %926 = vmatpush1.bf16.msra.mxu0 %v904
    %927 = vmatprep.subr.bf16.mxu0 0
    %928 = vmatpush1.bf16.msra.mxu0 %v905
    %929 = vmatprep.subr.bf16.mxu0 0
    %930 = vmatpush1.bf16.msra.mxu0 %v906
    %931 = vmatprep.subr.bf16.mxu0 0
    %932 = vmatpush1.bf16.msra.mxu0 0
    %933 = vmatprep.subr.bf16.mxu0 0
    %934 = vmatpush1.bf16.msra.mxu0 0
    %935 = vmatprep.subr.bf16.mxu0 0
    %936 = vmatpush1.bf16.msra.mxu0 0
    %937 = vmatprep.subr.bf16.mxu0 0
    %938 = vmatpush1.bf16.msra.mxu0 0
    %939 = vmatprep.subr.bf16.mxu0 0
    %940 = vmatpush1.bf16.msra.mxu0 0
    %941 = vmatprep.subr.bf16.mxu0 0
    %942 = vmatpush1.bf16.msra.mxu0 0
    %943 = vmatprep.subr.bf16.mxu0 0
    %944 = vmatpush1.bf16.msra.mxu0 0
    %945 = vmatprep.subr.bf16.mxu0 0
    %946 = vmatpush1.bf16.msra.mxu0 0
    %947 = vmatprep.mubr.bf16.mxu0 0
    %948 = vmatmul.mubr.bf16.gmra.mrb[0].mxu0 %v843
    %v949 = vpop.f32.mrb[0].mxu0
    %v950 = vadd.f32 %v865, %v949
    %v951 = vpop.f32.mrb[0].mxu0
    %v952 = vpop.f32.mrb[0].mxu0
    %v953 = vadd.f32 %v865, %v952
    %v954 = vpop.f32.mrb[0].mxu0
    %955 = vdwg.mxu0
    %v956 = vadd.f32 %v131, %v950
    %v957 = vadd.f32 %v132, %v953
    %v958 = vld [vmem:[%s8] sm:$0x1]
    %v959 = vld [vmem:[%s9] sm:$0x1]
    %960 = vadd.xlane.f32.xlu0 %v956
    %v961 = vpop.xlane.xlu0 %960
    %962 = vadd.xlane.f32.xlu0 %v957
    %v963 = vpop.xlane.xlu0 %962
    %v964 = vmul.f32 %v961, 0.01
    %v965 = vmul.f32 %v963, 0.01
    %v966 = vsub.f32 %v956, %v964
    %v967 = vsub.f32 %v957, %v965
    %v968 = vmul.f32 %v966, %v137
    %v969 = vmul.f32 %v967, %v137
    %v970 = vmul.f32 %v968, %v968
    %v971 = vmul.f32 %v969, %v969
    %972 = vadd.xlane.f32.xlu0 %v970
    %v973 = vpop.xlane.xlu0 %972
    %974 = vadd.xlane.f32.xlu0 %v971
    %v975 = vpop.xlane.xlu0 %974
    %v976 = vmul.f32 %v973, 0.01010101
    %v977 = vmul.f32 %v975, 0.01010101
    %v978 = vrsqrt.pop %v976
    %v979 = vmul.f32 %v976, %v978
    %vm980 = vcmp.eq.f32.partialorder %v976, inf
    %v981 = vsel %vm980, %v976, %v979
    %vm982 = vcmp.eq.f32.partialorder %v976, 0.0
    %v983 = vand.u32 %v976, 2147483648
    %v984 = vsel %vm982, %v983, %v981
    %v985 = vrsqrt.pop %v977
    %v986 = vmul.f32 %v977, %v985
    %vm987 = vcmp.eq.f32.partialorder %v977, inf
    %v988 = vsel %vm987, %v977, %v986
    %vm989 = vcmp.eq.f32.partialorder %v977, 0.0
    %v990 = vand.u32 %v977, 2147483648
    %v991 = vsel %vm989, %v990, %v988
    %v992 = vadd.f32 %v984, 1e-06
    %v993 = vadd.f32 %v991, 1e-06
    %v994 = vrcp.pop %v992
    %v995 = vrcp.pop %v993
    %v997 = vlaneseq
    %v998 = vshrl.u32 %v997, 7
    %v999 = vsub.s32 0, %v998
    %v1000 = vrot.slane %v958, %v999
    %v1002 = vmul.f32 %v1000, %v968
    %v1003 = vmul.f32 %v1000, %v969
    %v1004 = vmul.f32 %v1002, %v994
    %v1005 = vmul.f32 %v1003, %v995
    %v1007 = vlaneseq
    %v1008 = vshrl.u32 %v1007, 7
    %v1009 = vsub.s32 0, %v1008
    %v1010 = vrot.slane %v959, %v1009
    %v1012 = vadd.f32 %v1004, %v1010
    %v1013 = vadd.f32 %v1005, %v1010
    %v1014 = vpack.c.bf16 %v1013, %v1012
    %v1015 = vld [vmem:[#allocation10] sm:$0xff]
    %v1016 = vld [vmem:[#allocation10 + $0x8] sm:$0xff]
    %v1017 = vld [vmem:[#allocation10 + $0x10] sm:$0xff]
    %v1018 = vld [vmem:[#allocation10 + $0x18] sm:$0xff]
    %v1019 = vld [vmem:[#allocation10 + $0x20] sm:$0xff]
    %v1020 = vld [vmem:[#allocation10 + $0x28] sm:$0xff]
    %v1021 = vld [vmem:[#allocation10 + $0x30] sm:$0xff]
    %v1022 = vld [vmem:[#allocation10 + $0x38] sm:$0xff]
    %v1023 = vld [vmem:[#allocation10 + $0x40] sm:$0xff]
    %v1024 = vld [vmem:[#allocation10 + $0x48] sm:$0xff]
    %v1025 = vld [vmem:[#allocation10 + $0x50] sm:$0xff]
    %v1026 = vld [vmem:[#allocation10 + $0x58] sm:$0xff]
    %v1027 = vld [vmem:[#allocation10 + $0x60] sm:$0xff]
    %v1028 = vld [vmem:[#allocation10 + $0x68] sm:$0xff]
    %v1029 = vld [vmem:[#allocation10 + $0x70] sm:$0xff]
    %v1030 = vld [vmem:[#allocation10 + $0x78] sm:$0xff]
    %v1031 = vld [vmem:[#allocation10 + $0x80] sm:$0xff]
    %v1032 = vld [vmem:[#allocation10 + $0x88] sm:$0xff]
    %v1033 = vld [vmem:[#allocation10 + $0x90] sm:$0xff]
    %v1034 = vld [vmem:[#allocation10 + $0x98] sm:$0xff]
    %v1035 = vld [vmem:[#allocation10 + $0xa0] sm:$0xff]
    %v1036 = vld [vmem:[#allocation10 + $0xa8] sm:$0xff]
    %v1037 = vld [vmem:[#allocation10 + $0xb0] sm:$0xff]
    %v1038 = vld [vmem:[#allocation10 + $0xb8] sm:$0xff]
    %v1039 = vld [vmem:[#allocation10 + $0xc0] sm:$0xff]
    %v1040 = vld [vmem:[#allocation10 + $0xc8] sm:$0xff]
    %v1041 = vld [vmem:[#allocation10 + $0xd0] sm:$0xff]
    %v1042 = vld [vmem:[#allocation10 + $0xd8] sm:$0xff]
    %v1043 = vld [vmem:[#allocation10 + $0xe0] sm:$0xff]
    %v1044 = vld [vmem:[#allocation10 + $0xe8] sm:$0xff]
    %v1045 = vld [vmem:[#allocation10 + $0xf0] sm:$0xff]
    %v1046 = vld [vmem:[#allocation10 + $0xf8] sm:$0xff]
    %v1047 = vld [vmem:[#allocation10 + $0x100] sm:$0xff]
    %v1048 = vld [vmem:[#allocation10 + $0x108] sm:$0xff]
    %v1049 = vld [vmem:[#allocation10 + $0x110] sm:$0xff]
    %v1050 = vld [vmem:[#allocation10 + $0x118] sm:$0xff]
    %v1051 = vld [vmem:[#allocation10 + $0x120] sm:$0xff]
    %v1052 = vld [vmem:[#allocation10 + $0x128] sm:$0xff]
    %v1053 = vld [vmem:[#allocation10 + $0x130] sm:$0xff]
    %v1054 = vld [vmem:[#allocation10 + $0x138] sm:$0xff]
    %v1055 = vld [vmem:[#allocation10 + $0x140] sm:$0xff]
    %v1056 = vld [vmem:[#allocation10 + $0x148] sm:$0xff]
    %v1057 = vld [vmem:[#allocation10 + $0x150] sm:$0xff]
    %v1058 = vld [vmem:[#allocation10 + $0x158] sm:$0xff]
    %v1059 = vld [vmem:[#allocation10 + $0x160] sm:$0xff]
    %v1060 = vld [vmem:[#allocation10 + $0x168] sm:$0xff]
    %v1061 = vld [vmem:[#allocation10 + $0x170] sm:$0xff]
    %v1062 = vld [vmem:[#allocation10 + $0x178] sm:$0xff]
    %v1063 = vld [vmem:[#allocation10 + $0x180] sm:$0xff]
    %v1064 = vld [vmem:[#allocation10 + $0x188] sm:$0xff]
    %v1065 = vld [vmem:[#allocation10 + $0x190] sm:$0xff]
    %v1066 = vld [vmem:[#allocation10 + $0x198] sm:$0xff]
    %v1067 = vld [vmem:[#allocation10 + $0x1a0] sm:$0xff]
    %v1068 = vld [vmem:[#allocation10 + $0x1a8] sm:$0xff]
    %v1069 = vld [vmem:[#allocation10 + $0x1b0] sm:$0xff]
    %v1070 = vld [vmem:[#allocation10 + $0x1b8] sm:$0xff]
    %v1071 = vld [vmem:[#allocation10 + $0x1c0] sm:$0xff]
    %v1072 = vld [vmem:[#allocation10 + $0x1c8] sm:$0xff]
    %v1073 = vld [vmem:[#allocation10 + $0x1d0] sm:$0xff]
    %v1074 = vld [vmem:[#allocation10 + $0x1d8] sm:$0xff]
    %v1075 = vld [vmem:[#allocation10 + $0x1e0] sm:$0xff]
    %v1076 = vld [vmem:[#allocation10 + $0x1e8] sm:$0xff]
    %v1077 = vld [vmem:[#allocation10 + $0x1f0] sm:$0xff]
    %v1078 = vld [vmem:[#allocation10 + $0x1f8] sm:$0xff]
    %v1079 = vld [vmem:[#allocation10 + $0x200] sm:$0xff]
    %v1080 = vld [vmem:[#allocation10 + $0x208] sm:$0xff]
    %v1081 = vld [vmem:[#allocation10 + $0x210] sm:$0xff]
    %v1082 = vld [vmem:[#allocation10 + $0x218] sm:$0xff]
    %v1083 = vld [vmem:[#allocation10 + $0x220] sm:$0xff]
    %v1084 = vld [vmem:[#allocation10 + $0x228] sm:$0xff]
    %v1085 = vld [vmem:[#allocation10 + $0x230] sm:$0xff]
    %v1086 = vld [vmem:[#allocation10 + $0x238] sm:$0xff]
    %v1087 = vld [vmem:[#allocation10 + $0x240] sm:$0xff]
    %v1088 = vld [vmem:[#allocation10 + $0x248] sm:$0xff]
    %v1089 = vld [vmem:[#allocation10 + $0x250] sm:$0xff]
    %v1090 = vld [vmem:[#allocation10 + $0x258] sm:$0xff]
    %v1091 = vld [vmem:[#allocation10 + $0x260] sm:$0xff]
    %v1092 = vld [vmem:[#allocation10 + $0x268] sm:$0xff]
    %v1093 = vld [vmem:[#allocation10 + $0x270] sm:$0xff]
    %v1094 = vld [vmem:[#allocation10 + $0x278] sm:$0xff]
    %v1095 = vld [vmem:[#allocation10 + $0x280] sm:$0xff]
    %v1096 = vld [vmem:[#allocation10 + $0x288] sm:$0xff]
    %v1097 = vld [vmem:[#allocation10 + $0x290] sm:$0xff]
    %v1098 = vld [vmem:[#allocation10 + $0x298] sm:$0xff]
    %v1099 = vld [vmem:[#allocation10 + $0x2a0] sm:$0xff]
    %v1100 = vld [vmem:[#allocation10 + $0x2a8] sm:$0xff]
    %v1101 = vld [vmem:[#allocation10 + $0x2b0] sm:$0xff]
    %v1102 = vld [vmem:[#allocation10 + $0x2b8] sm:$0xff]
    %v1103 = vld [vmem:[#allocation10 + $0x2c0] sm:$0xff]
    %v1104 = vld [vmem:[#allocation10 + $0x2c8] sm:$0xff]
    %v1105 = vld [vmem:[#allocation10 + $0x2d0] sm:$0xff]
    %v1106 = vld [vmem:[#allocation10 + $0x2d8] sm:$0xff]
    %v1107 = vld [vmem:[#allocation10 + $0x2e0] sm:$0xff]
    %v1108 = vld [vmem:[#allocation10 + $0x2e8] sm:$0xff]
    %v1109 = vld [vmem:[#allocation10 + $0x2f0] sm:$0xff]
    %v1110 = vld [vmem:[#allocation10 + $0x2f8] sm:$0xff]
    %v1111 = vld [vmem:[#allocation10 + $0x300] sm:$0xff]
    %v1112 = vld [vmem:[#allocation10 + $0x308] sm:$0xff]
    %v1113 = vld [vmem:[#allocation10 + $0x310] sm:$0xff]
    %v1114 = vld [vmem:[#allocation10 + $0x318] sm:$0xff]
    %v1115 = vld [vmem:[#allocation10 + $0x320] sm:$0xff]
    %v1116 = vld [vmem:[#allocation10 + $0x328] sm:$0xff]
    %v1117 = vld [vmem:[#allocation10 + $0x330] sm:$0xff]
    %v1118 = vld [vmem:[#allocation10 + $0x338] sm:$0xff]
    %v1119 = vld [vmem:[#allocation10 + $0x340] sm:$0xff]
    %v1120 = vld [vmem:[#allocation10 + $0x348] sm:$0xff]
    %v1121 = vld [vmem:[#allocation10 + $0x350] sm:$0xff]
    %v1122 = vld [vmem:[#allocation10 + $0x358] sm:$0xff]
    %v1123 = vld [vmem:[#allocation10 + $0x360] sm:$0xff]
    %v1124 = vld [vmem:[#allocation10 + $0x368] sm:$0xff]
    %v1125 = vld [vmem:[#allocation10 + $0x370] sm:$0xff]
    %v1126 = vld [vmem:[#allocation10 + $0x378] sm:$0xff]
    %v1127 = vld [vmem:[#allocation10 + $0x380] sm:$0xff]
    %v1128 = vld [vmem:[#allocation10 + $0x388] sm:$0xff]
    %v1129 = vld [vmem:[#allocation10 + $0x390] sm:$0xff]
    %v1130 = vld [vmem:[#allocation10 + $0x398] sm:$0xff]
    %v1131 = vld [vmem:[#allocation10 + $0x3a0] sm:$0xff]
    %v1132 = vld [vmem:[#allocation10 + $0x3a8] sm:$0xff]
    %v1133 = vld [vmem:[#allocation10 + $0x3b0] sm:$0xff]
    %v1134 = vld [vmem:[#allocation10 + $0x3b8] sm:$0xff]
    %v1135 = vld [vmem:[#allocation10 + $0x3c0] sm:$0xff]
    %v1136 = vld [vmem:[#allocation10 + $0x3c8] sm:$0xff]
    %v1137 = vld [vmem:[#allocation10 + $0x3d0] sm:$0xff]
    %v1138 = vld [vmem:[#allocation10 + $0x3d8] sm:$0xff]
    %v1139 = vld [vmem:[#allocation10 + $0x3e0] sm:$0xff]
    %v1140 = vld [vmem:[#allocation10 + $0x3e8] sm:$0xff]
    %v1141 = vld [vmem:[#allocation10 + $0x3f0] sm:$0xff]
    %v1142 = vld [vmem:[#allocation10 + $0x3f8] sm:$0xff]
    %v1143 = vld [vmem:[%s11] sm:$0xff]
    %v1144 = vld [vmem:[%s11 + $0x8] sm:$0xff]
    %v1147 = vlaneseq
    %v1148 = vshrl.u32 %v1147, 7
    %v1149 = vsub.s32 0, %v1148
    %v1150 = vrot.slane %v1143, %v1149
    %v1151 = vlaneseq
    %v1152 = vshrl.u32 %v1151, 7
    %v1153 = vsub.s32 1, %v1152
    %v1154 = vrot.slane %v1143, %v1153
    %v1155 = vlaneseq
    %v1156 = vshrl.u32 %v1155, 7
    %v1157 = vsub.s32 2, %v1156
    %v1158 = vrot.slane %v1143, %v1157
    %v1159 = vlaneseq
    %v1160 = vshrl.u32 %v1159, 7
    %v1161 = vsub.s32 3, %v1160
    %v1162 = vrot.slane %v1143, %v1161
    %v1163 = vlaneseq
    %v1164 = vshrl.u32 %v1163, 7
    %v1165 = vsub.s32 4, %v1164
    %v1166 = vrot.slane %v1143, %v1165
    %v1167 = vlaneseq
    %v1168 = vshrl.u32 %v1167, 7
    %v1169 = vsub.s32 5, %v1168
    %v1170 = vrot.slane %v1143, %v1169
    %v1171 = vlaneseq
    %v1172 = vshrl.u32 %v1171, 7
    %v1173 = vsub.s32 6, %v1172
    %v1174 = vrot.slane %v1143, %v1173
    %v1175 = vlaneseq
    %v1176 = vshrl.u32 %v1175, 7
    %v1177 = vsub.s32 7, %v1176
    %v1178 = vrot.slane %v1143, %v1177
    %v1179 = vlaneseq
    %v1180 = vshrl.u32 %v1179, 7
    %v1181 = vsub.s32 0, %v1180
    %v1182 = vrot.slane %v1144, %v1181
    %v1183 = vlaneseq
    %v1184 = vshrl.u32 %v1183, 7
    %v1185 = vsub.s32 1, %v1184
    %v1186 = vrot.slane %v1144, %v1185
    %v1187 = vlaneseq
    %v1188 = vshrl.u32 %v1187, 7
    %v1189 = vsub.s32 2, %v1188
    %v1190 = vrot.slane %v1144, %v1189
    %v1191 = vlaneseq
    %v1192 = vshrl.u32 %v1191, 7
    %v1193 = vsub.s32 3, %v1192
    %v1194 = vrot.slane %v1144, %v1193
    %v1195 = vlaneseq
    %v1196 = vshrl.u32 %v1195, 7
    %v1197 = vsub.s32 4, %v1196
    %v1198 = vrot.slane %v1144, %v1197
    %v1199 = vlaneseq
    %v1200 = vshrl.u32 %v1199, 7
    %v1201 = vsub.s32 5, %v1200
    %v1202 = vrot.slane %v1144, %v1201
    %v1203 = vlaneseq
    %v1204 = vshrl.u32 %v1203, 7
    %v1205 = vsub.s32 6, %v1204
    %v1206 = vrot.slane %v1144, %v1205
    %v1207 = vlaneseq
    %v1208 = vshrl.u32 %v1207, 7
    %v1209 = vsub.s32 7, %v1208
    %v1210 = vrot.slane %v1144, %v1209
    %v1355 = vunpack.c.l.b16 %v1015
    %v1356 = vunpack.c.h.b16 %v1015
    %v1357 = vunpack.c.l.b16 %v1016
    %v1358 = vunpack.c.h.b16 %v1016
    %v1359 = vunpack.c.l.b16 %v1017
    %v1360 = vunpack.c.h.b16 %v1017
    %v1361 = vunpack.c.l.b16 %v1018
    %v1362 = vunpack.c.h.b16 %v1018
    %v1363 = vunpack.c.l.b16 %v1019
    %v1364 = vunpack.c.h.b16 %v1019
    %v1365 = vunpack.c.l.b16 %v1020
    %v1366 = vunpack.c.h.b16 %v1020
    %v1367 = vunpack.c.l.b16 %v1021
    %v1368 = vunpack.c.h.b16 %v1021
    %v1369 = vunpack.c.l.b16 %v1022
    %v1370 = vunpack.c.h.b16 %v1022
    %v1371 = vunpack.c.l.b16 %v1023
    %v1372 = vunpack.c.h.b16 %v1023
    %v1373 = vunpack.c.l.b16 %v1024
    %v1374 = vunpack.c.h.b16 %v1024
    %v1375 = vunpack.c.l.b16 %v1025
    %v1376 = vunpack.c.h.b16 %v1025
    %v1377 = vunpack.c.l.b16 %v1026
    %v1378 = vunpack.c.h.b16 %v1026
    %v1379 = vunpack.c.l.b16 %v1027
    %v1380 = vunpack.c.h.b16 %v1027
    %v1381 = vunpack.c.l.b16 %v1028
    %v1382 = vunpack.c.h.b16 %v1028
    %v1383 = vunpack.c.l.b16 %v1029
    %v1384 = vunpack.c.h.b16 %v1029
    %v1385 = vunpack.c.l.b16 %v1030
    %v1386 = vunpack.c.h.b16 %v1030
    %v1387 = vunpack.c.l.b16 %v1031
    %v1388 = vunpack.c.h.b16 %v1031
    %v1389 = vunpack.c.l.b16 %v1032
    %v1390 = vunpack.c.h.b16 %v1032
    %v1391 = vunpack.c.l.b16 %v1033
    %v1392 = vunpack.c.h.b16 %v1033
    %v1393 = vunpack.c.l.b16 %v1034
    %v1394 = vunpack.c.h.b16 %v1034
    %v1395 = vunpack.c.l.b16 %v1035
    %v1396 = vunpack.c.h.b16 %v1035
    %v1397 = vunpack.c.l.b16 %v1036
    %v1398 = vunpack.c.h.b16 %v1036
    %v1399 = vunpack.c.l.b16 %v1037
    %v1400 = vunpack.c.h.b16 %v1037
    %v1401 = vunpack.c.l.b16 %v1038
    %v1402 = vunpack.c.h.b16 %v1038
    %v1403 = vunpack.c.l.b16 %v1039
    %v1404 = vunpack.c.h.b16 %v1039
    %v1405 = vunpack.c.l.b16 %v1040
    %v1406 = vunpack.c.h.b16 %v1040
    %v1407 = vunpack.c.l.b16 %v1041
    %v1408 = vunpack.c.h.b16 %v1041
    %v1409 = vunpack.c.l.b16 %v1042
    %v1410 = vunpack.c.h.b16 %v1042
    %v1411 = vunpack.c.l.b16 %v1043
    %v1412 = vunpack.c.h.b16 %v1043
    %v1413 = vunpack.c.l.b16 %v1044
    %v1414 = vunpack.c.h.b16 %v1044
    %v1415 = vunpack.c.l.b16 %v1045
    %v1416 = vunpack.c.h.b16 %v1045
    %v1417 = vunpack.c.l.b16 %v1046
    %v1418 = vunpack.c.h.b16 %v1046
    %v1419 = vunpack.c.l.b16 %v1047
    %v1420 = vunpack.c.h.b16 %v1047
    %v1421 = vunpack.c.l.b16 %v1048
    %v1422 = vunpack.c.h.b16 %v1048
    %v1423 = vunpack.c.l.b16 %v1049
    %v1424 = vunpack.c.h.b16 %v1049
    %v1425 = vunpack.c.l.b16 %v1050
    %v1426 = vunpack.c.h.b16 %v1050
    %v1427 = vunpack.c.l.b16 %v1051
    %v1428 = vunpack.c.h.b16 %v1051
    %v1429 = vunpack.c.l.b16 %v1052
    %v1430 = vunpack.c.h.b16 %v1052
    %v1431 = vunpack.c.l.b16 %v1053
    %v1432 = vunpack.c.h.b16 %v1053
    %v1433 = vunpack.c.l.b16 %v1054
    %v1434 = vunpack.c.h.b16 %v1054
    %v1435 = vunpack.c.l.b16 %v1055
    %v1436 = vunpack.c.h.b16 %v1055
    %v1437 = vunpack.c.l.b16 %v1056
    %v1438 = vunpack.c.h.b16 %v1056
    %v1439 = vunpack.c.l.b16 %v1057
    %v1440 = vunpack.c.h.b16 %v1057
    %v1441 = vunpack.c.l.b16 %v1058
    %v1442 = vunpack.c.h.b16 %v1058
    %v1443 = vunpack.c.l.b16 %v1059
    %v1444 = vunpack.c.h.b16 %v1059
    %v1445 = vunpack.c.l.b16 %v1060
    %v1446 = vunpack.c.h.b16 %v1060
    %v1447 = vunpack.c.l.b16 %v1061
    %v1448 = vunpack.c.h.b16 %v1061
    %v1449 = vunpack.c.l.b16 %v1062
    %v1450 = vunpack.c.h.b16 %v1062
    %v1451 = vunpack.c.l.b16 %v1063
    %v1452 = vunpack.c.h.b16 %v1063
    %v1453 = vunpack.c.l.b16 %v1064
    %v1454 = vunpack.c.h.b16 %v1064
    %v1455 = vunpack.c.l.b16 %v1065
    %v1456 = vunpack.c.h.b16 %v1065
    %v1457 = vunpack.c.l.b16 %v1066
    %v1458 = vunpack.c.h.b16 %v1066
    %v1459 = vunpack.c.l.b16 %v1067
    %v1460 = vunpack.c.h.b16 %v1067
    %v1461 = vunpack.c.l.b16 %v1068
    %v1462 = vunpack.c.h.b16 %v1068
    %v1463 = vunpack.c.l.b16 %v1069
    %v1464 = vunpack.c.h.b16 %v1069
    %v1465 = vunpack.c.l.b16 %v1070
    %v1466 = vunpack.c.h.b16 %v1070
    %v1467 = vunpack.c.l.b16 %v1071
    %v1468 = vunpack.c.h.b16 %v1071
    %v1469 = vunpack.c.l.b16 %v1072
    %v1470 = vunpack.c.h.b16 %v1072
    %v1471 = vunpack.c.l.b16 %v1073
    %v1472 = vunpack.c.h.b16 %v1073
    %v1473 = vunpack.c.l.b16 %v1074
    %v1474 = vunpack.c.h.b16 %v1074
    %v1475 = vunpack.c.l.b16 %v1075
    %v1476 = vunpack.c.h.b16 %v1075
    %v1477 = vunpack.c.l.b16 %v1076
    %v1478 = vunpack.c.h.b16 %v1076
    %v1479 = vunpack.c.l.b16 %v1077
    %v1480 = vunpack.c.h.b16 %v1077
    %v1481 = vunpack.c.l.b16 %v1078
    %v1482 = vunpack.c.h.b16 %v1078
    %v1483 = vunpack.c.l.b16 %v1079
    %v1484 = vunpack.c.h.b16 %v1079
    %v1485 = vunpack.c.l.b16 %v1080
    %v1486 = vunpack.c.h.b16 %v1080
    %v1487 = vunpack.c.l.b16 %v1081
    %v1488 = vunpack.c.h.b16 %v1081
    %v1489 = vunpack.c.l.b16 %v1082
    %v1490 = vunpack.c.h.b16 %v1082
    %v1491 = vunpack.c.l.b16 %v1083
    %v1492 = vunpack.c.h.b16 %v1083
    %v1493 = vunpack.c.l.b16 %v1084
    %v1494 = vunpack.c.h.b16 %v1084
    %v1495 = vunpack.c.l.b16 %v1085
    %v1496 = vunpack.c.h.b16 %v1085
    %v1497 = vunpack.c.l.b16 %v1086
    %v1498 = vunpack.c.h.b16 %v1086
    %v1499 = vunpack.c.l.b16 %v1087
    %v1500 = vunpack.c.h.b16 %v1087
    %v1501 = vunpack.c.l.b16 %v1088
    %v1502 = vunpack.c.h.b16 %v1088
    %v1503 = vunpack.c.l.b16 %v1089
    %v1504 = vunpack.c.h.b16 %v1089
    %v1505 = vunpack.c.l.b16 %v1090
    %v1506 = vunpack.c.h.b16 %v1090
    %v1507 = vunpack.c.l.b16 %v1091
    %v1508 = vunpack.c.h.b16 %v1091
    %v1509 = vunpack.c.l.b16 %v1092
    %v1510 = vunpack.c.h.b16 %v1092
    %v1511 = vunpack.c.l.b16 %v1093
    %v1512 = vunpack.c.h.b16 %v1093
    %v1513 = vunpack.c.l.b16 %v1094
    %v1514 = vunpack.c.h.b16 %v1094
    %v1515 = vunpack.c.l.b16 %v1095
    %v1516 = vunpack.c.h.b16 %v1095
    %v1517 = vunpack.c.l.b16 %v1096
    %v1518 = vunpack.c.h.b16 %v1096
    %v1519 = vunpack.c.l.b16 %v1097
    %v1520 = vunpack.c.h.b16 %v1097
    %v1521 = vunpack.c.l.b16 %v1098
    %v1522 = vunpack.c.h.b16 %v1098
    %v1523 = vunpack.c.l.b16 %v1099
    %v1524 = vunpack.c.h.b16 %v1099
    %v1525 = vunpack.c.l.b16 %v1100
    %v1526 = vunpack.c.h.b16 %v1100
    %v1527 = vunpack.c.l.b16 %v1101
    %v1528 = vunpack.c.h.b16 %v1101
    %v1529 = vunpack.c.l.b16 %v1102
    %v1530 = vunpack.c.h.b16 %v1102
    %v1531 = vunpack.c.l.b16 %v1103
    %v1532 = vunpack.c.h.b16 %v1103
    %v1533 = vunpack.c.l.b16 %v1104
    %v1534 = vunpack.c.h.b16 %v1104
    %v1535 = vunpack.c.l.b16 %v1105
    %v1536 = vunpack.c.h.b16 %v1105
    %v1537 = vunpack.c.l.b16 %v1106
    %v1538 = vunpack.c.h.b16 %v1106
    %v1539 = vunpack.c.l.b16 %v1107
    %v1540 = vunpack.c.h.b16 %v1107
    %v1541 = vunpack.c.l.b16 %v1108
    %v1542 = vunpack.c.h.b16 %v1108
    %v1543 = vunpack.c.l.b16 %v1109
    %v1544 = vunpack.c.h.b16 %v1109
    %v1545 = vunpack.c.l.b16 %v1110
    %v1546 = vunpack.c.h.b16 %v1110
    %v1547 = vunpack.c.l.b16 %v1111
    %v1548 = vunpack.c.h.b16 %v1111
    %v1549 = vunpack.c.l.b16 %v1112
    %v1550 = vunpack.c.h.b16 %v1112
    %v1551 = vunpack.c.l.b16 %v1113
    %v1552 = vunpack.c.h.b16 %v1113
    %v1553 = vunpack.c.l.b16 %v1114
    %v1554 = vunpack.c.h.b16 %v1114
    %v1555 = vunpack.c.l.b16 %v1115
    %v1556 = vunpack.c.h.b16 %v1115
    %v1557 = vunpack.c.l.b16 %v1116
    %v1558 = vunpack.c.h.b16 %v1116
    %v1559 = vunpack.c.l.b16 %v1117
    %v1560 = vunpack.c.h.b16 %v1117
    %v1561 = vunpack.c.l.b16 %v1118
    %v1562 = vunpack.c.h.b16 %v1118
    %v1563 = vunpack.c.l.b16 %v1119
    %v1564 = vunpack.c.h.b16 %v1119
    %v1565 = vunpack.c.l.b16 %v1120
    %v1566 = vunpack.c.h.b16 %v1120
    %v1567 = vunpack.c.l.b16 %v1121
    %v1568 = vunpack.c.h.b16 %v1121
    %v1569 = vunpack.c.l.b16 %v1122
    %v1570 = vunpack.c.h.b16 %v1122
    %v1571 = vunpack.c.l.b16 %v1123
    %v1572 = vunpack.c.h.b16 %v1123
    %v1573 = vunpack.c.l.b16 %v1124
    %v1574 = vunpack.c.h.b16 %v1124
    %v1575 = vunpack.c.l.b16 %v1125
    %v1576 = vunpack.c.h.b16 %v1125
    %v1577 = vunpack.c.l.b16 %v1126
    %v1578 = vunpack.c.h.b16 %v1126
    %v1579 = vunpack.c.l.b16 %v1127
    %v1580 = vunpack.c.h.b16 %v1127
    %v1581 = vunpack.c.l.b16 %v1128
    %v1582 = vunpack.c.h.b16 %v1128
    %v1583 = vunpack.c.l.b16 %v1129
    %v1584 = vunpack.c.h.b16 %v1129
    %v1585 = vunpack.c.l.b16 %v1130
    %v1586 = vunpack.c.h.b16 %v1130
    %v1587 = vunpack.c.l.b16 %v1131
    %v1588 = vunpack.c.h.b16 %v1131
    %v1589 = vunpack.c.l.b16 %v1132
    %v1590 = vunpack.c.h.b16 %v1132
    %v1591 = vunpack.c.l.b16 %v1133
    %v1592 = vunpack.c.h.b16 %v1133
    %v1593 = vunpack.c.l.b16 %v1134
    %v1594 = vunpack.c.h.b16 %v1134
    %v1595 = vunpack.c.l.b16 %v1135
    %v1596 = vunpack.c.h.b16 %v1135
    %v1597 = vunpack.c.l.b16 %v1136
    %v1598 = vunpack.c.h.b16 %v1136
    %v1599 = vunpack.c.l.b16 %v1137
    %v1600 = vunpack.c.h.b16 %v1137
    %v1601 = vunpack.c.l.b16 %v1138
    %v1602 = vunpack.c.h.b16 %v1138
    %v1603 = vunpack.c.l.b16 %v1139
    %v1604 = vunpack.c.h.b16 %v1139
    %v1605 = vunpack.c.l.b16 %v1140
    %v1606 = vunpack.c.h.b16 %v1140
    %v1607 = vunpack.c.l.b16 %v1141
    %v1608 = vunpack.c.h.b16 %v1141
    %v1609 = vunpack.c.l.b16 %v1142
    %v1610 = vunpack.c.h.b16 %v1142
    %v1611 = vpack.c.b16 %v1371, %v1355
    %v1612 = vpack.c.b16 %v1372, %v1356
    %v1613 = vpack.c.b16 %v1373, %v1357
    %v1614 = vpack.c.b16 %v1374, %v1358
    %v1615 = vpack.c.b16 %v1375, %v1359
    %v1616 = vpack.c.b16 %v1376, %v1360
    %v1617 = vpack.c.b16 %v1377, %v1361
    %v1618 = vpack.c.b16 %v1378, %v1362
    %v1619 = vpack.c.b16 %v1379, %v1363
    %v1620 = vpack.c.b16 %v1380, %v1364
    %v1621 = vpack.c.b16 %v1381, %v1365
    %v1622 = vpack.c.b16 %v1382, %v1366
    %v1623 = vpack.c.b16 %v1383, %v1367
    %v1624 = vpack.c.b16 %v1384, %v1368
    %v1625 = vpack.c.b16 %v1385, %v1369
    %v1626 = vpack.c.b16 %v1386, %v1370
    %v1627 = vpack.c.b16 %v1403, %v1387
    %v1628 = vpack.c.b16 %v1404, %v1388
    %v1629 = vpack.c.b16 %v1405, %v1389
    %v1630 = vpack.c.b16 %v1406, %v1390
    %v1631 = vpack.c.b16 %v1407, %v1391
    %v1632 = vpack.c.b16 %v1408, %v1392
    %v1633 = vpack.c.b16 %v1409, %v1393
    %v1634 = vpack.c.b16 %v1410, %v1394
    %v1635 = vpack.c.b16 %v1411, %v1395
    %v1636 = vpack.c.b16 %v1412, %v1396
    %v1637 = vpack.c.b16 %v1413, %v1397
    %v1638 = vpack.c.b16 %v1414, %v1398
    %v1639 = vpack.c.b16 %v1415, %v1399
    %v1640 = vpack.c.b16 %v1416, %v1400
    %v1641 = vpack.c.b16 %v1417, %v1401
    %v1642 = vpack.c.b16 %v1418, %v1402
    %v1643 = vpack.c.b16 %v1435, %v1419
    %v1644 = vpack.c.b16 %v1436, %v1420
    %v1645 = vpack.c.b16 %v1437, %v1421
    %v1646 = vpack.c.b16 %v1438, %v1422
    %v1647 = vpack.c.b16 %v1439, %v1423
    %v1648 = vpack.c.b16 %v1440, %v1424
    %v1649 = vpack.c.b16 %v1441, %v1425
    %v1650 = vpack.c.b16 %v1442, %v1426
    %v1651 = vpack.c.b16 %v1443, %v1427
    %v1652 = vpack.c.b16 %v1444, %v1428
    %v1653 = vpack.c.b16 %v1445, %v1429
    %v1654 = vpack.c.b16 %v1446, %v1430
    %v1655 = vpack.c.b16 %v1447, %v1431
    %v1656 = vpack.c.b16 %v1448, %v1432
    %v1657 = vpack.c.b16 %v1449, %v1433
    %v1658 = vpack.c.b16 %v1450, %v1434
    %v1659 = vpack.c.b16 %v1467, %v1451
    %v1660 = vpack.c.b16 %v1468, %v1452
    %v1661 = vpack.c.b16 %v1469, %v1453
    %v1662 = vpack.c.b16 %v1470, %v1454
    %v1663 = vpack.c.b16 %v1471, %v1455
    %v1664 = vpack.c.b16 %v1472, %v1456
    %v1665 = vpack.c.b16 %v1473, %v1457
    %v1666 = vpack.c.b16 %v1474, %v1458
    %v1667 = vpack.c.b16 %v1475, %v1459
    %v1668 = vpack.c.b16 %v1476, %v1460
    %v1669 = vpack.c.b16 %v1477, %v1461
    %v1670 = vpack.c.b16 %v1478, %v1462
    %v1671 = vpack.c.b16 %v1479, %v1463
    %v1672 = vpack.c.b16 %v1480, %v1464
    %v1673 = vpack.c.b16 %v1481, %v1465
    %v1674 = vpack.c.b16 %v1482, %v1466
    %v1675 = vpack.c.b16 %v1499, %v1483
    %v1676 = vpack.c.b16 %v1500, %v1484
    %v1677 = vpack.c.b16 %v1501, %v1485
    %v1678 = vpack.c.b16 %v1502, %v1486
    %v1679 = vpack.c.b16 %v1503, %v1487
    %v1680 = vpack.c.b16 %v1504, %v1488
    %v1681 = vpack.c.b16 %v1505, %v1489
    %v1682 = vpack.c.b16 %v1506, %v1490
    %v1683 = vpack.c.b16 %v1507, %v1491
    %v1684 = vpack.c.b16 %v1508, %v1492
    %v1685 = vpack.c.b16 %v1509, %v1493
    %v1686 = vpack.c.b16 %v1510, %v1494
    %v1687 = vpack.c.b16 %v1511, %v1495
    %v1688 = vpack.c.b16 %v1512, %v1496
    %v1689 = vpack.c.b16 %v1513, %v1497
    %v1690 = vpack.c.b16 %v1514, %v1498
    %v1691 = vpack.c.b16 %v1531, %v1515
    %v1692 = vpack.c.b16 %v1532, %v1516
    %v1693 = vpack.c.b16 %v1533, %v1517
    %v1694 = vpack.c.b16 %v1534, %v1518
    %v1695 = vpack.c.b16 %v1535, %v1519
    %v1696 = vpack.c.b16 %v1536, %v1520
    %v1697 = vpack.c.b16 %v1537, %v1521
    %v1698 = vpack.c.b16 %v1538, %v1522
    %v1699 = vpack.c.b16 %v1539, %v1523
    %v1700 = vpack.c.b16 %v1540, %v1524
    %v1701 = vpack.c.b16 %v1541, %v1525
    %v1702 = vpack.c.b16 %v1542, %v1526
    %v1703 = vpack.c.b16 %v1543, %v1527
    %v1704 = vpack.c.b16 %v1544, %v1528
    %v1705 = vpack.c.b16 %v1545, %v1529
    %v1706 = vpack.c.b16 %v1546, %v1530
    %v1707 = vpack.c.b16 %v1563, %v1547
    %v1708 = vpack.c.b16 %v1564, %v1548
    %v1709 = vpack.c.b16 %v1565, %v1549
    %v1710 = vpack.c.b16 %v1566, %v1550
    %v1711 = vpack.c.b16 %v1567, %v1551
    %v1712 = vpack.c.b16 %v1568, %v1552
    %v1713 = vpack.c.b16 %v1569, %v1553
    %v1714 = vpack.c.b16 %v1570, %v1554
    %v1715 = vpack.c.b16 %v1571, %v1555
    %v1716 = vpack.c.b16 %v1572, %v1556
    %v1717 = vpack.c.b16 %v1573, %v1557
    %v1718 = vpack.c.b16 %v1574, %v1558
    %v1719 = vpack.c.b16 %v1575, %v1559
    %v1720 = vpack.c.b16 %v1576, %v1560
    %v1721 = vpack.c.b16 %v1577, %v1561
    %v1722 = vpack.c.b16 %v1578, %v1562
    %v1723 = vpack.c.b16 %v1595, %v1579
    %v1724 = vpack.c.b16 %v1596, %v1580
    %v1725 = vpack.c.b16 %v1597, %v1581
    %v1726 = vpack.c.b16 %v1598, %v1582
    %v1727 = vpack.c.b16 %v1599, %v1583
    %v1728 = vpack.c.b16 %v1600, %v1584
    %v1729 = vpack.c.b16 %v1601, %v1585
    %v1730 = vpack.c.b16 %v1602, %v1586
    %v1731 = vpack.c.b16 %v1603, %v1587
    %v1732 = vpack.c.b16 %v1604, %v1588
    %v1733 = vpack.c.b16 %v1605, %v1589
    %v1734 = vpack.c.b16 %v1606, %v1590
    %v1735 = vpack.c.b16 %v1607, %v1591
    %v1736 = vpack.c.b16 %v1608, %v1592
    %v1737 = vpack.c.b16 %v1609, %v1593
    %v1738 = vpack.c.b16 %v1610, %v1594
    %1867 = vmatprep.subr.bf16.mxu0 %v1612
    %1868 = vmatpush1.bf16.msra.mxu0 %v1611
    %1869 = vmatprep.subr.bf16.mxu0 %v1628
    %1870 = vmatpush1.bf16.msra.mxu0 %v1627
    %1871 = vmatprep.subr.bf16.mxu0 %v1644
    %1872 = vmatpush1.bf16.msra.mxu0 %v1643
    %1873 = vmatprep.subr.bf16.mxu0 %v1660
    %1874 = vmatpush1.bf16.msra.mxu0 %v1659
    %1875 = vmatprep.subr.bf16.mxu0 %v1676
    %1876 = vmatpush1.bf16.msra.mxu0 %v1675
    %1877 = vmatprep.subr.bf16.mxu0 %v1692
    %1878 = vmatpush1.bf16.msra.mxu0 %v1691
    %1879 = vmatprep.subr.bf16.mxu0 %v1708
    %1880 = vmatpush1.bf16.msra.mxu0 %v1707
    %1881 = vmatprep.subr.bf16.mxu0 %v1724
    %1882 = vmatpush1.bf16.msra.mxu0 %v1723
    %1883 = vmatprep.subr.bf16.mxu0 0
    %1884 = vmatpush1.bf16.msra.mxu0 0
    %1885 = vmatprep.subr.bf16.mxu0 0
    %1886 = vmatpush1.bf16.msra.mxu0 0
    %1887 = vmatprep.subr.bf16.mxu0 0
    %1888 = vmatpush1.bf16.msra.mxu0 0
    %1889 = vmatprep.subr.bf16.mxu0 0
    %1890 = vmatpush1.bf16.msra.mxu0 0
    %1891 = vmatprep.subr.bf16.mxu0 0
    %1892 = vmatpush1.bf16.msra.mxu0 0
    %1893 = vmatprep.subr.bf16.mxu0 0
    %1894 = vmatpush1.bf16.msra.mxu0 0
    %1895 = vmatprep.subr.bf16.mxu0 0
    %1896 = vmatpush1.bf16.msra.mxu0 0
    %1897 = vmatprep.subr.bf16.mxu0 0
    %1898 = vmatpush1.bf16.msra.mxu0 0
    %1899 = vmatprep.mubr.bf16.mxu0 0
    %1900 = vmatmul.mubr.bf16.gmra.mrb[0].mxu0 %v1014
    %v1901 = vpop.f32.mrb[0].mxu0
    %v1902 = vadd.f32 %v1150, %v1901
    %v1903 = vpop.f32.mrb[0].mxu0
    %v1904 = vadd.f32 %v1154, %v1903
    %v1905 = vpop.f32.mrb[0].mxu0
    %v1906 = vadd.f32 %v1150, %v1905
    %v1907 = vpop.f32.mrb[0].mxu0
    %v1908 = vadd.f32 %v1154, %v1907
    %1909 = vdwg.mxu0
    %1910 = vmatprep.subr.bf16.mxu0 %v1614
    %1911 = vmatpush1.bf16.msra.mxu0 %v1613
    %1912 = vmatprep.subr.bf16.mxu0 %v1630
    %1913 = vmatpush1.bf16.msra.mxu0 %v1629
    %1914 = vmatprep.subr.bf16.mxu0 %v1646
    %1915 = vmatpush1.bf16.msra.mxu0 %v1645
    %1916 = vmatprep.subr.bf16.mxu0 %v1662
    %1917 = vmatpush1.bf16.msra.mxu0 %v1661
    %1918 = vmatprep.subr.bf16.mxu0 %v1678
    %1919 = vmatpush1.bf16.msra.mxu0 %v1677
    %1920 = vmatprep.subr.bf16.mxu0 %v1694
    %1921 = vmatpush1.bf16.msra.mxu0 %v1693
    %1922 = vmatprep.subr.bf16.mxu0 %v1710
    %1923 = vmatpush1.bf16.msra.mxu0 %v1709
    %1924 = vmatprep.subr.bf16.mxu0 %v1726
    %1925 = vmatpush1.bf16.msra.mxu0 %v1725
    %1926 = vmatprep.subr.bf16.mxu0 0
    %1927 = vmatpush1.bf16.msra.mxu0 0
    %1928 = vmatprep.subr.bf16.mxu0 0
    %1929 = vmatpush1.bf16.msra.mxu0 0
    %1930 = vmatprep.subr.bf16.mxu0 0
    %1931 = vmatpush1.bf16.msra.mxu0 0
    %1932 = vmatprep.subr.bf16.mxu0 0
    %1933 = vmatpush1.bf16.msra.mxu0 0
    %1934 = vmatprep.subr.bf16.mxu0 0
    %1935 = vmatpush1.bf16.msra.mxu0 0
    %1936 = vmatprep.subr.bf16.mxu0 0
    %1937 = vmatpush1.bf16.msra.mxu0 0
    %1938 = vmatprep.subr.bf16.mxu0 0
    %1939 = vmatpush1.bf16.msra.mxu0 0
    %1940 = vmatprep.subr.bf16.mxu0 0
    %1941 = vmatpush1.bf16.msra.mxu0 0
    %1942 = vmatprep.mubr.bf16.mxu0 0
    %1943 = vmatmul.mubr.bf16.gmra.mrb[0].mxu0 %v1014
    %v1944 = vpop.f32.mrb[0].mxu0
    %v1945 = vadd.f32 %v1158, %v1944
    %v1946 = vpop.f32.mrb[0].mxu0
    %v1947 = vadd.f32 %v1162, %v1946
    %v1948 = vpop.f32.mrb[0].mxu0
    %v1949 = vadd.f32 %v1158, %v1948
    %v1950 = vpop.f32.mrb[0].mxu0
    %v1951 = vadd.f32 %v1162, %v1950
    %1952 = vdwg.mxu0
    %1953 = vmatprep.subr.bf16.mxu0 %v1616
    %1954 = vmatpush1.bf16.msra.mxu0 %v1615
    %1955 = vmatprep.subr.bf16.mxu0 %v1632
    %1956 = vmatpush1.bf16.msra.mxu0 %v1631
    %1957 = vmatprep.subr.bf16.mxu0 %v1648
    %1958 = vmatpush1.bf16.msra.mxu0 %v1647
    %1959 = vmatprep.subr.bf16.mxu0 %v1664
    %1960 = vmatpush1.bf16.msra.mxu0 %v1663
    %1961 = vmatprep.subr.bf16.mxu0 %v1680
    %1962 = vmatpush1.bf16.msra.mxu0 %v1679
    %1963 = vmatprep.subr.bf16.mxu0 %v1696
    %1964 = vmatpush1.bf16.msra.mxu0 %v1695
    %1965 = vmatprep.subr.bf16.mxu0 %v1712
    %1966 = vmatpush1.bf16.msra.mxu0 %v1711
    %1967 = vmatprep.subr.bf16.mxu0 %v1728
    %1968 = vmatpush1.bf16.msra.mxu0 %v1727
    %1969 = vmatprep.subr.bf16.mxu0 0
    %1970 = vmatpush1.bf16.msra.mxu0 0
    %1971 = vmatprep.subr.bf16.mxu0 0
    %1972 = vmatpush1.bf16.msra.mxu0 0
    %1973 = vmatprep.subr.bf16.mxu0 0
    %1974 = vmatpush1.bf16.msra.mxu0 0
    %1975 = vmatprep.subr.bf16.mxu0 0
    %1976 = vmatpush1.bf16.msra.mxu0 0
    %1977 = vmatprep.subr.bf16.mxu0 0
    %1978 = vmatpush1.bf16.msra.mxu0 0
    %1979 = vmatprep.subr.bf16.mxu0 0
    %1980 = vmatpush1.bf16.msra.mxu0 0
    %1981 = vmatprep.subr.bf16.mxu0 0
    %1982 = vmatpush1.bf16.msra.mxu0 0
    %1983 = vmatprep.subr.bf16.mxu0 0
    %1984 = vmatpush1.bf16.msra.mxu0 0
    %1985 = vmatprep.mubr.bf16.mxu0 0
    %1986 = vmatmul.mubr.bf16.gmra.mrb[0].mxu0 %v1014
    %v1987 = vpop.f32.mrb[0].mxu0
    %v1988 = vadd.f32 %v1166, %v1987
    %v1989 = vpop.f32.mrb[0].mxu0
    %v1990 = vadd.f32 %v1170, %v1989
    %v1991 = vpop.f32.mrb[0].mxu0
    %v1992 = vadd.f32 %v1166, %v1991
    %v1993 = vpop.f32.mrb[0].mxu0
    %v1994 = vadd.f32 %v1170, %v1993
    %1995 = vdwg.mxu0
    %1996 = vmatprep.subr.bf16.mxu0 %v1618
    %1997 = vmatpush1.bf16.msra.mxu0 %v1617
    %1998 = vmatprep.subr.bf16.mxu0 %v1634
    %1999 = vmatpush1.bf16.msra.mxu0 %v1633
    %2000 = vmatprep.subr.bf16.mxu0 %v1650
    %2001 = vmatpush1.bf16.msra.mxu0 %v1649
    %2002 = vmatprep.subr.bf16.mxu0 %v1666
    %2003 = vmatpush1.bf16.msra.mxu0 %v1665
    %2004 = vmatprep.subr.bf16.mxu0 %v1682
    %2005 = vmatpush1.bf16.msra.mxu0 %v1681
    %2006 = vmatprep.subr.bf16.mxu0 %v1698
    %2007 = vmatpush1.bf16.msra.mxu0 %v1697
    %2008 = vmatprep.subr.bf16.mxu0 %v1714
    %2009 = vmatpush1.bf16.msra.mxu0 %v1713
    %2010 = vmatprep.subr.bf16.mxu0 %v1730
    %2011 = vmatpush1.bf16.msra.mxu0 %v1729
    %2012 = vmatprep.subr.bf16.mxu0 0
    %2013 = vmatpush1.bf16.msra.mxu0 0
    %2014 = vmatprep.subr.bf16.mxu0 0
    %2015 = vmatpush1.bf16.msra.mxu0 0
    %2016 = vmatprep.subr.bf16.mxu0 0
    %2017 = vmatpush1.bf16.msra.mxu0 0
    %2018 = vmatprep.subr.bf16.mxu0 0
    %2019 = vmatpush1.bf16.msra.mxu0 0
    %2020 = vmatprep.subr.bf16.mxu0 0
    %2021 = vmatpush1.bf16.msra.mxu0 0
    %2022 = vmatprep.subr.bf16.mxu0 0
    %2023 = vmatpush1.bf16.msra.mxu0 0
    %2024 = vmatprep.subr.bf16.mxu0 0
    %2025 = vmatpush1.bf16.msra.mxu0 0
    %2026 = vmatprep.subr.bf16.mxu0 0
    %2027 = vmatpush1.bf16.msra.mxu0 0
    %2028 = vmatprep.mubr.bf16.mxu0 0
    %2029 = vmatmul.mubr.bf16.gmra.mrb[0].mxu0 %v1014
    %v2030 = vpop.f32.mrb[0].mxu0
    %v2031 = vadd.f32 %v1174, %v2030
    %v2032 = vpop.f32.mrb[0].mxu0
    %v2033 = vadd.f32 %v1178, %v2032
    %v2034 = vpop.f32.mrb[0].mxu0
    %v2035 = vadd.f32 %v1174, %v2034
    %v2036 = vpop.f32.mrb[0].mxu0
    %v2037 = vadd.f32 %v1178, %v2036
    %2038 = vdwg.mxu0
    %2039 = vmatprep.subr.bf16.mxu0 %v1620
    %2040 = vmatpush1.bf16.msra.mxu0 %v1619
    %2041 = vmatprep.subr.bf16.mxu0 %v1636
    %2042 = vmatpush1.bf16.msra.mxu0 %v1635
    %2043 = vmatprep.subr.bf16.mxu0 %v1652
    %2044 = vmatpush1.bf16.msra.mxu0 %v1651
    %2045 = vmatprep.subr.bf16.mxu0 %v1668
    %2046 = vmatpush1.bf16.msra.mxu0 %v1667
    %2047 = vmatprep.subr.bf16.mxu0 %v1684
    %2048 = vmatpush1.bf16.msra.mxu0 %v1683
    %2049 = vmatprep.subr.bf16.mxu0 %v1700
    %2050 = vmatpush1.bf16.msra.mxu0 %v1699
    %2051 = vmatprep.subr.bf16.mxu0 %v1716
    %2052 = vmatpush1.bf16.msra.mxu0 %v1715
    %2053 = vmatprep.subr.bf16.mxu0 %v1732
    %2054 = vmatpush1.bf16.msra.mxu0 %v1731
    %2055 = vmatprep.subr.bf16.mxu0 0
    %2056 = vmatpush1.bf16.msra.mxu0 0
    %2057 = vmatprep.subr.bf16.mxu0 0
    %2058 = vmatpush1.bf16.msra.mxu0 0
    %2059 = vmatprep.subr.bf16.mxu0 0
    %2060 = vmatpush1.bf16.msra.mxu0 0
    %2061 = vmatprep.subr.bf16.mxu0 0
    %2062 = vmatpush1.bf16.msra.mxu0 0
    %2063 = vmatprep.subr.bf16.mxu0 0
    %2064 = vmatpush1.bf16.msra.mxu0 0
    %2065 = vmatprep.subr.bf16.mxu0 0
    %2066 = vmatpush1.bf16.msra.mxu0 0
    %2067 = vmatprep.subr.bf16.mxu0 0
    %2068 = vmatpush1.bf16.msra.mxu0 0
    %2069 = vmatprep.subr.bf16.mxu0 0
    %2070 = vmatpush1.bf16.msra.mxu0 0
    %2071 = vmatprep.mubr.bf16.mxu0 0
    %2072 = vmatmul.mubr.bf16.gmra.mrb[0].mxu0 %v1014
    %v2073 = vpop.f32.mrb[0].mxu0
    %v2074 = vadd.f32 %v1182, %v2073
    %v2075 = vpop.f32.mrb[0].mxu0
    %v2076 = vadd.f32 %v1186, %v2075
    %v2077 = vpop.f32.mrb[0].mxu0
    %v2078 = vadd.f32 %v1182, %v2077
    %v2079 = vpop.f32.mrb[0].mxu0
    %v2080 = vadd.f32 %v1186, %v2079
    %2081 = vdwg.mxu0
    %2082 = vmatprep.subr.bf16.mxu0 %v1622
    %2083 = vmatpush1.bf16.msra.mxu0 %v1621
    %2084 = vmatprep.subr.bf16.mxu0 %v1638
    %2085 = vmatpush1.bf16.msra.mxu0 %v1637
    %2086 = vmatprep.subr.bf16.mxu0 %v1654
    %2087 = vmatpush1.bf16.msra.mxu0 %v1653
    %2088 = vmatprep.subr.bf16.mxu0 %v1670
    %2089 = vmatpush1.bf16.msra.mxu0 %v1669
    %2090 = vmatprep.subr.bf16.mxu0 %v1686
    %2091 = vmatpush1.bf16.msra.mxu0 %v1685
    %2092 = vmatprep.subr.bf16.mxu0 %v1702
    %2093 = vmatpush1.bf16.msra.mxu0 %v1701
    %2094 = vmatprep.subr.bf16.mxu0 %v1718
    %2095 = vmatpush1.bf16.msra.mxu0 %v1717
    %2096 = vmatprep.subr.bf16.mxu0 %v1734
    %2097 = vmatpush1.bf16.msra.mxu0 %v1733
    %2098 = vmatprep.subr.bf16.mxu0 0
    %2099 = vmatpush1.bf16.msra.mxu0 0
    %2100 = vmatprep.subr.bf16.mxu0 0
    %2101 = vmatpush1.bf16.msra.mxu0 0
    %2102 = vmatprep.subr.bf16.mxu0 0
    %2103 = vmatpush1.bf16.msra.mxu0 0
    %2104 = vmatprep.subr.bf16.mxu0 0
    %2105 = vmatpush1.bf16.msra.mxu0 0
    %2106 = vmatprep.subr.bf16.mxu0 0
    %2107 = vmatpush1.bf16.msra.mxu0 0
    %2108 = vmatprep.subr.bf16.mxu0 0
    %2109 = vmatpush1.bf16.msra.mxu0 0
    %2110 = vmatprep.subr.bf16.mxu0 0
    %2111 = vmatpush1.bf16.msra.mxu0 0
    %2112 = vmatprep.subr.bf16.mxu0 0
    %2113 = vmatpush1.bf16.msra.mxu0 0
    %2114 = vmatprep.mubr.bf16.mxu0 0
    %2115 = vmatmul.mubr.bf16.gmra.mrb[0].mxu0 %v1014
    %v2116 = vpop.f32.mrb[0].mxu0
    %v2117 = vadd.f32 %v1190, %v2116
    %v2118 = vpop.f32.mrb[0].mxu0
    %v2119 = vadd.f32 %v1194, %v2118
    %v2120 = vpop.f32.mrb[0].mxu0
    %v2121 = vadd.f32 %v1190, %v2120
    %v2122 = vpop.f32.mrb[0].mxu0
    %v2123 = vadd.f32 %v1194, %v2122
    %2124 = vdwg.mxu0
    %2125 = vmatprep.subr.bf16.mxu0 %v1624
    %2126 = vmatpush1.bf16.msra.mxu0 %v1623
    %2127 = vmatprep.subr.bf16.mxu0 %v1640
    %2128 = vmatpush1.bf16.msra.mxu0 %v1639
    %2129 = vmatprep.subr.bf16.mxu0 %v1656
    %2130 = vmatpush1.bf16.msra.mxu0 %v1655
    %2131 = vmatprep.subr.bf16.mxu0 %v1672
    %2132 = vmatpush1.bf16.msra.mxu0 %v1671
    %2133 = vmatprep.subr.bf16.mxu0 %v1688
    %2134 = vmatpush1.bf16.msra.mxu0 %v1687
    %2135 = vmatprep.subr.bf16.mxu0 %v1704
    %2136 = vmatpush1.bf16.msra.mxu0 %v1703
    %2137 = vmatprep.subr.bf16.mxu0 %v1720
    %2138 = vmatpush1.bf16.msra.mxu0 %v1719
    %2139 = vmatprep.subr.bf16.mxu0 %v1736
    %2140 = vmatpush1.bf16.msra.mxu0 %v1735
    %2141 = vmatprep.subr.bf16.mxu0 0
    %2142 = vmatpush1.bf16.msra.mxu0 0
    %2143 = vmatprep.subr.bf16.mxu0 0
    %2144 = vmatpush1.bf16.msra.mxu0 0
    %2145 = vmatprep.subr.bf16.mxu0 0
    %2146 = vmatpush1.bf16.msra.mxu0 0
    %2147 = vmatprep.subr.bf16.mxu0 0
    %2148 = vmatpush1.bf16.msra.mxu0 0
    %2149 = vmatprep.subr.bf16.mxu0 0
    %2150 = vmatpush1.bf16.msra.mxu0 0
    %2151 = vmatprep.subr.bf16.mxu0 0
    %2152 = vmatpush1.bf16.msra.mxu0 0
    %2153 = vmatprep.subr.bf16.mxu0 0
    %2154 = vmatpush1.bf16.msra.mxu0 0
    %2155 = vmatprep.subr.bf16.mxu0 0
    %2156 = vmatpush1.bf16.msra.mxu0 0
    %2157 = vmatprep.mubr.bf16.mxu0 0
    %2158 = vmatmul.mubr.bf16.gmra.mrb[0].mxu0 %v1014
    %v2159 = vpop.f32.mrb[0].mxu0
    %v2160 = vadd.f32 %v1198, %v2159
    %v2161 = vpop.f32.mrb[0].mxu0
    %v2162 = vadd.f32 %v1202, %v2161
    %v2163 = vpop.f32.mrb[0].mxu0
    %v2164 = vadd.f32 %v1198, %v2163
    %v2165 = vpop.f32.mrb[0].mxu0
    %v2166 = vadd.f32 %v1202, %v2165
    %2167 = vdwg.mxu0
    %2168 = vmatprep.subr.bf16.mxu0 %v1626
    %2169 = vmatpush1.bf16.msra.mxu0 %v1625
    %2170 = vmatprep.subr.bf16.mxu0 %v1642
    %2171 = vmatpush1.bf16.msra.mxu0 %v1641
    %2172 = vmatprep.subr.bf16.mxu0 %v1658
    %2173 = vmatpush1.bf16.msra.mxu0 %v1657
    %2174 = vmatprep.subr.bf16.mxu0 %v1674
    %2175 = vmatpush1.bf16.msra.mxu0 %v1673
    %2176 = vmatprep.subr.bf16.mxu0 %v1690
    %2177 = vmatpush1.bf16.msra.mxu0 %v1689
    %2178 = vmatprep.subr.bf16.mxu0 %v1706
    %2179 = vmatpush1.bf16.msra.mxu0 %v1705
    %2180 = vmatprep.subr.bf16.mxu0 %v1722
    %2181 = vmatpush1.bf16.msra.mxu0 %v1721
    %2182 = vmatprep.subr.bf16.mxu0 %v1738
    %2183 = vmatpush1.bf16.msra.mxu0 %v1737
    %2184 = vmatprep.subr.bf16.mxu0 0
    %2185 = vmatpush1.bf16.msra.mxu0 0
    %2186 = vmatprep.subr.bf16.mxu0 0
    %2187 = vmatpush1.bf16.msra.mxu0 0
    %2188 = vmatprep.subr.bf16.mxu0 0
    %2189 = vmatpush1.bf16.msra.mxu0 0
    %2190 = vmatprep.subr.bf16.mxu0 0
    %2191 = vmatpush1.bf16.msra.mxu0 0
    %2192 = vmatprep.subr.bf16.mxu0 0
    %2193 = vmatpush1.bf16.msra.mxu0 0
    %2194 = vmatprep.subr.bf16.mxu0 0
    %2195 = vmatpush1.bf16.msra.mxu0 0
    %2196 = vmatprep.subr.bf16.mxu0 0
    %2197 = vmatpush1.bf16.msra.mxu0 0
    %2198 = vmatprep.subr.bf16.mxu0 0
    %2199 = vmatpush1.bf16.msra.mxu0 0
    %2200 = vmatprep.mubr.bf16.mxu0 0
    %2201 = vmatmul.mubr.bf16.gmra.mrb[0].mxu0 %v1014
    %v2202 = vpop.f32.mrb[0].mxu0
    %v2203 = vadd.f32 %v1206, %v2202
    %v2204 = vpop.f32.mrb[0].mxu0
    %v2205 = vadd.f32 %v1210, %v2204
    %v2206 = vpop.f32.mrb[0].mxu0
    %v2207 = vadd.f32 %v1206, %v2206
    %v2208 = vpop.f32.mrb[0].mxu0
    %v2209 = vadd.f32 %v1210, %v2208
    %2210 = vdwg.mxu0
    %v2211 = vmax.f32 %v1902, 0.0
    %v2212 = vmax.f32 %v1904, 0.0
    %v2213 = vmax.f32 %v1945, 0.0
    %v2214 = vmax.f32 %v1947, 0.0
    %v2215 = vmax.f32 %v1988, 0.0
    %v2216 = vmax.f32 %v1990, 0.0
    %v2217 = vmax.f32 %v2031, 0.0
    %v2218 = vmax.f32 %v2033, 0.0
    %v2219 = vmax.f32 %v2074, 0.0
    %v2220 = vmax.f32 %v2076, 0.0
    %v2221 = vmax.f32 %v2117, 0.0
    %v2222 = vmax.f32 %v2119, 0.0
    %v2223 = vmax.f32 %v2160, 0.0
    %v2224 = vmax.f32 %v2162, 0.0
    %v2225 = vmax.f32 %v2203, 0.0
    %v2226 = vmax.f32 %v2205, 0.0
    %v2227 = vmax.f32 %v1906, 0.0
    %v2228 = vmax.f32 %v1908, 0.0
    %v2229 = vmax.f32 %v1949, 0.0
    %v2230 = vmax.f32 %v1951, 0.0
    %v2231 = vmax.f32 %v1992, 0.0
    %v2232 = vmax.f32 %v1994, 0.0
    %v2233 = vmax.f32 %v2035, 0.0
    %v2234 = vmax.f32 %v2037, 0.0
    %v2235 = vmax.f32 %v2078, 0.0
    %v2236 = vmax.f32 %v2080, 0.0
    %v2237 = vmax.f32 %v2121, 0.0
    %v2238 = vmax.f32 %v2123, 0.0
    %v2239 = vmax.f32 %v2164, 0.0
    %v2240 = vmax.f32 %v2166, 0.0
    %v2241 = vmax.f32 %v2207, 0.0
    %v2242 = vmax.f32 %v2209, 0.0
    %v2243 = vpack.c.bf16 %v2227, %v2211
    %v2244 = vpack.c.bf16 %v2228, %v2212
    %v2245 = vpack.c.bf16 %v2229, %v2213
    %v2246 = vpack.c.bf16 %v2230, %v2214
    %v2247 = vpack.c.bf16 %v2231, %v2215
    %v2248 = vpack.c.bf16 %v2232, %v2216
    %v2249 = vpack.c.bf16 %v2233, %v2217
    %v2250 = vpack.c.bf16 %v2234, %v2218
    %v2251 = vpack.c.bf16 %v2235, %v2219
    %v2252 = vpack.c.bf16 %v2236, %v2220
    %v2253 = vpack.c.bf16 %v2237, %v2221
    %v2254 = vpack.c.bf16 %v2238, %v2222
    %v2255 = vpack.c.bf16 %v2239, %v2223
    %v2256 = vpack.c.bf16 %v2240, %v2224
    %v2257 = vpack.c.bf16 %v2241, %v2225
    %v2258 = vpack.c.bf16 %v2242, %v2226
    %v2259 = vld [vmem:[#allocation11] sm:$0xf]
    %v2260 = vld [vmem:[#allocation11 + $0x4] sm:$0xf]
    %v2261 = vld [vmem:[#allocation11 + $0x8] sm:$0xf]
    %v2262 = vld [vmem:[#allocation11 + $0xc] sm:$0xf]
    %v2263 = vld [vmem:[#allocation11 + $0x10] sm:$0xf]
    %v2264 = vld [vmem:[#allocation11 + $0x14] sm:$0xf]
    %v2265 = vld [vmem:[#allocation11 + $0x18] sm:$0xf]
    %v2266 = vld [vmem:[#allocation11 + $0x1c] sm:$0xf]
    %v2267 = vld [vmem:[#allocation11 + $0x20] sm:$0xf]
    %v2268 = vld [vmem:[#allocation11 + $0x24] sm:$0xf]
    %v2269 = vld [vmem:[#allocation11 + $0x28] sm:$0xf]
    %v2270 = vld [vmem:[#allocation11 + $0x2c] sm:$0xf]
    %v2271 = vld [vmem:[#allocation11 + $0x30] sm:$0xf]
    %v2272 = vld [vmem:[#allocation11 + $0x34] sm:$0xf]
    %v2273 = vld [vmem:[#allocation11 + $0x38] sm:$0xf]
    %v2274 = vld [vmem:[#allocation11 + $0x3c] sm:$0xf]
    %v2275 = vld [vmem:[#allocation11 + $0x40] sm:$0xf]
    %v2276 = vld [vmem:[#allocation11 + $0x44] sm:$0xf]
    %v2277 = vld [vmem:[#allocation11 + $0x48] sm:$0xf]
    %v2278 = vld [vmem:[#allocation11 + $0x4c] sm:$0xf]
    %v2279 = vld [vmem:[#allocation11 + $0x50] sm:$0xf]
    %v2280 = vld [vmem:[#allocation11 + $0x54] sm:$0xf]
    %v2281 = vld [vmem:[#allocation11 + $0x58] sm:$0xf]
    %v2282 = vld [vmem:[#allocation11 + $0x5c] sm:$0xf]
    %v2283 = vld [vmem:[#allocation11 + $0x60] sm:$0xf]
    %v2284 = vld [vmem:[#allocation11 + $0x64] sm:$0xf]
    %v2285 = vld [vmem:[#allocation11 + $0x68] sm:$0xf]
    %v2286 = vld [vmem:[#allocation11 + $0x6c] sm:$0xf]
    %v2287 = vld [vmem:[#allocation11 + $0x70] sm:$0xf]
    %v2288 = vld [vmem:[#allocation11 + $0x74] sm:$0xf]
    %v2289 = vld [vmem:[#allocation11 + $0x78] sm:$0xf]
    %v2290 = vld [vmem:[#allocation11 + $0x7c] sm:$0xf]
    %v2291 = vld [vmem:[#allocation11 + $0x80] sm:$0xf]
    %v2292 = vld [vmem:[#allocation11 + $0x84] sm:$0xf]
    %v2293 = vld [vmem:[#allocation11 + $0x88] sm:$0xf]
    %v2294 = vld [vmem:[#allocation11 + $0x8c] sm:$0xf]
    %v2295 = vld [vmem:[#allocation11 + $0x90] sm:$0xf]
    %v2296 = vld [vmem:[#allocation11 + $0x94] sm:$0xf]
    %v2297 = vld [vmem:[#allocation11 + $0x98] sm:$0xf]
    %v2298 = vld [vmem:[#allocation11 + $0x9c] sm:$0xf]
    %v2299 = vld [vmem:[#allocation11 + $0xa0] sm:$0xf]
    %v2300 = vld [vmem:[#allocation11 + $0xa4] sm:$0xf]
    %v2301 = vld [vmem:[#allocation11 + $0xa8] sm:$0xf]
    %v2302 = vld [vmem:[#allocation11 + $0xac] sm:$0xf]
    %v2303 = vld [vmem:[#allocation11 + $0xb0] sm:$0xf]
    %v2304 = vld [vmem:[#allocation11 + $0xb4] sm:$0xf]
    %v2305 = vld [vmem:[#allocation11 + $0xb8] sm:$0xf]
    %v2306 = vld [vmem:[#allocation11 + $0xbc] sm:$0xf]
    %v2307 = vld [vmem:[#allocation11 + $0xc0] sm:$0xf]
    %v2308 = vld [vmem:[#allocation11 + $0xc4] sm:$0xf]
    %v2309 = vld [vmem:[#allocation11 + $0xc8] sm:$0xf]
    %v2310 = vld [vmem:[#allocation11 + $0xcc] sm:$0xf]
    %v2311 = vld [vmem:[#allocation11 + $0xd0] sm:$0xf]
    %v2312 = vld [vmem:[#allocation11 + $0xd4] sm:$0xf]
    %v2313 = vld [vmem:[#allocation11 + $0xd8] sm:$0xf]
    %v2314 = vld [vmem:[#allocation11 + $0xdc] sm:$0xf]
    %v2315 = vld [vmem:[#allocation11 + $0xe0] sm:$0xf]
    %v2316 = vld [vmem:[#allocation11 + $0xe4] sm:$0xf]
    %v2317 = vld [vmem:[#allocation11 + $0xe8] sm:$0xf]
    %v2318 = vld [vmem:[#allocation11 + $0xec] sm:$0xf]
    %v2319 = vld [vmem:[#allocation11 + $0xf0] sm:$0xf]
    %v2320 = vld [vmem:[#allocation11 + $0xf4] sm:$0xf]
    %v2321 = vld [vmem:[#allocation11 + $0xf8] sm:$0xf]
    %v2322 = vld [vmem:[#allocation11 + $0xfc] sm:$0xf]
    %v2323 = vld [vmem:[#allocation11 + $0x100] sm:$0xf]
    %v2324 = vld [vmem:[#allocation11 + $0x104] sm:$0xf]
    %v2325 = vld [vmem:[#allocation11 + $0x108] sm:$0xf]
    %v2326 = vld [vmem:[#allocation11 + $0x10c] sm:$0xf]
    %v2327 = vld [vmem:[#allocation11 + $0x110] sm:$0xf]
    %v2328 = vld [vmem:[#allocation11 + $0x114] sm:$0xf]
    %v2329 = vld [vmem:[#allocation11 + $0x118] sm:$0xf]
    %v2330 = vld [vmem:[#allocation11 + $0x11c] sm:$0xf]
    %v2331 = vld [vmem:[#allocation11 + $0x120] sm:$0xf]
    %v2332 = vld [vmem:[#allocation11 + $0x124] sm:$0xf]
    %v2333 = vld [vmem:[#allocation11 + $0x128] sm:$0xf]
    %v2334 = vld [vmem:[#allocation11 + $0x12c] sm:$0xf]
    %v2335 = vld [vmem:[#allocation11 + $0x130] sm:$0xf]
    %v2336 = vld [vmem:[#allocation11 + $0x134] sm:$0xf]
    %v2337 = vld [vmem:[#allocation11 + $0x138] sm:$0xf]
    %v2338 = vld [vmem:[#allocation11 + $0x13c] sm:$0xf]
    %v2339 = vld [vmem:[#allocation11 + $0x140] sm:$0xf]
    %v2340 = vld [vmem:[#allocation11 + $0x144] sm:$0xf]
    %v2341 = vld [vmem:[#allocation11 + $0x148] sm:$0xf]
    %v2342 = vld [vmem:[#allocation11 + $0x14c] sm:$0xf]
    %v2343 = vld [vmem:[#allocation11 + $0x150] sm:$0xf]
    %v2344 = vld [vmem:[#allocation11 + $0x154] sm:$0xf]
    %v2345 = vld [vmem:[#allocation11 + $0x158] sm:$0xf]
    %v2346 = vld [vmem:[#allocation11 + $0x15c] sm:$0xf]
    %v2347 = vld [vmem:[#allocation11 + $0x160] sm:$0xf]
    %v2348 = vld [vmem:[#allocation11 + $0x164] sm:$0xf]
    %v2349 = vld [vmem:[#allocation11 + $0x168] sm:$0xf]
    %v2350 = vld [vmem:[#allocation11 + $0x16c] sm:$0xf]
    %v2351 = vld [vmem:[#allocation11 + $0x170] sm:$0xf]
    %v2352 = vld [vmem:[#allocation11 + $0x174] sm:$0xf]
    %v2353 = vld [vmem:[#allocation11 + $0x178] sm:$0xf]
    %v2354 = vld [vmem:[#allocation11 + $0x17c] sm:$0xf]
    %v2355 = vld [vmem:[#allocation11 + $0x180] sm:$0xf]
    %v2356 = vld [vmem:[#allocation11 + $0x184] sm:$0xf]
    %v2357 = vld [vmem:[#allocation11 + $0x188] sm:$0xf]
    %v2358 = vld [vmem:[#allocation11 + $0x18c] sm:$0xf]
    %v2359 = vld [vmem:[#allocation11 + $0x190] sm:$0xf]
    %v2360 = vld [vmem:[#allocation11 + $0x194] sm:$0xf]
    %v2361 = vld [vmem:[#allocation11 + $0x198] sm:$0xf]
    %v2362 = vld [vmem:[#allocation11 + $0x19c] sm:$0xf]
    %v2363 = vld [vmem:[#allocation11 + $0x1a0] sm:$0xf]
    %v2364 = vld [vmem:[#allocation11 + $0x1a4] sm:$0xf]
    %v2365 = vld [vmem:[#allocation11 + $0x1a8] sm:$0xf]
    %v2366 = vld [vmem:[#allocation11 + $0x1ac] sm:$0xf]
    %v2367 = vld [vmem:[#allocation11 + $0x1b0] sm:$0xf]
    %v2368 = vld [vmem:[#allocation11 + $0x1b4] sm:$0xf]
    %v2369 = vld [vmem:[#allocation11 + $0x1b8] sm:$0xf]
    %v2370 = vld [vmem:[#allocation11 + $0x1bc] sm:$0xf]
    %v2371 = vld [vmem:[#allocation11 + $0x1c0] sm:$0xf]
    %v2372 = vld [vmem:[#allocation11 + $0x1c4] sm:$0xf]
    %v2373 = vld [vmem:[#allocation11 + $0x1c8] sm:$0xf]
    %v2374 = vld [vmem:[#allocation11 + $0x1cc] sm:$0xf]
    %v2375 = vld [vmem:[#allocation11 + $0x1d0] sm:$0xf]
    %v2376 = vld [vmem:[#allocation11 + $0x1d4] sm:$0xf]
    %v2377 = vld [vmem:[#allocation11 + $0x1d8] sm:$0xf]
    %v2378 = vld [vmem:[#allocation11 + $0x1dc] sm:$0xf]
    %v2379 = vld [vmem:[#allocation11 + $0x1e0] sm:$0xf]
    %v2380 = vld [vmem:[#allocation11 + $0x1e4] sm:$0xf]
    %v2381 = vld [vmem:[#allocation11 + $0x1e8] sm:$0xf]
    %v2382 = vld [vmem:[#allocation11 + $0x1ec] sm:$0xf]
    %v2383 = vld [vmem:[#allocation11 + $0x1f0] sm:$0xf]
    %v2384 = vld [vmem:[#allocation11 + $0x1f4] sm:$0xf]
    %v2385 = vld [vmem:[#allocation11 + $0x1f8] sm:$0xf]
    %v2386 = vld [vmem:[#allocation11 + $0x1fc] sm:$0xf]
    %v2387 = vld [vmem:[#allocation11 + $0x200] sm:$0xf]
    %v2388 = vld [vmem:[#allocation11 + $0x204] sm:$0xf]
    %v2389 = vld [vmem:[#allocation11 + $0x208] sm:$0xf]
    %v2390 = vld [vmem:[#allocation11 + $0x20c] sm:$0xf]
    %v2391 = vld [vmem:[#allocation11 + $0x210] sm:$0xf]
    %v2392 = vld [vmem:[#allocation11 + $0x214] sm:$0xf]
    %v2393 = vld [vmem:[#allocation11 + $0x218] sm:$0xf]
    %v2394 = vld [vmem:[#allocation11 + $0x21c] sm:$0xf]
    %v2395 = vld [vmem:[#allocation11 + $0x220] sm:$0xf]
    %v2396 = vld [vmem:[#allocation11 + $0x224] sm:$0xf]
    %v2397 = vld [vmem:[#allocation11 + $0x228] sm:$0xf]
    %v2398 = vld [vmem:[#allocation11 + $0x22c] sm:$0xf]
    %v2399 = vld [vmem:[#allocation11 + $0x230] sm:$0xf]
    %v2400 = vld [vmem:[#allocation11 + $0x234] sm:$0xf]
    %v2401 = vld [vmem:[#allocation11 + $0x238] sm:$0xf]
    %v2402 = vld [vmem:[#allocation11 + $0x23c] sm:$0xf]
    %v2403 = vld [vmem:[#allocation11 + $0x240] sm:$0xf]
    %v2404 = vld [vmem:[#allocation11 + $0x244] sm:$0xf]
    %v2405 = vld [vmem:[#allocation11 + $0x248] sm:$0xf]
    %v2406 = vld [vmem:[#allocation11 + $0x24c] sm:$0xf]
    %v2407 = vld [vmem:[#allocation11 + $0x250] sm:$0xf]
    %v2408 = vld [vmem:[#allocation11 + $0x254] sm:$0xf]
    %v2409 = vld [vmem:[#allocation11 + $0x258] sm:$0xf]
    %v2410 = vld [vmem:[#allocation11 + $0x25c] sm:$0xf]
    %v2411 = vld [vmem:[#allocation11 + $0x260] sm:$0xf]
    %v2412 = vld [vmem:[#allocation11 + $0x264] sm:$0xf]
    %v2413 = vld [vmem:[#allocation11 + $0x268] sm:$0xf]
    %v2414 = vld [vmem:[#allocation11 + $0x26c] sm:$0xf]
    %v2415 = vld [vmem:[#allocation11 + $0x270] sm:$0xf]
    %v2416 = vld [vmem:[#allocation11 + $0x274] sm:$0xf]
    %v2417 = vld [vmem:[#allocation11 + $0x278] sm:$0xf]
    %v2418 = vld [vmem:[#allocation11 + $0x27c] sm:$0xf]
    %v2419 = vld [vmem:[#allocation11 + $0x280] sm:$0xf]
    %v2420 = vld [vmem:[#allocation11 + $0x284] sm:$0xf]
    %v2421 = vld [vmem:[#allocation11 + $0x288] sm:$0xf]
    %v2422 = vld [vmem:[#allocation11 + $0x28c] sm:$0xf]
    %v2423 = vld [vmem:[#allocation11 + $0x290] sm:$0xf]
    %v2424 = vld [vmem:[#allocation11 + $0x294] sm:$0xf]
    %v2425 = vld [vmem:[#allocation11 + $0x298] sm:$0xf]
    %v2426 = vld [vmem:[#allocation11 + $0x29c] sm:$0xf]
    %v2427 = vld [vmem:[#allocation11 + $0x2a0] sm:$0xf]
    %v2428 = vld [vmem:[#allocation11 + $0x2a4] sm:$0xf]
    %v2429 = vld [vmem:[#allocation11 + $0x2a8] sm:$0xf]
    %v2430 = vld [vmem:[#allocation11 + $0x2ac] sm:$0xf]
    %v2431 = vld [vmem:[#allocation11 + $0x2b0] sm:$0xf]
    %v2432 = vld [vmem:[#allocation11 + $0x2b4] sm:$0xf]
    %v2433 = vld [vmem:[#allocation11 + $0x2b8] sm:$0xf]
    %v2434 = vld [vmem:[#allocation11 + $0x2bc] sm:$0xf]
    %v2435 = vld [vmem:[#allocation11 + $0x2c0] sm:$0xf]
    %v2436 = vld [vmem:[#allocation11 + $0x2c4] sm:$0xf]
    %v2437 = vld [vmem:[#allocation11 + $0x2c8] sm:$0xf]
    %v2438 = vld [vmem:[#allocation11 + $0x2cc] sm:$0xf]
    %v2439 = vld [vmem:[#allocation11 + $0x2d0] sm:$0xf]
    %v2440 = vld [vmem:[#allocation11 + $0x2d4] sm:$0xf]
    %v2441 = vld [vmem:[#allocation11 + $0x2d8] sm:$0xf]
    %v2442 = vld [vmem:[#allocation11 + $0x2dc] sm:$0xf]
    %v2443 = vld [vmem:[#allocation11 + $0x2e0] sm:$0xf]
    %v2444 = vld [vmem:[#allocation11 + $0x2e4] sm:$0xf]
    %v2445 = vld [vmem:[#allocation11 + $0x2e8] sm:$0xf]
    %v2446 = vld [vmem:[#allocation11 + $0x2ec] sm:$0xf]
    %v2447 = vld [vmem:[#allocation11 + $0x2f0] sm:$0xf]
    %v2448 = vld [vmem:[#allocation11 + $0x2f4] sm:$0xf]
    %v2449 = vld [vmem:[#allocation11 + $0x2f8] sm:$0xf]
    %v2450 = vld [vmem:[#allocation11 + $0x2fc] sm:$0xf]
    %v2451 = vld [vmem:[#allocation11 + $0x300] sm:$0xf]
    %v2452 = vld [vmem:[#allocation11 + $0x304] sm:$0xf]
    %v2453 = vld [vmem:[#allocation11 + $0x308] sm:$0xf]
    %v2454 = vld [vmem:[#allocation11 + $0x30c] sm:$0xf]
    %v2455 = vld [vmem:[#allocation11 + $0x310] sm:$0xf]
    %v2456 = vld [vmem:[#allocation11 + $0x314] sm:$0xf]
    %v2457 = vld [vmem:[#allocation11 + $0x318] sm:$0xf]
    %v2458 = vld [vmem:[#allocation11 + $0x31c] sm:$0xf]
    %v2459 = vld [vmem:[#allocation11 + $0x320] sm:$0xf]
    %v2460 = vld [vmem:[#allocation11 + $0x324] sm:$0xf]
    %v2461 = vld [vmem:[#allocation11 + $0x328] sm:$0xf]
    %v2462 = vld [vmem:[#allocation11 + $0x32c] sm:$0xf]
    %v2463 = vld [vmem:[#allocation11 + $0x330] sm:$0xf]
    %v2464 = vld [vmem:[#allocation11 + $0x334] sm:$0xf]
    %v2465 = vld [vmem:[#allocation11 + $0x338] sm:$0xf]
    %v2466 = vld [vmem:[#allocation11 + $0x33c] sm:$0xf]
    %v2467 = vld [vmem:[#allocation11 + $0x340] sm:$0xf]
    %v2468 = vld [vmem:[#allocation11 + $0x344] sm:$0xf]
    %v2469 = vld [vmem:[#allocation11 + $0x348] sm:$0xf]
    %v2470 = vld [vmem:[#allocation11 + $0x34c] sm:$0xf]
    %v2471 = vld [vmem:[#allocation11 + $0x350] sm:$0xf]
    %v2472 = vld [vmem:[#allocation11 + $0x354] sm:$0xf]
    %v2473 = vld [vmem:[#allocation11 + $0x358] sm:$0xf]
    %v2474 = vld [vmem:[#allocation11 + $0x35c] sm:$0xf]
    %v2475 = vld [vmem:[#allocation11 + $0x360] sm:$0xf]
    %v2476 = vld [vmem:[#allocation11 + $0x364] sm:$0xf]
    %v2477 = vld [vmem:[#allocation11 + $0x368] sm:$0xf]
    %v2478 = vld [vmem:[#allocation11 + $0x36c] sm:$0xf]
    %v2479 = vld [vmem:[#allocation11 + $0x370] sm:$0xf]
    %v2480 = vld [vmem:[#allocation11 + $0x374] sm:$0xf]
    %v2481 = vld [vmem:[#allocation11 + $0x378] sm:$0xf]
    %v2482 = vld [vmem:[#allocation11 + $0x37c] sm:$0xf]
    %v2483 = vld [vmem:[#allocation11 + $0x380] sm:$0xf]
    %v2484 = vld [vmem:[#allocation11 + $0x384] sm:$0xf]
    %v2485 = vld [vmem:[#allocation11 + $0x388] sm:$0xf]
    %v2486 = vld [vmem:[#allocation11 + $0x38c] sm:$0xf]
    %v2487 = vld [vmem:[#allocation11 + $0x390] sm:$0xf]
    %v2488 = vld [vmem:[#allocation11 + $0x394] sm:$0xf]
    %v2489 = vld [vmem:[#allocation11 + $0x398] sm:$0xf]
    %v2490 = vld [vmem:[#allocation11 + $0x39c] sm:$0xf]
    %v2491 = vld [vmem:[#allocation11 + $0x3a0] sm:$0xf]
    %v2492 = vld [vmem:[#allocation11 + $0x3a4] sm:$0xf]
    %v2493 = vld [vmem:[#allocation11 + $0x3a8] sm:$0xf]
    %v2494 = vld [vmem:[#allocation11 + $0x3ac] sm:$0xf]
    %v2495 = vld [vmem:[#allocation11 + $0x3b0] sm:$0xf]
    %v2496 = vld [vmem:[#allocation11 + $0x3b4] sm:$0xf]
    %v2497 = vld [vmem:[#allocation11 + $0x3b8] sm:$0xf]
    %v2498 = vld [vmem:[#allocation11 + $0x3bc] sm:$0xf]
    %v2499 = vld [vmem:[#allocation11 + $0x3c0] sm:$0xf]
    %v2500 = vld [vmem:[#allocation11 + $0x3c4] sm:$0xf]
    %v2501 = vld [vmem:[#allocation11 + $0x3c8] sm:$0xf]
    %v2502 = vld [vmem:[#allocation11 + $0x3cc] sm:$0xf]
    %v2503 = vld [vmem:[#allocation11 + $0x3d0] sm:$0xf]
    %v2504 = vld [vmem:[#allocation11 + $0x3d4] sm:$0xf]
    %v2505 = vld [vmem:[#allocation11 + $0x3d8] sm:$0xf]
    %v2506 = vld [vmem:[#allocation11 + $0x3dc] sm:$0xf]
    %v2507 = vld [vmem:[#allocation11 + $0x3e0] sm:$0xf]
    %v2508 = vld [vmem:[#allocation11 + $0x3e4] sm:$0xf]
    %v2509 = vld [vmem:[#allocation11 + $0x3e8] sm:$0xf]
    %v2510 = vld [vmem:[#allocation11 + $0x3ec] sm:$0xf]
    %v2511 = vld [vmem:[#allocation11 + $0x3f0] sm:$0xf]
    %v2512 = vld [vmem:[#allocation11 + $0x3f4] sm:$0xf]
    %v2513 = vld [vmem:[#allocation11 + $0x3f8] sm:$0xf]
    %v2514 = vld [vmem:[#allocation11 + $0x3fc] sm:$0xf]
    %v2515 = vld [vmem:[%s13] sm:$0x1]
    %v2517 = vlaneseq
    %v2518 = vshrl.u32 %v2517, 7
    %v2519 = vsub.s32 0, %v2518
    %v2520 = vrot.slane %v2515, %v2519
    %v2778 = vunpack.c.l.b16 %v2259
    %v2779 = vunpack.c.l.b16 %v2260
    %v2780 = vunpack.c.l.b16 %v2261
    %v2781 = vunpack.c.l.b16 %v2262
    %v2782 = vunpack.c.l.b16 %v2263
    %v2783 = vunpack.c.l.b16 %v2264
    %v2784 = vunpack.c.l.b16 %v2265
    %v2785 = vunpack.c.l.b16 %v2266
    %v2786 = vunpack.c.l.b16 %v2267
    %v2787 = vunpack.c.l.b16 %v2268
    %v2788 = vunpack.c.l.b16 %v2269
    %v2789 = vunpack.c.l.b16 %v2270
    %v2790 = vunpack.c.l.b16 %v2271
    %v2791 = vunpack.c.l.b16 %v2272
    %v2792 = vunpack.c.l.b16 %v2273
    %v2793 = vunpack.c.l.b16 %v2274
    %v2794 = vunpack.c.l.b16 %v2275
    %v2795 = vunpack.c.l.b16 %v2276
    %v2796 = vunpack.c.l.b16 %v2277
    %v2797 = vunpack.c.l.b16 %v2278
    %v2798 = vunpack.c.l.b16 %v2279
    %v2799 = vunpack.c.l.b16 %v2280
    %v2800 = vunpack.c.l.b16 %v2281
    %v2801 = vunpack.c.l.b16 %v2282
    %v2802 = vunpack.c.l.b16 %v2283
    %v2803 = vunpack.c.l.b16 %v2284
    %v2804 = vunpack.c.l.b16 %v2285
    %v2805 = vunpack.c.l.b16 %v2286
    %v2806 = vunpack.c.l.b16 %v2287
    %v2807 = vunpack.c.l.b16 %v2288
    %v2808 = vunpack.c.l.b16 %v2289
    %v2809 = vunpack.c.l.b16 %v2290
    %v2810 = vunpack.c.l.b16 %v2291
    %v2811 = vunpack.c.l.b16 %v2292
    %v2812 = vunpack.c.l.b16 %v2293
    %v2813 = vunpack.c.l.b16 %v2294
    %v2814 = vunpack.c.l.b16 %v2295
    %v2815 = vunpack.c.l.b16 %v2296
    %v2816 = vunpack.c.l.b16 %v2297
    %v2817 = vunpack.c.l.b16 %v2298
    %v2818 = vunpack.c.l.b16 %v2299
    %v2819 = vunpack.c.l.b16 %v2300
    %v2820 = vunpack.c.l.b16 %v2301
    %v2821 = vunpack.c.l.b16 %v2302
    %v2822 = vunpack.c.l.b16 %v2303
    %v2823 = vunpack.c.l.b16 %v2304
    %v2824 = vunpack.c.l.b16 %v2305
    %v2825 = vunpack.c.l.b16 %v2306
    %v2826 = vunpack.c.l.b16 %v2307
    %v2827 = vunpack.c.l.b16 %v2308
    %v2828 = vunpack.c.l.b16 %v2309
    %v2829 = vunpack.c.l.b16 %v2310
    %v2830 = vunpack.c.l.b16 %v2311
    %v2831 = vunpack.c.l.b16 %v2312
    %v2832 = vunpack.c.l.b16 %v2313
    %v2833 = vunpack.c.l.b16 %v2314
    %v2834 = vunpack.c.l.b16 %v2315
    %v2835 = vunpack.c.l.b16 %v2316
    %v2836 = vunpack.c.l.b16 %v2317
    %v2837 = vunpack.c.l.b16 %v2318
    %v2838 = vunpack.c.l.b16 %v2319
    %v2839 = vunpack.c.l.b16 %v2320
    %v2840 = vunpack.c.l.b16 %v2321
    %v2841 = vunpack.c.l.b16 %v2322
    %v2842 = vunpack.c.l.b16 %v2323
    %v2843 = vunpack.c.l.b16 %v2324
    %v2844 = vunpack.c.l.b16 %v2325
    %v2845 = vunpack.c.l.b16 %v2326
    %v2846 = vunpack.c.l.b16 %v2327
    %v2847 = vunpack.c.l.b16 %v2328
    %v2848 = vunpack.c.l.b16 %v2329
    %v2849 = vunpack.c.l.b16 %v2330
    %v2850 = vunpack.c.l.b16 %v2331
    %v2851 = vunpack.c.l.b16 %v2332
    %v2852 = vunpack.c.l.b16 %v2333
    %v2853 = vunpack.c.l.b16 %v2334
    %v2854 = vunpack.c.l.b16 %v2335
    %v2855 = vunpack.c.l.b16 %v2336
    %v2856 = vunpack.c.l.b16 %v2337
    %v2857 = vunpack.c.l.b16 %v2338
    %v2858 = vunpack.c.l.b16 %v2339
    %v2859 = vunpack.c.l.b16 %v2340
    %v2860 = vunpack.c.l.b16 %v2341
    %v2861 = vunpack.c.l.b16 %v2342
    %v2862 = vunpack.c.l.b16 %v2343
    %v2863 = vunpack.c.l.b16 %v2344
    %v2864 = vunpack.c.l.b16 %v2345
    %v2865 = vunpack.c.l.b16 %v2346
    %v2866 = vunpack.c.l.b16 %v2347
    %v2867 = vunpack.c.l.b16 %v2348
    %v2868 = vunpack.c.l.b16 %v2349
    %v2869 = vunpack.c.l.b16 %v2350
    %v2870 = vunpack.c.l.b16 %v2351
    %v2871 = vunpack.c.l.b16 %v2352
    %v2872 = vunpack.c.l.b16 %v2353
    %v2873 = vunpack.c.l.b16 %v2354
    %v2874 = vunpack.c.l.b16 %v2355
    %v2875 = vunpack.c.l.b16 %v2356
    %v2876 = vunpack.c.l.b16 %v2357
    %v2877 = vunpack.c.l.b16 %v2358
    %v2878 = vunpack.c.l.b16 %v2359
    %v2879 = vunpack.c.l.b16 %v2360
    %v2880 = vunpack.c.l.b16 %v2361
    %v2881 = vunpack.c.l.b16 %v2362
    %v2882 = vunpack.c.l.b16 %v2363
    %v2883 = vunpack.c.l.b16 %v2364
    %v2884 = vunpack.c.l.b16 %v2365
    %v2885 = vunpack.c.l.b16 %v2366
    %v2886 = vunpack.c.l.b16 %v2367
    %v2887 = vunpack.c.l.b16 %v2368
    %v2888 = vunpack.c.l.b16 %v2369
    %v2889 = vunpack.c.l.b16 %v2370
    %v2890 = vunpack.c.l.b16 %v2371
    %v2891 = vunpack.c.l.b16 %v2372
    %v2892 = vunpack.c.l.b16 %v2373
    %v2893 = vunpack.c.l.b16 %v2374
    %v2894 = vunpack.c.l.b16 %v2375
    %v2895 = vunpack.c.l.b16 %v2376
    %v2896 = vunpack.c.l.b16 %v2377
    %v2897 = vunpack.c.l.b16 %v2378
    %v2898 = vunpack.c.l.b16 %v2379
    %v2899 = vunpack.c.l.b16 %v2380
    %v2900 = vunpack.c.l.b16 %v2381
    %v2901 = vunpack.c.l.b16 %v2382
    %v2902 = vunpack.c.l.b16 %v2383
    %v2903 = vunpack.c.l.b16 %v2384
    %v2904 = vunpack.c.l.b16 %v2385
    %v2905 = vunpack.c.l.b16 %v2386
    %v2906 = vunpack.c.l.b16 %v2387
    %v2907 = vunpack.c.l.b16 %v2388
    %v2908 = vunpack.c.l.b16 %v2389
    %v2909 = vunpack.c.l.b16 %v2390
    %v2910 = vunpack.c.l.b16 %v2391
    %v2911 = vunpack.c.l.b16 %v2392
    %v2912 = vunpack.c.l.b16 %v2393
    %v2913 = vunpack.c.l.b16 %v2394
    %v2914 = vunpack.c.l.b16 %v2395
    %v2915 = vunpack.c.l.b16 %v2396
    %v2916 = vunpack.c.l.b16 %v2397
    %v2917 = vunpack.c.l.b16 %v2398
    %v2918 = vunpack.c.l.b16 %v2399
    %v2919 = vunpack.c.l.b16 %v2400
    %v2920 = vunpack.c.l.b16 %v2401
    %v2921 = vunpack.c.l.b16 %v2402
    %v2922 = vunpack.c.l.b16 %v2403
    %v2923 = vunpack.c.l.b16 %v2404
    %v2924 = vunpack.c.l.b16 %v2405
    %v2925 = vunpack.c.l.b16 %v2406
    %v2926 = vunpack.c.l.b16 %v2407
    %v2927 = vunpack.c.l.b16 %v2408
    %v2928 = vunpack.c.l.b16 %v2409
    %v2929 = vunpack.c.l.b16 %v2410
    %v2930 = vunpack.c.l.b16 %v2411
    %v2931 = vunpack.c.l.b16 %v2412
    %v2932 = vunpack.c.l.b16 %v2413
    %v2933 = vunpack.c.l.b16 %v2414
    %v2934 = vunpack.c.l.b16 %v2415
    %v2935 = vunpack.c.l.b16 %v2416
    %v2936 = vunpack.c.l.b16 %v2417
    %v2937 = vunpack.c.l.b16 %v2418
    %v2938 = vunpack.c.l.b16 %v2419
    %v2939 = vunpack.c.l.b16 %v2420
    %v2940 = vunpack.c.l.b16 %v2421
    %v2941 = vunpack.c.l.b16 %v2422
    %v2942 = vunpack.c.l.b16 %v2423
    %v2943 = vunpack.c.l.b16 %v2424
    %v2944 = vunpack.c.l.b16 %v2425
    %v2945 = vunpack.c.l.b16 %v2426
    %v2946 = vunpack.c.l.b16 %v2427
    %v2947 = vunpack.c.l.b16 %v2428
    %v2948 = vunpack.c.l.b16 %v2429
    %v2949 = vunpack.c.l.b16 %v2430
    %v2950 = vunpack.c.l.b16 %v2431
    %v2951 = vunpack.c.l.b16 %v2432
    %v2952 = vunpack.c.l.b16 %v2433
    %v2953 = vunpack.c.l.b16 %v2434
    %v2954 = vunpack.c.l.b16 %v2435
    %v2955 = vunpack.c.l.b16 %v2436
    %v2956 = vunpack.c.l.b16 %v2437
    %v2957 = vunpack.c.l.b16 %v2438
    %v2958 = vunpack.c.l.b16 %v2439
    %v2959 = vunpack.c.l.b16 %v2440
    %v2960 = vunpack.c.l.b16 %v2441
    %v2961 = vunpack.c.l.b16 %v2442
    %v2962 = vunpack.c.l.b16 %v2443
    %v2963 = vunpack.c.l.b16 %v2444
    %v2964 = vunpack.c.l.b16 %v2445
    %v2965 = vunpack.c.l.b16 %v2446
    %v2966 = vunpack.c.l.b16 %v2447
    %v2967 = vunpack.c.l.b16 %v2448
    %v2968 = vunpack.c.l.b16 %v2449
    %v2969 = vunpack.c.l.b16 %v2450
    %v2970 = vunpack.c.l.b16 %v2451
    %v2971 = vunpack.c.l.b16 %v2452
    %v2972 = vunpack.c.l.b16 %v2453
    %v2973 = vunpack.c.l.b16 %v2454
    %v2974 = vunpack.c.l.b16 %v2455
    %v2975 = vunpack.c.l.b16 %v2456
    %v2976 = vunpack.c.l.b16 %v2457
    %v2977 = vunpack.c.l.b16 %v2458
    %v2978 = vunpack.c.l.b16 %v2459
    %v2979 = vunpack.c.l.b16 %v2460
    %v2980 = vunpack.c.l.b16 %v2461
    %v2981 = vunpack.c.l.b16 %v2462
    %v2982 = vunpack.c.l.b16 %v2463
    %v2983 = vunpack.c.l.b16 %v2464
    %v2984 = vunpack.c.l.b16 %v2465
    %v2985 = vunpack.c.l.b16 %v2466
    %v2986 = vunpack.c.l.b16 %v2467
    %v2987 = vunpack.c.l.b16 %v2468
    %v2988 = vunpack.c.l.b16 %v2469
    %v2989 = vunpack.c.l.b16 %v2470
    %v2990 = vunpack.c.l.b16 %v2471
    %v2991 = vunpack.c.l.b16 %v2472
    %v2992 = vunpack.c.l.b16 %v2473
    %v2993 = vunpack.c.l.b16 %v2474
    %v2994 = vunpack.c.l.b16 %v2475
    %v2995 = vunpack.c.l.b16 %v2476
    %v2996 = vunpack.c.l.b16 %v2477
    %v2997 = vunpack.c.l.b16 %v2478
    %v2998 = vunpack.c.l.b16 %v2479
    %v2999 = vunpack.c.l.b16 %v2480
    %v3000 = vunpack.c.l.b16 %v2481
    %v3001 = vunpack.c.l.b16 %v2482
    %v3002 = vunpack.c.l.b16 %v2483
    %v3003 = vunpack.c.l.b16 %v2484
    %v3004 = vunpack.c.l.b16 %v2485
    %v3005 = vunpack.c.l.b16 %v2486
    %v3006 = vunpack.c.l.b16 %v2487
    %v3007 = vunpack.c.l.b16 %v2488
    %v3008 = vunpack.c.l.b16 %v2489
    %v3009 = vunpack.c.l.b16 %v2490
    %v3010 = vunpack.c.l.b16 %v2491
    %v3011 = vunpack.c.l.b16 %v2492
    %v3012 = vunpack.c.l.b16 %v2493
    %v3013 = vunpack.c.l.b16 %v2494
    %v3014 = vunpack.c.l.b16 %v2495
    %v3015 = vunpack.c.l.b16 %v2496
    %v3016 = vunpack.c.l.b16 %v2497
    %v3017 = vunpack.c.l.b16 %v2498
    %v3018 = vunpack.c.l.b16 %v2499
    %v3019 = vunpack.c.l.b16 %v2500
    %v3020 = vunpack.c.l.b16 %v2501
    %v3021 = vunpack.c.l.b16 %v2502
    %v3022 = vunpack.c.l.b16 %v2503
    %v3023 = vunpack.c.l.b16 %v2504
    %v3024 = vunpack.c.l.b16 %v2505
    %v3025 = vunpack.c.l.b16 %v2506
    %v3026 = vunpack.c.l.b16 %v2507
    %v3027 = vunpack.c.l.b16 %v2508
    %v3028 = vunpack.c.l.b16 %v2509
    %v3029 = vunpack.c.l.b16 %v2510
    %v3030 = vunpack.c.l.b16 %v2511
    %v3031 = vunpack.c.l.b16 %v2512
    %v3032 = vunpack.c.l.b16 %v2513
    %v3033 = vunpack.c.l.b16 %v2514
    %v3034 = vpack.c.b16 %v2779, %v2778
    %v3035 = vpack.c.b16 %v2781, %v2780
    %v3036 = vpack.c.b16 %v2783, %v2782
    %v3037 = vpack.c.b16 %v2785, %v2784
    %v3038 = vpack.c.b16 %v2787, %v2786
    %v3039 = vpack.c.b16 %v2789, %v2788
    %v3040 = vpack.c.b16 %v2791, %v2790
    %v3041 = vpack.c.b16 %v2793, %v2792
    %v3042 = vpack.c.b16 %v2795, %v2794
    %v3043 = vpack.c.b16 %v2797, %v2796
    %v3044 = vpack.c.b16 %v2799, %v2798
    %v3045 = vpack.c.b16 %v2801, %v2800
    %v3046 = vpack.c.b16 %v2803, %v2802
    %v3047 = vpack.c.b16 %v2805, %v2804
    %v3048 = vpack.c.b16 %v2807, %v2806
    %v3049 = vpack.c.b16 %v2809, %v2808
    %v3050 = vpack.c.b16 %v2811, %v2810
    %v3051 = vpack.c.b16 %v2813, %v2812
    %v3052 = vpack.c.b16 %v2815, %v2814
    %v3053 = vpack.c.b16 %v2817, %v2816
    %v3054 = vpack.c.b16 %v2819, %v2818
    %v3055 = vpack.c.b16 %v2821, %v2820
    %v3056 = vpack.c.b16 %v2823, %v2822
    %v3057 = vpack.c.b16 %v2825, %v2824
    %v3058 = vpack.c.b16 %v2827, %v2826
    %v3059 = vpack.c.b16 %v2829, %v2828
    %v3060 = vpack.c.b16 %v2831, %v2830
    %v3061 = vpack.c.b16 %v2833, %v2832
    %v3062 = vpack.c.b16 %v2835, %v2834
    %v3063 = vpack.c.b16 %v2837, %v2836
    %v3064 = vpack.c.b16 %v2839, %v2838
    %v3065 = vpack.c.b16 %v2841, %v2840
    %v3066 = vpack.c.b16 %v2843, %v2842
    %v3067 = vpack.c.b16 %v2845, %v2844
    %v3068 = vpack.c.b16 %v2847, %v2846
    %v3069 = vpack.c.b16 %v2849, %v2848
    %v3070 = vpack.c.b16 %v2851, %v2850
    %v3071 = vpack.c.b16 %v2853, %v2852
    %v3072 = vpack.c.b16 %v2855, %v2854
    %v3073 = vpack.c.b16 %v2857, %v2856
    %v3074 = vpack.c.b16 %v2859, %v2858
    %v3075 = vpack.c.b16 %v2861, %v2860
    %v3076 = vpack.c.b16 %v2863, %v2862
    %v3077 = vpack.c.b16 %v2865, %v2864
    %v3078 = vpack.c.b16 %v2867, %v2866
    %v3079 = vpack.c.b16 %v2869, %v2868
    %v3080 = vpack.c.b16 %v2871, %v2870
    %v3081 = vpack.c.b16 %v2873, %v2872
    %v3082 = vpack.c.b16 %v2875, %v2874
    %v3083 = vpack.c.b16 %v2877, %v2876
    %v3084 = vpack.c.b16 %v2879, %v2878
    %v3085 = vpack.c.b16 %v2881, %v2880
    %v3086 = vpack.c.b16 %v2883, %v2882
    %v3087 = vpack.c.b16 %v2885, %v2884
    %v3088 = vpack.c.b16 %v2887, %v2886
    %v3089 = vpack.c.b16 %v2889, %v2888
    %v3090 = vpack.c.b16 %v2891, %v2890
    %v3091 = vpack.c.b16 %v2893, %v2892
    %v3092 = vpack.c.b16 %v2895, %v2894
    %v3093 = vpack.c.b16 %v2897, %v2896
    %v3094 = vpack.c.b16 %v2899, %v2898
    %v3095 = vpack.c.b16 %v2901, %v2900
    %v3096 = vpack.c.b16 %v2903, %v2902
    %v3097 = vpack.c.b16 %v2905, %v2904
    %v3098 = vpack.c.b16 %v2907, %v2906
    %v3099 = vpack.c.b16 %v2909, %v2908
    %v3100 = vpack.c.b16 %v2911, %v2910
    %v3101 = vpack.c.b16 %v2913, %v2912
    %v3102 = vpack.c.b16 %v2915, %v2914
    %v3103 = vpack.c.b16 %v2917, %v2916
    %v3104 = vpack.c.b16 %v2919, %v2918
    %v3105 = vpack.c.b16 %v2921, %v2920
    %v3106 = vpack.c.b16 %v2923, %v2922
    %v3107 = vpack.c.b16 %v2925, %v2924
    %v3108 = vpack.c.b16 %v2927, %v2926
    %v3109 = vpack.c.b16 %v2929, %v2928
    %v3110 = vpack.c.b16 %v2931, %v2930
    %v3111 = vpack.c.b16 %v2933, %v2932
    %v3112 = vpack.c.b16 %v2935, %v2934
    %v3113 = vpack.c.b16 %v2937, %v2936
    %v3114 = vpack.c.b16 %v2939, %v2938
    %v3115 = vpack.c.b16 %v2941, %v2940
    %v3116 = vpack.c.b16 %v2943, %v2942
    %v3117 = vpack.c.b16 %v2945, %v2944
    %v3118 = vpack.c.b16 %v2947, %v2946
    %v3119 = vpack.c.b16 %v2949, %v2948
    %v3120 = vpack.c.b16 %v2951, %v2950
    %v3121 = vpack.c.b16 %v2953, %v2952
    %v3122 = vpack.c.b16 %v2955, %v2954
    %v3123 = vpack.c.b16 %v2957, %v2956
    %v3124 = vpack.c.b16 %v2959, %v2958
    %v3125 = vpack.c.b16 %v2961, %v2960
    %v3126 = vpack.c.b16 %v2963, %v2962
    %v3127 = vpack.c.b16 %v2965, %v2964
    %v3128 = vpack.c.b16 %v2967, %v2966
    %v3129 = vpack.c.b16 %v2969, %v2968
    %v3130 = vpack.c.b16 %v2971, %v2970
    %v3131 = vpack.c.b16 %v2973, %v2972
    %v3132 = vpack.c.b16 %v2975, %v2974
    %v3133 = vpack.c.b16 %v2977, %v2976
    %v3134 = vpack.c.b16 %v2979, %v2978
    %v3135 = vpack.c.b16 %v2981, %v2980
    %v3136 = vpack.c.b16 %v2983, %v2982
    %v3137 = vpack.c.b16 %v2985, %v2984
    %v3138 = vpack.c.b16 %v2987, %v2986
    %v3139 = vpack.c.b16 %v2989, %v2988
    %v3140 = vpack.c.b16 %v2991, %v2990
    %v3141 = vpack.c.b16 %v2993, %v2992
    %v3142 = vpack.c.b16 %v2995, %v2994
    %v3143 = vpack.c.b16 %v2997, %v2996
    %v3144 = vpack.c.b16 %v2999, %v2998
    %v3145 = vpack.c.b16 %v3001, %v3000
    %v3146 = vpack.c.b16 %v3003, %v3002
    %v3147 = vpack.c.b16 %v3005, %v3004
    %v3148 = vpack.c.b16 %v3007, %v3006
    %v3149 = vpack.c.b16 %v3009, %v3008
    %v3150 = vpack.c.b16 %v3011, %v3010
    %v3151 = vpack.c.b16 %v3013, %v3012
    %v3152 = vpack.c.b16 %v3015, %v3014
    %v3153 = vpack.c.b16 %v3017, %v3016
    %v3154 = vpack.c.b16 %v3019, %v3018
    %v3155 = vpack.c.b16 %v3021, %v3020
    %v3156 = vpack.c.b16 %v3023, %v3022
    %v3157 = vpack.c.b16 %v3025, %v3024
    %v3158 = vpack.c.b16 %v3027, %v3026
    %v3159 = vpack.c.b16 %v3029, %v3028
    %v3160 = vpack.c.b16 %v3031, %v3030
    %v3161 = vpack.c.b16 %v3033, %v3032
    %3290 = vmatprep.subr.bf16.mxu0 0
    %3291 = vmatpush1.bf16.msra.mxu0 %v3034
    %3292 = vmatprep.subr.bf16.mxu0 0
    %3293 = vmatpush1.bf16.msra.mxu0 %v3035
    %3294 = vmatprep.subr.bf16.mxu0 0
    %3295 = vmatpush1.bf16.msra.mxu0 %v3036
    %3296 = vmatprep.subr.bf16.mxu0 0
    %3297 = vmatpush1.bf16.msra.mxu0 %v3037
    %3298 = vmatprep.subr.bf16.mxu0 0
    %3299 = vmatpush1.bf16.msra.mxu0 %v3038
    %3300 = vmatprep.subr.bf16.mxu0 0
    %3301 = vmatpush1.bf16.msra.mxu0 %v3039
    %3302 = vmatprep.subr.bf16.mxu0 0
    %3303 = vmatpush1.bf16.msra.mxu0 %v3040
    %3304 = vmatprep.subr.bf16.mxu0 0
    %3305 = vmatpush1.bf16.msra.mxu0 %v3041
    %3306 = vmatprep.subr.bf16.mxu0 0
    %3307 = vmatpush1.bf16.msra.mxu0 %v3042
    %3308 = vmatprep.subr.bf16.mxu0 0
    %3309 = vmatpush1.bf16.msra.mxu0 %v3043
    %3310 = vmatprep.subr.bf16.mxu0 0
    %3311 = vmatpush1.bf16.msra.mxu0 %v3044
    %3312 = vmatprep.subr.bf16.mxu0 0
    %3313 = vmatpush1.bf16.msra.mxu0 %v3045
    %3314 = vmatprep.subr.bf16.mxu0 0
    %3315 = vmatpush1.bf16.msra.mxu0 %v3046
    %3316 = vmatprep.subr.bf16.mxu0 0
    %3317 = vmatpush1.bf16.msra.mxu0 %v3047
    %3318 = vmatprep.subr.bf16.mxu0 0
    %3319 = vmatpush1.bf16.msra.mxu0 %v3048
    %3320 = vmatprep.subr.bf16.mxu0 0
    %3321 = vmatpush1.bf16.msra.mxu0 %v3049
    %3322 = vmatprep.mubr.bf16.mxu0 %v2244
    %3323 = vmatmul.mubr.bf16.gmra.mrb[0].mxu0 %v2243
    %v3324 = vpop.f32.mrb[0].mxu0
    %v3325 = vadd.f32 %v2520, %v3324
    %v3326 = vpop.f32.mrb[0].mxu0
    %v3327 = vpop.f32.mrb[0].mxu0
    %v3328 = vadd.f32 %v2520, %v3327
    %v3329 = vpop.f32.mrb[0].mxu0
    %3330 = vdwg.mxu0
    %3331 = vmatprep.subr.bf16.mxu0 0
    %3332 = vmatpush1.bf16.msra.mxu0 %v3050
    %3333 = vmatprep.subr.bf16.mxu0 0
    %3334 = vmatpush1.bf16.msra.mxu0 %v3051
    %3335 = vmatprep.subr.bf16.mxu0 0
    %3336 = vmatpush1.bf16.msra.mxu0 %v3052
    %3337 = vmatprep.subr.bf16.mxu0 0
    %3338 = vmatpush1.bf16.msra.mxu0 %v3053
    %3339 = vmatprep.subr.bf16.mxu0 0
    %3340 = vmatpush1.bf16.msra.mxu0 %v3054
    %3341 = vmatprep.subr.bf16.mxu0 0
    %3342 = vmatpush1.bf16.msra.mxu0 %v3055
    %3343 = vmatprep.subr.bf16.mxu0 0
    %3344 = vmatpush1.bf16.msra.mxu0 %v3056
    %3345 = vmatprep.subr.bf16.mxu0 0
    %3346 = vmatpush1.bf16.msra.mxu0 %v3057
    %3347 = vmatprep.subr.bf16.mxu0 0
    %3348 = vmatpush1.bf16.msra.mxu0 %v3058
    %3349 = vmatprep.subr.bf16.mxu0 0
    %3350 = vmatpush1.bf16.msra.mxu0 %v3059
    %3351 = vmatprep.subr.bf16.mxu0 0
    %3352 = vmatpush1.bf16.msra.mxu0 %v3060
    %3353 = vmatprep.subr.bf16.mxu0 0
    %3354 = vmatpush1.bf16.msra.mxu0 %v3061
    %3355 = vmatprep.subr.bf16.mxu0 0
    %3356 = vmatpush1.bf16.msra.mxu0 %v3062
    %3357 = vmatprep.subr.bf16.mxu0 0
    %3358 = vmatpush1.bf16.msra.mxu0 %v3063
    %3359 = vmatprep.subr.bf16.mxu0 0
    %3360 = vmatpush1.bf16.msra.mxu0 %v3064
    %3361 = vmatprep.subr.bf16.mxu0 0
    %3362 = vmatpush1.bf16.msra.mxu0 %v3065
    %3363 = vmatprep.mubr.bf16.mxu0 %v2246
    %3364 = vmatmul.mubr.bf16.gmra.mrb[0].mxu0 %v2245
    %v3365 = vpop.f32.mrb[0].mxu0
    %v3366 = vadd.f32 %v3325, %v3365
    %v3367 = vpop.f32.mrb[0].mxu0
    %v3368 = vpop.f32.mrb[0].mxu0
    %v3369 = vadd.f32 %v3328, %v3368
    %v3370 = vpop.f32.mrb[0].mxu0
    %3371 = vdwg.mxu0
    %3372 = vmatprep.subr.bf16.mxu0 0
    %3373 = vmatpush1.bf16.msra.mxu0 %v3066
    %3374 = vmatprep.subr.bf16.mxu0 0
    %3375 = vmatpush1.bf16.msra.mxu0 %v3067
    %3376 = vmatprep.subr.bf16.mxu0 0
    %3377 = vmatpush1.bf16.msra.mxu0 %v3068
    %3378 = vmatprep.subr.bf16.mxu0 0
    %3379 = vmatpush1.bf16.msra.mxu0 %v3069
    %3380 = vmatprep.subr.bf16.mxu0 0
    %3381 = vmatpush1.bf16.msra.mxu0 %v3070
    %3382 = vmatprep.subr.bf16.mxu0 0
    %3383 = vmatpush1.bf16.msra.mxu0 %v3071
    %3384 = vmatprep.subr.bf16.mxu0 0
    %3385 = vmatpush1.bf16.msra.mxu0 %v3072
    %3386 = vmatprep.subr.bf16.mxu0 0
    %3387 = vmatpush1.bf16.msra.mxu0 %v3073
    %3388 = vmatprep.subr.bf16.mxu0 0
    %3389 = vmatpush1.bf16.msra.mxu0 %v3074
    %3390 = vmatprep.subr.bf16.mxu0 0
    %3391 = vmatpush1.bf16.msra.mxu0 %v3075
    %3392 = vmatprep.subr.bf16.mxu0 0
    %3393 = vmatpush1.bf16.msra.mxu0 %v3076
    %3394 = vmatprep.subr.bf16.mxu0 0
    %3395 = vmatpush1.bf16.msra.mxu0 %v3077
    %3396 = vmatprep.subr.bf16.mxu0 0
    %3397 = vmatpush1.bf16.msra.mxu0 %v3078
    %3398 = vmatprep.subr.bf16.mxu0 0
    %3399 = vmatpush1.bf16.msra.mxu0 %v3079
    %3400 = vmatprep.subr.bf16.mxu0 0
    %3401 = vmatpush1.bf16.msra.mxu0 %v3080
    %3402 = vmatprep.subr.bf16.mxu0 0
    %3403 = vmatpush1.bf16.msra.mxu0 %v3081
    %3404 = vmatprep.mubr.bf16.mxu0 %v2248
    %3405 = vmatmul.mubr.bf16.gmra.mrb[0].mxu0 %v2247
    %v3406 = vpop.f32.mrb[0].mxu0
    %v3407 = vadd.f32 %v3366, %v3406
    %v3408 = vpop.f32.mrb[0].mxu0
    %v3409 = vpop.f32.mrb[0].mxu0
    %v3410 = vadd.f32 %v3369, %v3409
    %v3411 = vpop.f32.mrb[0].mxu0
    %3412 = vdwg.mxu0
    %3413 = vmatprep.subr.bf16.mxu0 0
    %3414 = vmatpush1.bf16.msra.mxu0 %v3082
    %3415 = vmatprep.subr.bf16.mxu0 0
    %3416 = vmatpush1.bf16.msra.mxu0 %v3083
    %3417 = vmatprep.subr.bf16.mxu0 0
    %3418 = vmatpush1.bf16.msra.mxu0 %v3084
    %3419 = vmatprep.subr.bf16.mxu0 0
    %3420 = vmatpush1.bf16.msra.mxu0 %v3085
    %3421 = vmatprep.subr.bf16.mxu0 0
    %3422 = vmatpush1.bf16.msra.mxu0 %v3086
    %3423 = vmatprep.subr.bf16.mxu0 0
    %3424 = vmatpush1.bf16.msra.mxu0 %v3087
    %3425 = vmatprep.subr.bf16.mxu0 0
    %3426 = vmatpush1.bf16.msra.mxu0 %v3088
    %3427 = vmatprep.subr.bf16.mxu0 0
    %3428 = vmatpush1.bf16.msra.mxu0 %v3089
    %3429 = vmatprep.subr.bf16.mxu0 0
    %3430 = vmatpush1.bf16.msra.mxu0 %v3090
    %3431 = vmatprep.subr.bf16.mxu0 0
    %3432 = vmatpush1.bf16.msra.mxu0 %v3091
    %3433 = vmatprep.subr.bf16.mxu0 0
    %3434 = vmatpush1.bf16.msra.mxu0 %v3092
    %3435 = vmatprep.subr.bf16.mxu0 0
    %3436 = vmatpush1.bf16.msra.mxu0 %v3093
    %3437 = vmatprep.subr.bf16.mxu0 0
    %3438 = vmatpush1.bf16.msra.mxu0 %v3094
    %3439 = vmatprep.subr.bf16.mxu0 0
    %3440 = vmatpush1.bf16.msra.mxu0 %v3095
    %3441 = vmatprep.subr.bf16.mxu0 0
    %3442 = vmatpush1.bf16.msra.mxu0 %v3096
    %3443 = vmatprep.subr.bf16.mxu0 0
    %3444 = vmatpush1.bf16.msra.mxu0 %v3097
    %3445 = vmatprep.mubr.bf16.mxu0 %v2250
    %3446 = vmatmul.mubr.bf16.gmra.mrb[0].mxu0 %v2249
    %v3447 = vpop.f32.mrb[0].mxu0
    %v3448 = vadd.f32 %v3407, %v3447
    %v3449 = vpop.f32.mrb[0].mxu0
    %v3450 = vpop.f32.mrb[0].mxu0
    %v3451 = vadd.f32 %v3410, %v3450
    %v3452 = vpop.f32.mrb[0].mxu0
    %3453 = vdwg.mxu0
    %3454 = vmatprep.subr.bf16.mxu0 0
    %3455 = vmatpush1.bf16.msra.mxu0 %v3098
    %3456 = vmatprep.subr.bf16.mxu0 0
    %3457 = vmatpush1.bf16.msra.mxu0 %v3099
    %3458 = vmatprep.subr.bf16.mxu0 0
    %3459 = vmatpush1.bf16.msra.mxu0 %v3100
    %3460 = vmatprep.subr.bf16.mxu0 0
    %3461 = vmatpush1.bf16.msra.mxu0 %v3101
    %3462 = vmatprep.subr.bf16.mxu0 0
    %3463 = vmatpush1.bf16.msra.mxu0 %v3102
    %3464 = vmatprep.subr.bf16.mxu0 0
    %3465 = vmatpush1.bf16.msra.mxu0 %v3103
    %3466 = vmatprep.subr.bf16.mxu0 0
    %3467 = vmatpush1.bf16.msra.mxu0 %v3104
    %3468 = vmatprep.subr.bf16.mxu0 0
    %3469 = vmatpush1.bf16.msra.mxu0 %v3105
    %3470 = vmatprep.subr.bf16.mxu0 0
    %3471 = vmatpush1.bf16.msra.mxu0 %v3106
    %3472 = vmatprep.subr.bf16.mxu0 0
    %3473 = vmatpush1.bf16.msra.mxu0 %v3107
    %3474 = vmatprep.subr.bf16.mxu0 0
    %3475 = vmatpush1.bf16.msra.mxu0 %v3108
    %3476 = vmatprep.subr.bf16.mxu0 0
    %3477 = vmatpush1.bf16.msra.mxu0 %v3109
    %3478 = vmatprep.subr.bf16.mxu0 0
    %3479 = vmatpush1.bf16.msra.mxu0 %v3110
    %3480 = vmatprep.subr.bf16.mxu0 0
    %3481 = vmatpush1.bf16.msra.mxu0 %v3111
    %3482 = vmatprep.subr.bf16.mxu0 0
    %3483 = vmatpush1.bf16.msra.mxu0 %v3112
    %3484 = vmatprep.subr.bf16.mxu0 0
    %3485 = vmatpush1.bf16.msra.mxu0 %v3113
    %3486 = vmatprep.mubr.bf16.mxu0 %v2252
    %3487 = vmatmul.mubr.bf16.gmra.mrb[0].mxu0 %v2251
    %v3488 = vpop.f32.mrb[0].mxu0
    %v3489 = vadd.f32 %v3448, %v3488
    %v3490 = vpop.f32.mrb[0].mxu0
    %v3491 = vpop.f32.mrb[0].mxu0
    %v3492 = vadd.f32 %v3451, %v3491
    %v3493 = vpop.f32.mrb[0].mxu0
    %3494 = vdwg.mxu0
    %3495 = vmatprep.subr.bf16.mxu0 0
    %3496 = vmatpush1.bf16.msra.mxu0 %v3114
    %3497 = vmatprep.subr.bf16.mxu0 0
    %3498 = vmatpush1.bf16.msra.mxu0 %v3115
    %3499 = vmatprep.subr.bf16.mxu0 0
    %3500 = vmatpush1.bf16.msra.mxu0 %v3116
    %3501 = vmatprep.subr.bf16.mxu0 0
    %3502 = vmatpush1.bf16.msra.mxu0 %v3117
    %3503 = vmatprep.subr.bf16.mxu0 0
    %3504 = vmatpush1.bf16.msra.mxu0 %v3118
    %3505 = vmatprep.subr.bf16.mxu0 0
    %3506 = vmatpush1.bf16.msra.mxu0 %v3119
    %3507 = vmatprep.subr.bf16.mxu0 0
    %3508 = vmatpush1.bf16.msra.mxu0 %v3120
    %3509 = vmatprep.subr.bf16.mxu0 0
    %3510 = vmatpush1.bf16.msra.mxu0 %v3121
    %3511 = vmatprep.subr.bf16.mxu0 0
    %3512 = vmatpush1.bf16.msra.mxu0 %v3122
    %3513 = vmatprep.subr.bf16.mxu0 0
    %3514 = vmatpush1.bf16.msra.mxu0 %v3123
    %3515 = vmatprep.subr.bf16.mxu0 0
    %3516 = vmatpush1.bf16.msra.mxu0 %v3124
    %3517 = vmatprep.subr.bf16.mxu0 0
    %3518 = vmatpush1.bf16.msra.mxu0 %v3125
    %3519 = vmatprep.subr.bf16.mxu0 0
    %3520 = vmatpush1.bf16.msra.mxu0 %v3126
    %3521 = vmatprep.subr.bf16.mxu0 0
    %3522 = vmatpush1.bf16.msra.mxu0 %v3127
    %3523 = vmatprep.subr.bf16.mxu0 0
    %3524 = vmatpush1.bf16.msra.mxu0 %v3128
    %3525 = vmatprep.subr.bf16.mxu0 0
    %3526 = vmatpush1.bf16.msra.mxu0 %v3129
    %3527 = vmatprep.mubr.bf16.mxu0 %v2254
    %3528 = vmatmul.mubr.bf16.gmra.mrb[0].mxu0 %v2253
    %v3529 = vpop.f32.mrb[0].mxu0
    %v3530 = vadd.f32 %v3489, %v3529
    %v3531 = vpop.f32.mrb[0].mxu0
    %v3532 = vpop.f32.mrb[0].mxu0
    %v3533 = vadd.f32 %v3492, %v3532
    %v3534 = vpop.f32.mrb[0].mxu0
    %3535 = vdwg.mxu0
    %3536 = vmatprep.subr.bf16.mxu0 0
    %3537 = vmatpush1.bf16.msra.mxu0 %v3130
    %3538 = vmatprep.subr.bf16.mxu0 0
    %3539 = vmatpush1.bf16.msra.mxu0 %v3131
    %3540 = vmatprep.subr.bf16.mxu0 0
    %3541 = vmatpush1.bf16.msra.mxu0 %v3132
    %3542 = vmatprep.subr.bf16.mxu0 0
    %3543 = vmatpush1.bf16.msra.mxu0 %v3133
    %3544 = vmatprep.subr.bf16.mxu0 0
    %3545 = vmatpush1.bf16.msra.mxu0 %v3134
    %3546 = vmatprep.subr.bf16.mxu0 0
    %3547 = vmatpush1.bf16.msra.mxu0 %v3135
    %3548 = vmatprep.subr.bf16.mxu0 0
    %3549 = vmatpush1.bf16.msra.mxu0 %v3136
    %3550 = vmatprep.subr.bf16.mxu0 0
    %3551 = vmatpush1.bf16.msra.mxu0 %v3137
    %3552 = vmatprep.subr.bf16.mxu0 0
    %3553 = vmatpush1.bf16.msra.mxu0 %v3138
    %3554 = vmatprep.subr.bf16.mxu0 0
    %3555 = vmatpush1.bf16.msra.mxu0 %v3139
    %3556 = vmatprep.subr.bf16.mxu0 0
    %3557 = vmatpush1.bf16.msra.mxu0 %v3140
    %3558 = vmatprep.subr.bf16.mxu0 0
    %3559 = vmatpush1.bf16.msra.mxu0 %v3141
    %3560 = vmatprep.subr.bf16.mxu0 0
    %3561 = vmatpush1.bf16.msra.mxu0 %v3142
    %3562 = vmatprep.subr.bf16.mxu0 0
    %3563 = vmatpush1.bf16.msra.mxu0 %v3143
    %3564 = vmatprep.subr.bf16.mxu0 0
    %3565 = vmatpush1.bf16.msra.mxu0 %v3144
    %3566 = vmatprep.subr.bf16.mxu0 0
    %3567 = vmatpush1.bf16.msra.mxu0 %v3145
    %3568 = vmatprep.mubr.bf16.mxu0 %v2256
    %3569 = vmatmul.mubr.bf16.gmra.mrb[0].mxu0 %v2255
    %v3570 = vpop.f32.mrb[0].mxu0
    %v3571 = vadd.f32 %v3530, %v3570
    %v3572 = vpop.f32.mrb[0].mxu0
    %v3573 = vpop.f32.mrb[0].mxu0
    %v3574 = vadd.f32 %v3533, %v3573
    %v3575 = vpop.f32.mrb[0].mxu0
    %3576 = vdwg.mxu0
    %3577 = vmatprep.subr.bf16.mxu0 0
    %3578 = vmatpush1.bf16.msra.mxu0 %v3146
    %3579 = vmatprep.subr.bf16.mxu0 0
    %3580 = vmatpush1.bf16.msra.mxu0 %v3147
    %3581 = vmatprep.subr.bf16.mxu0 0
    %3582 = vmatpush1.bf16.msra.mxu0 %v3148
    %3583 = vmatprep.subr.bf16.mxu0 0
    %3584 = vmatpush1.bf16.msra.mxu0 %v3149
    %3585 = vmatprep.subr.bf16.mxu0 0
    %3586 = vmatpush1.bf16.msra.mxu0 %v3150
    %3587 = vmatprep.subr.bf16.mxu0 0
    %3588 = vmatpush1.bf16.msra.mxu0 %v3151
    %3589 = vmatprep.subr.bf16.mxu0 0
    %3590 = vmatpush1.bf16.msra.mxu0 %v3152
    %3591 = vmatprep.subr.bf16.mxu0 0
    %3592 = vmatpush1.bf16.msra.mxu0 %v3153
    %3593 = vmatprep.subr.bf16.mxu0 0
    %3594 = vmatpush1.bf16.msra.mxu0 %v3154
    %3595 = vmatprep.subr.bf16.mxu0 0
    %3596 = vmatpush1.bf16.msra.mxu0 %v3155
    %3597 = vmatprep.subr.bf16.mxu0 0
    %3598 = vmatpush1.bf16.msra.mxu0 %v3156
    %3599 = vmatprep.subr.bf16.mxu0 0
    %3600 = vmatpush1.bf16.msra.mxu0 %v3157
    %3601 = vmatprep.subr.bf16.mxu0 0
    %3602 = vmatpush1.bf16.msra.mxu0 %v3158
    %3603 = vmatprep.subr.bf16.mxu0 0
    %3604 = vmatpush1.bf16.msra.mxu0 %v3159
    %3605 = vmatprep.subr.bf16.mxu0 0
    %3606 = vmatpush1.bf16.msra.mxu0 %v3160
    %3607 = vmatprep.subr.bf16.mxu0 0
    %3608 = vmatpush1.bf16.msra.mxu0 %v3161
    %3609 = vmatprep.mubr.bf16.mxu0 %v2258
    %3610 = vmatmul.mubr.bf16.gmra.mrb[0].mxu0 %v2257
    %v3611 = vpop.f32.mrb[0].mxu0
    %v3612 = vadd.f32 %v3571, %v3611
    %v3613 = vpop.f32.mrb[0].mxu0
    %v3614 = vpop.f32.mrb[0].mxu0
    %v3615 = vadd.f32 %v3574, %v3614
    %v3616 = vpop.f32.mrb[0].mxu0
    %3617 = vdwg.mxu0
    %v3618 = vadd.f32 %v956, %v3612
    %v3619 = vadd.f32 %v957, %v3615
    %3620 = vst [vmem:[#allocation13] sm:$0xff] %v3618
    %3621 = vst [vmem:[#allocation13 + $0x8] sm:$0xff] %v3619
    // Predicated region
    $region82: #{tpu_custom_call.1} parent=1 // pred_check
      _
    $region83: #{tpu_custom_call.1} parent=1 // pred_check_branch
      %3623 = sbr.rel (0) target = $region85
    $region84: #{tpu_custom_call.1} parent=1 // pred_region
      %s3625 = ssub.s32 256, 256
      %3626 = vsyncadd [#allocation4], %s3625
      %s3627 = sshll.u32 [#allocation13], 4
      %s3628 = int_to_ptr.vmem [resolvable:$true] %s3627
      %3633 = dma.vmem_to_hbm [thread:$0]  %s3628, 256, %s14, [#allocation4], 128, 128, 8
    $region85: #{tpu_custom_call.1} parent=1 // pred_fallthru
      _
    // Predicated region
    $region86: #{tpu_custom_call.1} parent=1 // pred_check
      _
    $region87: #{tpu_custom_call.1} parent=1 // pred_check_branch
      %3635 = sbr.rel (0) target = $region89
    $region88: #{tpu_custom_call.1} parent=1 // pred_region
      %3636 = dma.done [#allocation4], 256
    $region89: #{tpu_custom_call.1} parent=1 // pred_fallthru
      _
    %3637 = vsyncpa [#allocation3], 1
    %3638 = vsyncpa [#allocation6], 1
    %3639 = vsyncpa [#allocation9], 1
    %3640 = vsyncpa [#allocation12], 1
    %3641 = vsyncpa [#allocation4], 1

</llo_original>
